<compile_context>
chip_gen: v7x
topology: tpu7x:2x2x1
jax: 0.10.0
libtpu: 0.0.40
codegen_flags: <defaults>
</compile_context>

<pallas_src>
import functools

import jax
import jax.numpy as jnp
from jax.experimental import pallas as pl
from jax.experimental.pallas import tpu as pltpu


# ----------------------------------------------------------------------------- kernel
def _spatial_attention_kernel(
    x_ref,        # (C, BHW)   VMEM  input block, channel-major, images in lanes
    w1a_ref,      # (C2, K*C)  VMEM  branch1 conv(1,K) weights * BN scale
    w2a_ref,      # (C2, K*C)  VMEM  branch2 conv(K,1) weights * BN scale
    w1b_ref,      # (C2, K)    VMEM  branch1 conv(K,1) weights * BN scale
    w2b_ref,      # (C2, K)    VMEM  branch2 conv(1,K) weights * BN scale
    b1a_ref,      # (C2, 1)    VMEM  folded bias, branch1 conv1
    b2a_ref,      # (C2, 1)    VMEM  folded bias, branch2 conv1
    bc2_ref,      # (1, 2)     VMEM  folded biases of the two second convs
    out_ref,      # (1, BHW)   VMEM  sigmoid attention map
    *, C, C2, H, W, K, pad, BHW,
):
    f32 = jnp.float32
    HW = H * W

    x = x_ref[...].astype(f32)                          # (C, BHW)
    w1a = w1a_ref[...]
    w2a = w2a_ref[...]
    w1b = w1b_ref[...]
    w2b = w2b_ref[...]

    # Lane-position helpers, computed once: position within a row / an image.
    q = jax.lax.broadcasted_iota(jnp.int32, (1, BHW), 1)
    col_w = q % W
    col_p = q % HW

    def shift_w(v, d):
        # v[:, p] -> v[:, p + d] within each image row; zero outside ('same' pad).
        if d == 0:
            return v
        rolled = pltpu.roll(v, shift=(-d) % BHW, axis=1)
        ok = ((col_w + d) >= 0) & ((col_w + d) < W)
        return jnp.where(ok, rolled, 0.0)

    def shift_h(v, d):
        # v[:, p] -> v[:, p + d*W] within each image; zero outside.
        if d == 0:
            return v
        rolled = pltpu.roll(v, shift=(-d * W) % BHW, axis=1)
        ok = ((col_p + d * W) >= 0) & ((col_p + d * W) < HW)
        return jnp.where(ok, rolled, 0.0)

    # ---- first convs (channel contracting, C -> C2), both branches.  Each
    # shifted slab is built once per tap for ALL channels/images; the FMA is a
    # (C2, BHW) block with a (C2, 1) weight column broadcast from VMEM.
    acc1 = jnp.zeros((C2, BHW), f32)                    # branch1: (1,K) along W
    acc2 = jnp.zeros((C2, BHW), f32)                    # branch2: (K,1) along H
    for k in range(K):
        d = k - pad
        sw = shift_w(x, d)                              # (C, BHW)
        sh = shift_h(x, d)                              # (C, BHW)
        for c in range(C):
            col = k * C + c
            acc1 = acc1 + w1a[:, col:col + 1] * sw[c:c + 1, :]
            acc2 = acc2 + w2a[:, col:col + 1] * sh[c:c + 1, :]
    g1 = jnp.maximum(acc1 + b1a_ref[...], 0.0)          # (C2, BHW)
    g2 = jnp.maximum(acc2 + b2a_ref[...], 0.0)

    # ---- second convs (C2 -> 1): branch1 (K,1) along H, branch2 (1,K) along W.
    # Keep (C2, BHW) partials so the VPU work stays sublane-dense; the output
    # channel contraction is a single 2-row sublane reduce at the end.
    part1 = jnp.zeros((C2, BHW), f32)
    part2 = jnp.zeros((C2, BHW), f32)
    for k in range(K):
        d = k - pad
        part1 = part1 + w1b[:, k:k + 1] * shift_h(g1, d)
        part2 = part2 + w2b[:, k:k + 1] * shift_w(g2, d)
    z1 = jnp.sum(part1, axis=0, keepdims=True)          # (1, BHW)
    z2 = jnp.sum(part2, axis=0, keepdims=True)
    y1 = jnp.maximum(z1 + bc2_ref[:, 0:1], 0.0)
    y2 = jnp.maximum(z2 + bc2_ref[:, 1:2], 0.0)

    # sigmoid runs on the EUP (its own bundle slot); only the lane-dense
    # single-channel map is written back.
    out_ref[...] = jax.nn.sigmoid(y1 + y2).astype(out_ref.dtype)


# ----------------------------------------------------------------------------- wrapper
def _images_per_step(N, HW):
    """Images per grid step: amortize the ~0.35us fixed per-step overhead while
    keeping >= 2 grid steps when the batch allows (so v7x's two TensorCores both
    get work).  At tiny N a single fat step is best (v5e/v6e are single-core)."""
    if N <= 2:
        return max(N, 1)
    for b in range(N // 2, 0, -1):
        if N % b == 0 and (b * HW) % 128 == 0:
            return b
    return N


@functools.partial(jax.jit, static_argnames=("K",))
def spatial_attention_pallas(x, params, *, K):
    N, C, H, W = x.shape
    C2 = C // 2
    assert K % 2 == 1, "only odd K reproduces PyTorch 'same' padding here"
    pad = (K - 1) // 2
    HW = H * W

    bn = _images_per_step(N, HW)
    steps = N // bn
    BHW = bn * HW

    # Channel-major layout: lanes carry (image, pixel), sublanes carry channels.
    xt = x.reshape(N, C, HW).transpose(1, 0, 2).reshape(C, N * HW)

    kernel = functools.partial(
        _spatial_attention_kernel,
        C=C, C2=C2, H=H, W=W, K=K, pad=pad, BHW=BHW,
    )

    att = pl.pallas_call(
        kernel,
        out_shape=jax.ShapeDtypeStruct((1, N * HW), x.dtype),
        grid=(steps,),
        in_specs=[
            pl.BlockSpec((C, BHW), lambda n: (0, n)),        # x block
            pl.BlockSpec((C2, K * C), lambda n: (0, 0)),     # w1a
            pl.BlockSpec((C2, K * C), lambda n: (0, 0)),     # w2a
            pl.BlockSpec((C2, K), lambda n: (0, 0)),         # w1b
            pl.BlockSpec((C2, K), lambda n: (0, 0)),         # w2b
            pl.BlockSpec((C2, 1), lambda n: (0, 0)),         # b1a
            pl.BlockSpec((C2, 1), lambda n: (0, 0)),         # b2a
            pl.BlockSpec((1, 2), lambda n: (0, 0)),          # conv2 biases
        ],
        out_specs=pl.BlockSpec((1, BHW), lambda n: (0, n)),
        compiler_params=pltpu.CompilerParams(dimension_semantics=("parallel",)),
    )(
        xt,
        params["w1a"], params["w2a"], params["w1b"], params["w2b"],
        params["b1a"], params["b2a"], params["bc2"],
    )

    # expand_as(input_) done outside the kernel; XLA fuses the broadcast.
    return jnp.broadcast_to(att.reshape(N, 1, H, W), (N, C, H, W))


# ----------------------------------------------------------------------------- param setup
def make_params(key, C, K, eps=1e-5):
    """Deterministic synthetic params.  BatchNorm (inference stats) + conv bias
    are folded: the BN scale goes INTO the conv weights; the additive part is
    passed to the kernel as tiny VMEM bias columns.  Weights are packed so the
    kernel reads (C2, 1) columns directly (column index = k*C + c)."""
    C2 = C // 2
    ks = jax.random.split(key, 24)
    it = iter(range(24))

    def nrm(shape, scale=0.1):
        return scale * jax.random.normal(ks[next(it)], shape, jnp.float32)

    def bn(ch):
        gamma = 1.0 + nrm((ch,))
        beta = nrm((ch,))
        mean = nrm((ch,))
        var = jax.random.uniform(ks[next(it)], (ch,), jnp.float32, 0.5, 1.5)
        return gamma, beta, mean, var

    def fold(conv_b, gamma, beta, mean, var):
        s = gamma / jnp.sqrt(var + eps)
        return s, (conv_b - mean) * s + beta

    # raw conv weights (PyTorch OIHW layout) + biases
    W1a = nrm((C2, C, 1, K)); B1a = nrm((C2,))
    W1b = nrm((1, C2, K, 1)); B1b = nrm((1,))
    W2a = nrm((C2, C, K, 1)); B2a = nrm((C2,))
    W2b = nrm((1, C2, 1, K)); B2b = nrm((1,))
    bn1a = bn(C2); bn1b = bn(1); bn2a = bn(C2); bn2b = bn(1)

    s1a, b1a = fold(B1a, *bn1a)
    s1b, b1b = fold(B1b, *bn1b)
    s2a, b2a = fold(B2a, *bn2a)
    s2b, b2b = fold(B2b, *bn2b)

    def pack_kC(w_ock, s):                 # (C2, C, K) -> (C2, K*C), col = k*C + c
        return (w_ock * s[:, None, None]).transpose(0, 2, 1).reshape(C2, K * C)

    kernel_params = dict(
        w1a=pack_kC(W1a[:, :, 0, :], s1a),           # branch1 conv(1,K)
        w2a=pack_kC(W2a[:, :, :, 0], s2a),           # branch2 conv(K,1)
        w1b=W1b[0, :, :, 0] * s1b[0],                # (C2, K)  branch1 conv(K,1)
        w2b=W2b[0, :, 0, :] * s2b[0],                # (C2, K)  branch2 conv(1,K)
        b1a=b1a.reshape(C2, 1),
        b2a=b2a.reshape(C2, 1),
        bc2=jnp.concatenate([b1b, b2b]).reshape(1, 2),
    )
    raw = dict(W1a=W1a, B1a=B1a, W1b=W1b, B1b=B1b,
               W2a=W2a, B2a=B2a, W2b=W2b, B2b=B2b,
               bn1a=bn1a, bn1b=bn1b, bn2a=bn2a, bn2b=bn2b, eps=eps)
    return kernel_params, raw


# ----------------------------------------------------------------------------- pure-JAX reference
def reference_forward(x, raw):
    eps = raw["eps"]

    def conv(x, w, b, padding):
        y = jax.lax.conv_general_dilated(
            x, w, (1, 1), padding, dimension_numbers=("NCHW", "OIHW", "NCHW"))
        return y + b[None, :, None, None]

    def bnorm(x, p):
        gamma, beta, mean, var = p
        inv = gamma / jnp.sqrt(var + eps)
        return (x - mean[None, :, None, None]) * inv[None, :, None, None] \
               + beta[None, :, None, None]

    K = raw["W1a"].shape[-1]
    pad = (K - 1) // 2
    g1 = conv(x, raw["W1a"], raw["B1a"], ((0, 0), (pad, pad)))
    g1 = jax.nn.relu(bnorm(g1, raw["bn1a"]))
    g1 = conv(g1, raw["W1b"], raw["B1b"], ((pad, pad), (0, 0)))
    g1 = jax.nn.relu(bnorm(g1, raw["bn1b"]))
    g2 = conv(x, raw["W2a"], raw["B2a"], ((pad, pad), (0, 0)))
    g2 = jax.nn.relu(bnorm(g2, raw["bn2a"]))
    g2 = conv(g2, raw["W2b"], raw["B2b"], ((0, 0), (pad, pad)))
    g2 = jax.nn.relu(bnorm(g2, raw["bn2b"]))
    att = jax.nn.sigmoid(g1 + g2)                        # (N, 1, H, W)
    return jnp.broadcast_to(att, x.shape)                # expand_as(input_)


# ----------------------------------------------------------------------------- main
if __name__ == "__main__":
    N, C, H, W = 2, 4, 16, 16
    K = 9

    key = jax.random.PRNGKey(0)
    kx, kp = jax.random.split(key)
    x = jax.random.normal(kx, (N, C, H, W), jnp.float32)

    kernel_params, raw = make_params(kp, C, K)

    out = spatial_attention_pallas(x, kernel_params, K=K)
    out = jax.block_until_ready(out)

    ref = reference_forward(x, raw)
    assert out.shape == (N, C, H, W) and out.dtype == x.dtype
    err = jnp.max(jnp.abs(out - ref))
    assert jnp.allclose(out, ref, atol=3e-5, rtol=3e-5), f"max abs err {err}"

    print("KERNEL_OK")
</pallas_src>

<mosaic_0001>
module attributes {stable_mosaic.version = 11 : i64} {
  func.func @_spatial_attention_kernel(%arg0: i32, %arg1: memref<4x512xf32, #tpu.memory_space<vmem>>, %arg2: memref<2x36xf32, #tpu.memory_space<vmem>>, %arg3: memref<2x36xf32, #tpu.memory_space<vmem>>, %arg4: memref<2x9xf32, #tpu.memory_space<vmem>>, %arg5: memref<2x9xf32, #tpu.memory_space<vmem>>, %arg6: memref<2x1xf32, #tpu.memory_space<vmem>>, %arg7: memref<2x1xf32, #tpu.memory_space<vmem>>, %arg8: memref<1x2xf32, #tpu.memory_space<vmem>>, %arg9: memref<1x512xf32, #tpu.memory_space<vmem>>) attributes {dimension_semantics = [#tpu.dimension_semantics<parallel>], iteration_bounds = array<i64: 1>, scalar_prefetch = 0 : i64, scratch_operands = 0 : i64, tpu.core_type = #tpu.core_type<tc>, window_params = [{transform_indices = @transform_0, window_bounds = array<i64: 4, 512>}, {pipeline_mode = #tpu.pipeline_mode<synchronous>, transform_indices = @transform_1, window_bounds = array<i64: 2, 36>}, {pipeline_mode = #tpu.pipeline_mode<synchronous>, transform_indices = @transform_2, window_bounds = array<i64: 2, 36>}, {pipeline_mode = #tpu.pipeline_mode<synchronous>, transform_indices = @transform_3, window_bounds = array<i64: 2, 9>}, {pipeline_mode = #tpu.pipeline_mode<synchronous>, transform_indices = @transform_4, window_bounds = array<i64: 2, 9>}, {pipeline_mode = #tpu.pipeline_mode<synchronous>, transform_indices = @transform_5, window_bounds = array<i64: 2, 1>}, {pipeline_mode = #tpu.pipeline_mode<synchronous>, transform_indices = @transform_6, window_bounds = array<i64: 2, 1>}, {pipeline_mode = #tpu.pipeline_mode<synchronous>, transform_indices = @transform_7, window_bounds = array<i64: 1, 2>}, {transform_indices = @transform_8, window_bounds = array<i64: 1, 512>}]} {
    %c0 = arith.constant 0 : index
    %c0_0 = arith.constant 0 : index
    %0 = vector.load %arg1[%c0, %c0_0] : memref<4x512xf32, #tpu.memory_space<vmem>>, vector<4x512xf32>
    %c0_1 = arith.constant 0 : index
    %c0_2 = arith.constant 0 : index
    %1 = vector.load %arg2[%c0_1, %c0_2] : memref<2x36xf32, #tpu.memory_space<vmem>>, vector<2x36xf32>
    %c0_3 = arith.constant 0 : index
    %c0_4 = arith.constant 0 : index
    %2 = vector.load %arg3[%c0_3, %c0_4] : memref<2x36xf32, #tpu.memory_space<vmem>>, vector<2x36xf32>
    %c0_5 = arith.constant 0 : index
    %c0_6 = arith.constant 0 : index
    %3 = vector.load %arg4[%c0_5, %c0_6] : memref<2x9xf32, #tpu.memory_space<vmem>>, vector<2x9xf32>
    %c0_7 = arith.constant 0 : index
    %c0_8 = arith.constant 0 : index
    %4 = vector.load %arg5[%c0_7, %c0_8] : memref<2x9xf32, #tpu.memory_space<vmem>>, vector<2x9xf32>
    %5 = tpu.iota {dimensions = array<i32: 1>} : vector<1x512xi32>
    %c16_i32 = arith.constant 16 : i32
    %c0_i32 = arith.constant 0 : i32
    %6 = arith.cmpi eq, %c16_i32, %c0_i32 : i32
    %c1_i32 = arith.constant 1 : i32
    %7 = arith.select %6, %c1_i32, %c16_i32 : i32
    %8 = vector.broadcast %7 : i32 to vector<1x512xi32>
    %9 = arith.remsi %5, %8 : vector<1x512xi32>
    %c0_i32_9 = arith.constant 0 : i32
    %10 = vector.broadcast %c0_i32_9 : i32 to vector<1x512xi32>
    %11 = arith.cmpi ne, %9, %10 : vector<1x512xi32>
    %c0_i32_10 = arith.constant 0 : i32
    %12 = vector.broadcast %c0_i32_10 : i32 to vector<1x512xi32>
    %13 = arith.cmpi slt, %9, %12 : vector<1x512xi32>
    %c0_i32_11 = arith.constant 0 : i32
    %14 = arith.cmpi slt, %7, %c0_i32_11 : i32
    %15 = vector.broadcast %14 : i1 to vector<1x512xi1>
    %16 = vector.broadcast %15 : vector<1x512xi1> to vector<1x512xi1>
    %17 = arith.xori %13, %16 : vector<1x512xi1>
    %18 = arith.andi %17, %11 : vector<1x512xi1>
    %19 = vector.broadcast %7 : i32 to vector<1x512xi32>
    %20 = arith.addi %9, %19 : vector<1x512xi32>
    %21 = arith.select %18, %20, %9 : vector<1x512xi1>, vector<1x512xi32>
    %c256_i32 = arith.constant 256 : i32
    %c0_i32_12 = arith.constant 0 : i32
    %22 = arith.cmpi eq, %c256_i32, %c0_i32_12 : i32
    %c1_i32_13 = arith.constant 1 : i32
    %23 = arith.select %22, %c1_i32_13, %c256_i32 : i32
    %24 = vector.broadcast %23 : i32 to vector<1x512xi32>
    %25 = arith.remsi %5, %24 : vector<1x512xi32>
    %c0_i32_14 = arith.constant 0 : i32
    %26 = vector.broadcast %c0_i32_14 : i32 to vector<1x512xi32>
    %27 = arith.cmpi ne, %25, %26 : vector<1x512xi32>
    %c0_i32_15 = arith.constant 0 : i32
    %28 = vector.broadcast %c0_i32_15 : i32 to vector<1x512xi32>
    %29 = arith.cmpi slt, %25, %28 : vector<1x512xi32>
    %c0_i32_16 = arith.constant 0 : i32
    %30 = arith.cmpi slt, %23, %c0_i32_16 : i32
    %31 = vector.broadcast %30 : i1 to vector<1x512xi1>
    %32 = vector.broadcast %31 : vector<1x512xi1> to vector<1x512xi1>
    %33 = arith.xori %29, %32 : vector<1x512xi1>
    %34 = arith.andi %33, %27 : vector<1x512xi1>
    %35 = vector.broadcast %23 : i32 to vector<1x512xi32>
    %36 = arith.addi %25, %35 : vector<1x512xi32>
    %37 = arith.select %34, %36, %25 : vector<1x512xi1>, vector<1x512xi32>
    %cst = arith.constant 0.000000e+00 : f32
    %38 = vector.broadcast %cst : f32 to vector<2x512xf32>
    %cst_17 = arith.constant 0.000000e+00 : f32
    %39 = vector.broadcast %cst_17 : f32 to vector<2x512xf32>
    %c4_i32 = arith.constant 4 : i32
    %40 = tpu.dynamic_rotate %0 by %c4_i32 dim 1 : vector<4x512xf32>, i32 -> vector<4x512xf32>
    %c-4_i32 = arith.constant -4 : i32
    %41 = vector.broadcast %c-4_i32 : i32 to vector<1x512xi32>
    %42 = arith.addi %21, %41 : vector<1x512xi32>
    %c0_i32_18 = arith.constant 0 : i32
    %43 = vector.broadcast %c0_i32_18 : i32 to vector<1x512xi32>
    %44 = arith.cmpi sge, %42, %43 : vector<1x512xi32>
    %c-4_i32_19 = arith.constant -4 : i32
    %45 = vector.broadcast %c-4_i32_19 : i32 to vector<1x512xi32>
    %46 = arith.addi %21, %45 : vector<1x512xi32>
    %c16_i32_20 = arith.constant 16 : i32
    %47 = vector.broadcast %c16_i32_20 : i32 to vector<1x512xi32>
    %48 = arith.cmpi slt, %46, %47 : vector<1x512xi32>
    %49 = arith.andi %44, %48 : vector<1x512xi1>
    %cst_21 = arith.constant 0.000000e+00 : f32
    %50 = vector.shape_cast %49 : vector<1x512xi1> to vector<1x512xi1>
    %51 = vector.broadcast %50 : vector<1x512xi1> to vector<4x512xi1>
    %52 = vector.broadcast %cst_21 : f32 to vector<4x512xf32>
    %53 = arith.select %51, %40, %52 : vector<4x512xi1>, vector<4x512xf32>
    %c64_i32 = arith.constant 64 : i32
    %54 = tpu.dynamic_rotate %0 by %c64_i32 dim 1 : vector<4x512xf32>, i32 -> vector<4x512xf32>
    %c-64_i32 = arith.constant -64 : i32
    %55 = vector.broadcast %c-64_i32 : i32 to vector<1x512xi32>
    %56 = arith.addi %37, %55 : vector<1x512xi32>
    %c0_i32_22 = arith.constant 0 : i32
    %57 = vector.broadcast %c0_i32_22 : i32 to vector<1x512xi32>
    %58 = arith.cmpi sge, %56, %57 : vector<1x512xi32>
    %c-64_i32_23 = arith.constant -64 : i32
    %59 = vector.broadcast %c-64_i32_23 : i32 to vector<1x512xi32>
    %60 = arith.addi %37, %59 : vector<1x512xi32>
    %c256_i32_24 = arith.constant 256 : i32
    %61 = vector.broadcast %c256_i32_24 : i32 to vector<1x512xi32>
    %62 = arith.cmpi slt, %60, %61 : vector<1x512xi32>
    %63 = arith.andi %58, %62 : vector<1x512xi1>
    %cst_25 = arith.constant 0.000000e+00 : f32
    %64 = vector.shape_cast %63 : vector<1x512xi1> to vector<1x512xi1>
    %65 = vector.broadcast %64 : vector<1x512xi1> to vector<4x512xi1>
    %66 = vector.broadcast %cst_25 : f32 to vector<4x512xf32>
    %67 = arith.select %65, %54, %66 : vector<4x512xi1>, vector<4x512xf32>
    %68 = vector.extract_strided_slice %1 {offsets = [0, 0], sizes = [2, 1], strides = [1, 1]} : vector<2x36xf32> to vector<2x1xf32>
    %69 = vector.extract_strided_slice %53 {offsets = [0, 0], sizes = [1, 512], strides = [1, 1]} : vector<4x512xf32> to vector<1x512xf32>
    %70 = vector.broadcast %68 : vector<2x1xf32> to vector<2x512xf32>
    %71 = vector.broadcast %69 : vector<1x512xf32> to vector<2x512xf32>
    %72 = arith.mulf %70, %71 : vector<2x512xf32>
    %73 = arith.addf %38, %72 : vector<2x512xf32>
    %74 = vector.extract_strided_slice %2 {offsets = [0, 0], sizes = [2, 1], strides = [1, 1]} : vector<2x36xf32> to vector<2x1xf32>
    %75 = vector.extract_strided_slice %67 {offsets = [0, 0], sizes = [1, 512], strides = [1, 1]} : vector<4x512xf32> to vector<1x512xf32>
    %76 = vector.broadcast %74 : vector<2x1xf32> to vector<2x512xf32>
    %77 = vector.broadcast %75 : vector<1x512xf32> to vector<2x512xf32>
    %78 = arith.mulf %76, %77 : vector<2x512xf32>
    %79 = arith.addf %39, %78 : vector<2x512xf32>
    %80 = vector.extract_strided_slice %1 {offsets = [0, 1], sizes = [2, 1], strides = [1, 1]} : vector<2x36xf32> to vector<2x1xf32>
    %81 = vector.extract_strided_slice %53 {offsets = [1, 0], sizes = [1, 512], strides = [1, 1]} : vector<4x512xf32> to vector<1x512xf32>
    %82 = vector.broadcast %80 : vector<2x1xf32> to vector<2x512xf32>
    %83 = vector.broadcast %81 : vector<1x512xf32> to vector<2x512xf32>
    %84 = arith.mulf %82, %83 : vector<2x512xf32>
    %85 = arith.addf %73, %84 : vector<2x512xf32>
    %86 = vector.extract_strided_slice %2 {offsets = [0, 1], sizes = [2, 1], strides = [1, 1]} : vector<2x36xf32> to vector<2x1xf32>
    %87 = vector.extract_strided_slice %67 {offsets = [1, 0], sizes = [1, 512], strides = [1, 1]} : vector<4x512xf32> to vector<1x512xf32>
    %88 = vector.broadcast %86 : vector<2x1xf32> to vector<2x512xf32>
    %89 = vector.broadcast %87 : vector<1x512xf32> to vector<2x512xf32>
    %90 = arith.mulf %88, %89 : vector<2x512xf32>
    %91 = arith.addf %79, %90 : vector<2x512xf32>
    %92 = vector.extract_strided_slice %1 {offsets = [0, 2], sizes = [2, 1], strides = [1, 1]} : vector<2x36xf32> to vector<2x1xf32>
    %93 = vector.extract_strided_slice %53 {offsets = [2, 0], sizes = [1, 512], strides = [1, 1]} : vector<4x512xf32> to vector<1x512xf32>
    %94 = vector.broadcast %92 : vector<2x1xf32> to vector<2x512xf32>
    %95 = vector.broadcast %93 : vector<1x512xf32> to vector<2x512xf32>
    %96 = arith.mulf %94, %95 : vector<2x512xf32>
    %97 = arith.addf %85, %96 : vector<2x512xf32>
    %98 = vector.extract_strided_slice %2 {offsets = [0, 2], sizes = [2, 1], strides = [1, 1]} : vector<2x36xf32> to vector<2x1xf32>
    %99 = vector.extract_strided_slice %67 {offsets = [2, 0], sizes = [1, 512], strides = [1, 1]} : vector<4x512xf32> to vector<1x512xf32>
    %100 = vector.broadcast %98 : vector<2x1xf32> to vector<2x512xf32>
    %101 = vector.broadcast %99 : vector<1x512xf32> to vector<2x512xf32>
    %102 = arith.mulf %100, %101 : vector<2x512xf32>
    %103 = arith.addf %91, %102 : vector<2x512xf32>
    %104 = vector.extract_strided_slice %1 {offsets = [0, 3], sizes = [2, 1], strides = [1, 1]} : vector<2x36xf32> to vector<2x1xf32>
    %105 = vector.extract_strided_slice %53 {offsets = [3, 0], sizes = [1, 512], strides = [1, 1]} : vector<4x512xf32> to vector<1x512xf32>
    %106 = vector.broadcast %104 : vector<2x1xf32> to vector<2x512xf32>
    %107 = vector.broadcast %105 : vector<1x512xf32> to vector<2x512xf32>
    %108 = arith.mulf %106, %107 : vector<2x512xf32>
    %109 = arith.addf %97, %108 : vector<2x512xf32>
    %110 = vector.extract_strided_slice %2 {offsets = [0, 3], sizes = [2, 1], strides = [1, 1]} : vector<2x36xf32> to vector<2x1xf32>
    %111 = vector.extract_strided_slice %67 {offsets = [3, 0], sizes = [1, 512], strides = [1, 1]} : vector<4x512xf32> to vector<1x512xf32>
    %112 = vector.broadcast %110 : vector<2x1xf32> to vector<2x512xf32>
    %113 = vector.broadcast %111 : vector<1x512xf32> to vector<2x512xf32>
    %114 = arith.mulf %112, %113 : vector<2x512xf32>
    %115 = arith.addf %103, %114 : vector<2x512xf32>
    %c3_i32 = arith.constant 3 : i32
    %116 = tpu.dynamic_rotate %0 by %c3_i32 dim 1 : vector<4x512xf32>, i32 -> vector<4x512xf32>
    %c-3_i32 = arith.constant -3 : i32
    %117 = vector.broadcast %c-3_i32 : i32 to vector<1x512xi32>
    %118 = arith.addi %21, %117 : vector<1x512xi32>
    %c0_i32_26 = arith.constant 0 : i32
    %119 = vector.broadcast %c0_i32_26 : i32 to vector<1x512xi32>
    %120 = arith.cmpi sge, %118, %119 : vector<1x512xi32>
    %c-3_i32_27 = arith.constant -3 : i32
    %121 = vector.broadcast %c-3_i32_27 : i32 to vector<1x512xi32>
    %122 = arith.addi %21, %121 : vector<1x512xi32>
    %c16_i32_28 = arith.constant 16 : i32
    %123 = vector.broadcast %c16_i32_28 : i32 to vector<1x512xi32>
    %124 = arith.cmpi slt, %122, %123 : vector<1x512xi32>
    %125 = arith.andi %120, %124 : vector<1x512xi1>
    %cst_29 = arith.constant 0.000000e+00 : f32
    %126 = vector.shape_cast %125 : vector<1x512xi1> to vector<1x512xi1>
    %127 = vector.broadcast %126 : vector<1x512xi1> to vector<4x512xi1>
    %128 = vector.broadcast %cst_29 : f32 to vector<4x512xf32>
    %129 = arith.select %127, %116, %128 : vector<4x512xi1>, vector<4x512xf32>
    %c48_i32 = arith.constant 48 : i32
    %130 = tpu.dynamic_rotate %0 by %c48_i32 dim 1 : vector<4x512xf32>, i32 -> vector<4x512xf32>
    %c-48_i32 = arith.constant -48 : i32
    %131 = vector.broadcast %c-48_i32 : i32 to vector<1x512xi32>
    %132 = arith.addi %37, %131 : vector<1x512xi32>
    %c0_i32_30 = arith.constant 0 : i32
    %133 = vector.broadcast %c0_i32_30 : i32 to vector<1x512xi32>
    %134 = arith.cmpi sge, %132, %133 : vector<1x512xi32>
    %c-48_i32_31 = arith.constant -48 : i32
    %135 = vector.broadcast %c-48_i32_31 : i32 to vector<1x512xi32>
    %136 = arith.addi %37, %135 : vector<1x512xi32>
    %c256_i32_32 = arith.constant 256 : i32
    %137 = vector.broadcast %c256_i32_32 : i32 to vector<1x512xi32>
    %138 = arith.cmpi slt, %136, %137 : vector<1x512xi32>
    %139 = arith.andi %134, %138 : vector<1x512xi1>
    %cst_33 = arith.constant 0.000000e+00 : f32
    %140 = vector.shape_cast %139 : vector<1x512xi1> to vector<1x512xi1>
    %141 = vector.broadcast %140 : vector<1x512xi1> to vector<4x512xi1>
    %142 = vector.broadcast %cst_33 : f32 to vector<4x512xf32>
    %143 = arith.select %141, %130, %142 : vector<4x512xi1>, vector<4x512xf32>
    %144 = vector.extract_strided_slice %1 {offsets = [0, 4], sizes = [2, 1], strides = [1, 1]} : vector<2x36xf32> to vector<2x1xf32>
    %145 = vector.extract_strided_slice %129 {offsets = [0, 0], sizes = [1, 512], strides = [1, 1]} : vector<4x512xf32> to vector<1x512xf32>
    %146 = vector.broadcast %144 : vector<2x1xf32> to vector<2x512xf32>
    %147 = vector.broadcast %145 : vector<1x512xf32> to vector<2x512xf32>
    %148 = arith.mulf %146, %147 : vector<2x512xf32>
    %149 = arith.addf %109, %148 : vector<2x512xf32>
    %150 = vector.extract_strided_slice %2 {offsets = [0, 4], sizes = [2, 1], strides = [1, 1]} : vector<2x36xf32> to vector<2x1xf32>
    %151 = vector.extract_strided_slice %143 {offsets = [0, 0], sizes = [1, 512], strides = [1, 1]} : vector<4x512xf32> to vector<1x512xf32>
    %152 = vector.broadcast %150 : vector<2x1xf32> to vector<2x512xf32>
    %153 = vector.broadcast %151 : vector<1x512xf32> to vector<2x512xf32>
    %154 = arith.mulf %152, %153 : vector<2x512xf32>
    %155 = arith.addf %115, %154 : vector<2x512xf32>
    %156 = vector.extract_strided_slice %1 {offsets = [0, 5], sizes = [2, 1], strides = [1, 1]} : vector<2x36xf32> to vector<2x1xf32>
    %157 = vector.extract_strided_slice %129 {offsets = [1, 0], sizes = [1, 512], strides = [1, 1]} : vector<4x512xf32> to vector<1x512xf32>
    %158 = vector.broadcast %156 : vector<2x1xf32> to vector<2x512xf32>
    %159 = vector.broadcast %157 : vector<1x512xf32> to vector<2x512xf32>
    %160 = arith.mulf %158, %159 : vector<2x512xf32>
    %161 = arith.addf %149, %160 : vector<2x512xf32>
    %162 = vector.extract_strided_slice %2 {offsets = [0, 5], sizes = [2, 1], strides = [1, 1]} : vector<2x36xf32> to vector<2x1xf32>
    %163 = vector.extract_strided_slice %143 {offsets = [1, 0], sizes = [1, 512], strides = [1, 1]} : vector<4x512xf32> to vector<1x512xf32>
    %164 = vector.broadcast %162 : vector<2x1xf32> to vector<2x512xf32>
    %165 = vector.broadcast %163 : vector<1x512xf32> to vector<2x512xf32>
    %166 = arith.mulf %164, %165 : vector<2x512xf32>
    %167 = arith.addf %155, %166 : vector<2x512xf32>
    %168 = vector.extract_strided_slice %1 {offsets = [0, 6], sizes = [2, 1], strides = [1, 1]} : vector<2x36xf32> to vector<2x1xf32>
    %169 = vector.extract_strided_slice %129 {offsets = [2, 0], sizes = [1, 512], strides = [1, 1]} : vector<4x512xf32> to vector<1x512xf32>
    %170 = vector.broadcast %168 : vector<2x1xf32> to vector<2x512xf32>
    %171 = vector.broadcast %169 : vector<1x512xf32> to vector<2x512xf32>
    %172 = arith.mulf %170, %171 : vector<2x512xf32>
    %173 = arith.addf %161, %172 : vector<2x512xf32>
    %174 = vector.extract_strided_slice %2 {offsets = [0, 6], sizes = [2, 1], strides = [1, 1]} : vector<2x36xf32> to vector<2x1xf32>
    %175 = vector.extract_strided_slice %143 {offsets = [2, 0], sizes = [1, 512], strides = [1, 1]} : vector<4x512xf32> to vector<1x512xf32>
    %176 = vector.broadcast %174 : vector<2x1xf32> to vector<2x512xf32>
    %177 = vector.broadcast %175 : vector<1x512xf32> to vector<2x512xf32>
    %178 = arith.mulf %176, %177 : vector<2x512xf32>
    %179 = arith.addf %167, %178 : vector<2x512xf32>
    %180 = vector.extract_strided_slice %1 {offsets = [0, 7], sizes = [2, 1], strides = [1, 1]} : vector<2x36xf32> to vector<2x1xf32>
    %181 = vector.extract_strided_slice %129 {offsets = [3, 0], sizes = [1, 512], strides = [1, 1]} : vector<4x512xf32> to vector<1x512xf32>
    %182 = vector.broadcast %180 : vector<2x1xf32> to vector<2x512xf32>
    %183 = vector.broadcast %181 : vector<1x512xf32> to vector<2x512xf32>
    %184 = arith.mulf %182, %183 : vector<2x512xf32>
    %185 = arith.addf %173, %184 : vector<2x512xf32>
    %186 = vector.extract_strided_slice %2 {offsets = [0, 7], sizes = [2, 1], strides = [1, 1]} : vector<2x36xf32> to vector<2x1xf32>
    %187 = vector.extract_strided_slice %143 {offsets = [3, 0], sizes = [1, 512], strides = [1, 1]} : vector<4x512xf32> to vector<1x512xf32>
    %188 = vector.broadcast %186 : vector<2x1xf32> to vector<2x512xf32>
    %189 = vector.broadcast %187 : vector<1x512xf32> to vector<2x512xf32>
    %190 = arith.mulf %188, %189 : vector<2x512xf32>
    %191 = arith.addf %179, %190 : vector<2x512xf32>
    %c2_i32 = arith.constant 2 : i32
    %192 = tpu.dynamic_rotate %0 by %c2_i32 dim 1 : vector<4x512xf32>, i32 -> vector<4x512xf32>
    %c-2_i32 = arith.constant -2 : i32
    %193 = vector.broadcast %c-2_i32 : i32 to vector<1x512xi32>
    %194 = arith.addi %21, %193 : vector<1x512xi32>
    %c0_i32_34 = arith.constant 0 : i32
    %195 = vector.broadcast %c0_i32_34 : i32 to vector<1x512xi32>
    %196 = arith.cmpi sge, %194, %195 : vector<1x512xi32>
    %c-2_i32_35 = arith.constant -2 : i32
    %197 = vector.broadcast %c-2_i32_35 : i32 to vector<1x512xi32>
    %198 = arith.addi %21, %197 : vector<1x512xi32>
    %c16_i32_36 = arith.constant 16 : i32
    %199 = vector.broadcast %c16_i32_36 : i32 to vector<1x512xi32>
    %200 = arith.cmpi slt, %198, %199 : vector<1x512xi32>
    %201 = arith.andi %196, %200 : vector<1x512xi1>
    %cst_37 = arith.constant 0.000000e+00 : f32
    %202 = vector.shape_cast %201 : vector<1x512xi1> to vector<1x512xi1>
    %203 = vector.broadcast %202 : vector<1x512xi1> to vector<4x512xi1>
    %204 = vector.broadcast %cst_37 : f32 to vector<4x512xf32>
    %205 = arith.select %203, %192, %204 : vector<4x512xi1>, vector<4x512xf32>
    %c32_i32 = arith.constant 32 : i32
    %206 = tpu.dynamic_rotate %0 by %c32_i32 dim 1 : vector<4x512xf32>, i32 -> vector<4x512xf32>
    %c-32_i32 = arith.constant -32 : i32
    %207 = vector.broadcast %c-32_i32 : i32 to vector<1x512xi32>
    %208 = arith.addi %37, %207 : vector<1x512xi32>
    %c0_i32_38 = arith.constant 0 : i32
    %209 = vector.broadcast %c0_i32_38 : i32 to vector<1x512xi32>
    %210 = arith.cmpi sge, %208, %209 : vector<1x512xi32>
    %c-32_i32_39 = arith.constant -32 : i32
    %211 = vector.broadcast %c-32_i32_39 : i32 to vector<1x512xi32>
    %212 = arith.addi %37, %211 : vector<1x512xi32>
    %c256_i32_40 = arith.constant 256 : i32
    %213 = vector.broadcast %c256_i32_40 : i32 to vector<1x512xi32>
    %214 = arith.cmpi slt, %212, %213 : vector<1x512xi32>
    %215 = arith.andi %210, %214 : vector<1x512xi1>
    %cst_41 = arith.constant 0.000000e+00 : f32
    %216 = vector.shape_cast %215 : vector<1x512xi1> to vector<1x512xi1>
    %217 = vector.broadcast %216 : vector<1x512xi1> to vector<4x512xi1>
    %218 = vector.broadcast %cst_41 : f32 to vector<4x512xf32>
    %219 = arith.select %217, %206, %218 : vector<4x512xi1>, vector<4x512xf32>
    %220 = vector.extract_strided_slice %1 {offsets = [0, 8], sizes = [2, 1], strides = [1, 1]} : vector<2x36xf32> to vector<2x1xf32>
    %221 = vector.extract_strided_slice %205 {offsets = [0, 0], sizes = [1, 512], strides = [1, 1]} : vector<4x512xf32> to vector<1x512xf32>
    %222 = vector.broadcast %220 : vector<2x1xf32> to vector<2x512xf32>
    %223 = vector.broadcast %221 : vector<1x512xf32> to vector<2x512xf32>
    %224 = arith.mulf %222, %223 : vector<2x512xf32>
    %225 = arith.addf %185, %224 : vector<2x512xf32>
    %226 = vector.extract_strided_slice %2 {offsets = [0, 8], sizes = [2, 1], strides = [1, 1]} : vector<2x36xf32> to vector<2x1xf32>
    %227 = vector.extract_strided_slice %219 {offsets = [0, 0], sizes = [1, 512], strides = [1, 1]} : vector<4x512xf32> to vector<1x512xf32>
    %228 = vector.broadcast %226 : vector<2x1xf32> to vector<2x512xf32>
    %229 = vector.broadcast %227 : vector<1x512xf32> to vector<2x512xf32>
    %230 = arith.mulf %228, %229 : vector<2x512xf32>
    %231 = arith.addf %191, %230 : vector<2x512xf32>
    %232 = vector.extract_strided_slice %1 {offsets = [0, 9], sizes = [2, 1], strides = [1, 1]} : vector<2x36xf32> to vector<2x1xf32>
    %233 = vector.extract_strided_slice %205 {offsets = [1, 0], sizes = [1, 512], strides = [1, 1]} : vector<4x512xf32> to vector<1x512xf32>
    %234 = vector.broadcast %232 : vector<2x1xf32> to vector<2x512xf32>
    %235 = vector.broadcast %233 : vector<1x512xf32> to vector<2x512xf32>
    %236 = arith.mulf %234, %235 : vector<2x512xf32>
    %237 = arith.addf %225, %236 : vector<2x512xf32>
    %238 = vector.extract_strided_slice %2 {offsets = [0, 9], sizes = [2, 1], strides = [1, 1]} : vector<2x36xf32> to vector<2x1xf32>
    %239 = vector.extract_strided_slice %219 {offsets = [1, 0], sizes = [1, 512], strides = [1, 1]} : vector<4x512xf32> to vector<1x512xf32>
    %240 = vector.broadcast %238 : vector<2x1xf32> to vector<2x512xf32>
    %241 = vector.broadcast %239 : vector<1x512xf32> to vector<2x512xf32>
    %242 = arith.mulf %240, %241 : vector<2x512xf32>
    %243 = arith.addf %231, %242 : vector<2x512xf32>
    %244 = vector.extract_strided_slice %1 {offsets = [0, 10], sizes = [2, 1], strides = [1, 1]} : vector<2x36xf32> to vector<2x1xf32>
    %245 = vector.extract_strided_slice %205 {offsets = [2, 0], sizes = [1, 512], strides = [1, 1]} : vector<4x512xf32> to vector<1x512xf32>
    %246 = vector.broadcast %244 : vector<2x1xf32> to vector<2x512xf32>
    %247 = vector.broadcast %245 : vector<1x512xf32> to vector<2x512xf32>
    %248 = arith.mulf %246, %247 : vector<2x512xf32>
    %249 = arith.addf %237, %248 : vector<2x512xf32>
    %250 = vector.extract_strided_slice %2 {offsets = [0, 10], sizes = [2, 1], strides = [1, 1]} : vector<2x36xf32> to vector<2x1xf32>
    %251 = vector.extract_strided_slice %219 {offsets = [2, 0], sizes = [1, 512], strides = [1, 1]} : vector<4x512xf32> to vector<1x512xf32>
    %252 = vector.broadcast %250 : vector<2x1xf32> to vector<2x512xf32>
    %253 = vector.broadcast %251 : vector<1x512xf32> to vector<2x512xf32>
    %254 = arith.mulf %252, %253 : vector<2x512xf32>
    %255 = arith.addf %243, %254 : vector<2x512xf32>
    %256 = vector.extract_strided_slice %1 {offsets = [0, 11], sizes = [2, 1], strides = [1, 1]} : vector<2x36xf32> to vector<2x1xf32>
    %257 = vector.extract_strided_slice %205 {offsets = [3, 0], sizes = [1, 512], strides = [1, 1]} : vector<4x512xf32> to vector<1x512xf32>
    %258 = vector.broadcast %256 : vector<2x1xf32> to vector<2x512xf32>
    %259 = vector.broadcast %257 : vector<1x512xf32> to vector<2x512xf32>
    %260 = arith.mulf %258, %259 : vector<2x512xf32>
    %261 = arith.addf %249, %260 : vector<2x512xf32>
    %262 = vector.extract_strided_slice %2 {offsets = [0, 11], sizes = [2, 1], strides = [1, 1]} : vector<2x36xf32> to vector<2x1xf32>
    %263 = vector.extract_strided_slice %219 {offsets = [3, 0], sizes = [1, 512], strides = [1, 1]} : vector<4x512xf32> to vector<1x512xf32>
    %264 = vector.broadcast %262 : vector<2x1xf32> to vector<2x512xf32>
    %265 = vector.broadcast %263 : vector<1x512xf32> to vector<2x512xf32>
    %266 = arith.mulf %264, %265 : vector<2x512xf32>
    %267 = arith.addf %255, %266 : vector<2x512xf32>
    %c1_i32_42 = arith.constant 1 : i32
    %268 = tpu.dynamic_rotate %0 by %c1_i32_42 dim 1 : vector<4x512xf32>, i32 -> vector<4x512xf32>
    %c-1_i32 = arith.constant -1 : i32
    %269 = vector.broadcast %c-1_i32 : i32 to vector<1x512xi32>
    %270 = arith.addi %21, %269 : vector<1x512xi32>
    %c0_i32_43 = arith.constant 0 : i32
    %271 = vector.broadcast %c0_i32_43 : i32 to vector<1x512xi32>
    %272 = arith.cmpi sge, %270, %271 : vector<1x512xi32>
    %c-1_i32_44 = arith.constant -1 : i32
    %273 = vector.broadcast %c-1_i32_44 : i32 to vector<1x512xi32>
    %274 = arith.addi %21, %273 : vector<1x512xi32>
    %c16_i32_45 = arith.constant 16 : i32
    %275 = vector.broadcast %c16_i32_45 : i32 to vector<1x512xi32>
    %276 = arith.cmpi slt, %274, %275 : vector<1x512xi32>
    %277 = arith.andi %272, %276 : vector<1x512xi1>
    %cst_46 = arith.constant 0.000000e+00 : f32
    %278 = vector.shape_cast %277 : vector<1x512xi1> to vector<1x512xi1>
    %279 = vector.broadcast %278 : vector<1x512xi1> to vector<4x512xi1>
    %280 = vector.broadcast %cst_46 : f32 to vector<4x512xf32>
    %281 = arith.select %279, %268, %280 : vector<4x512xi1>, vector<4x512xf32>
    %c16_i32_47 = arith.constant 16 : i32
    %282 = tpu.dynamic_rotate %0 by %c16_i32_47 dim 1 : vector<4x512xf32>, i32 -> vector<4x512xf32>
    %c-16_i32 = arith.constant -16 : i32
    %283 = vector.broadcast %c-16_i32 : i32 to vector<1x512xi32>
    %284 = arith.addi %37, %283 : vector<1x512xi32>
    %c0_i32_48 = arith.constant 0 : i32
    %285 = vector.broadcast %c0_i32_48 : i32 to vector<1x512xi32>
    %286 = arith.cmpi sge, %284, %285 : vector<1x512xi32>
    %c-16_i32_49 = arith.constant -16 : i32
    %287 = vector.broadcast %c-16_i32_49 : i32 to vector<1x512xi32>
    %288 = arith.addi %37, %287 : vector<1x512xi32>
    %c256_i32_50 = arith.constant 256 : i32
    %289 = vector.broadcast %c256_i32_50 : i32 to vector<1x512xi32>
    %290 = arith.cmpi slt, %288, %289 : vector<1x512xi32>
    %291 = arith.andi %286, %290 : vector<1x512xi1>
    %cst_51 = arith.constant 0.000000e+00 : f32
    %292 = vector.shape_cast %291 : vector<1x512xi1> to vector<1x512xi1>
    %293 = vector.broadcast %292 : vector<1x512xi1> to vector<4x512xi1>
    %294 = vector.broadcast %cst_51 : f32 to vector<4x512xf32>
    %295 = arith.select %293, %282, %294 : vector<4x512xi1>, vector<4x512xf32>
    %296 = vector.extract_strided_slice %1 {offsets = [0, 12], sizes = [2, 1], strides = [1, 1]} : vector<2x36xf32> to vector<2x1xf32>
    %297 = vector.extract_strided_slice %281 {offsets = [0, 0], sizes = [1, 512], strides = [1, 1]} : vector<4x512xf32> to vector<1x512xf32>
    %298 = vector.broadcast %296 : vector<2x1xf32> to vector<2x512xf32>
    %299 = vector.broadcast %297 : vector<1x512xf32> to vector<2x512xf32>
    %300 = arith.mulf %298, %299 : vector<2x512xf32>
    %301 = arith.addf %261, %300 : vector<2x512xf32>
    %302 = vector.extract_strided_slice %2 {offsets = [0, 12], sizes = [2, 1], strides = [1, 1]} : vector<2x36xf32> to vector<2x1xf32>
    %303 = vector.extract_strided_slice %295 {offsets = [0, 0], sizes = [1, 512], strides = [1, 1]} : vector<4x512xf32> to vector<1x512xf32>
    %304 = vector.broadcast %302 : vector<2x1xf32> to vector<2x512xf32>
    %305 = vector.broadcast %303 : vector<1x512xf32> to vector<2x512xf32>
    %306 = arith.mulf %304, %305 : vector<2x512xf32>
    %307 = arith.addf %267, %306 : vector<2x512xf32>
    %308 = vector.extract_strided_slice %1 {offsets = [0, 13], sizes = [2, 1], strides = [1, 1]} : vector<2x36xf32> to vector<2x1xf32>
    %309 = vector.extract_strided_slice %281 {offsets = [1, 0], sizes = [1, 512], strides = [1, 1]} : vector<4x512xf32> to vector<1x512xf32>
    %310 = vector.broadcast %308 : vector<2x1xf32> to vector<2x512xf32>
    %311 = vector.broadcast %309 : vector<1x512xf32> to vector<2x512xf32>
    %312 = arith.mulf %310, %311 : vector<2x512xf32>
    %313 = arith.addf %301, %312 : vector<2x512xf32>
    %314 = vector.extract_strided_slice %2 {offsets = [0, 13], sizes = [2, 1], strides = [1, 1]} : vector<2x36xf32> to vector<2x1xf32>
    %315 = vector.extract_strided_slice %295 {offsets = [1, 0], sizes = [1, 512], strides = [1, 1]} : vector<4x512xf32> to vector<1x512xf32>
    %316 = vector.broadcast %314 : vector<2x1xf32> to vector<2x512xf32>
    %317 = vector.broadcast %315 : vector<1x512xf32> to vector<2x512xf32>
    %318 = arith.mulf %316, %317 : vector<2x512xf32>
    %319 = arith.addf %307, %318 : vector<2x512xf32>
    %320 = vector.extract_strided_slice %1 {offsets = [0, 14], sizes = [2, 1], strides = [1, 1]} : vector<2x36xf32> to vector<2x1xf32>
    %321 = vector.extract_strided_slice %281 {offsets = [2, 0], sizes = [1, 512], strides = [1, 1]} : vector<4x512xf32> to vector<1x512xf32>
    %322 = vector.broadcast %320 : vector<2x1xf32> to vector<2x512xf32>
    %323 = vector.broadcast %321 : vector<1x512xf32> to vector<2x512xf32>
    %324 = arith.mulf %322, %323 : vector<2x512xf32>
    %325 = arith.addf %313, %324 : vector<2x512xf32>
    %326 = vector.extract_strided_slice %2 {offsets = [0, 14], sizes = [2, 1], strides = [1, 1]} : vector<2x36xf32> to vector<2x1xf32>
    %327 = vector.extract_strided_slice %295 {offsets = [2, 0], sizes = [1, 512], strides = [1, 1]} : vector<4x512xf32> to vector<1x512xf32>
    %328 = vector.broadcast %326 : vector<2x1xf32> to vector<2x512xf32>
    %329 = vector.broadcast %327 : vector<1x512xf32> to vector<2x512xf32>
    %330 = arith.mulf %328, %329 : vector<2x512xf32>
    %331 = arith.addf %319, %330 : vector<2x512xf32>
    %332 = vector.extract_strided_slice %1 {offsets = [0, 15], sizes = [2, 1], strides = [1, 1]} : vector<2x36xf32> to vector<2x1xf32>
    %333 = vector.extract_strided_slice %281 {offsets = [3, 0], sizes = [1, 512], strides = [1, 1]} : vector<4x512xf32> to vector<1x512xf32>
    %334 = vector.broadcast %332 : vector<2x1xf32> to vector<2x512xf32>
    %335 = vector.broadcast %333 : vector<1x512xf32> to vector<2x512xf32>
    %336 = arith.mulf %334, %335 : vector<2x512xf32>
    %337 = arith.addf %325, %336 : vector<2x512xf32>
    %338 = vector.extract_strided_slice %2 {offsets = [0, 15], sizes = [2, 1], strides = [1, 1]} : vector<2x36xf32> to vector<2x1xf32>
    %339 = vector.extract_strided_slice %295 {offsets = [3, 0], sizes = [1, 512], strides = [1, 1]} : vector<4x512xf32> to vector<1x512xf32>
    %340 = vector.broadcast %338 : vector<2x1xf32> to vector<2x512xf32>
    %341 = vector.broadcast %339 : vector<1x512xf32> to vector<2x512xf32>
    %342 = arith.mulf %340, %341 : vector<2x512xf32>
    %343 = arith.addf %331, %342 : vector<2x512xf32>
    %344 = vector.extract_strided_slice %1 {offsets = [0, 16], sizes = [2, 1], strides = [1, 1]} : vector<2x36xf32> to vector<2x1xf32>
    %345 = vector.extract_strided_slice %0 {offsets = [0, 0], sizes = [1, 512], strides = [1, 1]} : vector<4x512xf32> to vector<1x512xf32>
    %346 = vector.broadcast %344 : vector<2x1xf32> to vector<2x512xf32>
    %347 = vector.broadcast %345 : vector<1x512xf32> to vector<2x512xf32>
    %348 = arith.mulf %346, %347 : vector<2x512xf32>
    %349 = arith.addf %337, %348 : vector<2x512xf32>
    %350 = vector.extract_strided_slice %2 {offsets = [0, 16], sizes = [2, 1], strides = [1, 1]} : vector<2x36xf32> to vector<2x1xf32>
    %351 = vector.extract_strided_slice %0 {offsets = [0, 0], sizes = [1, 512], strides = [1, 1]} : vector<4x512xf32> to vector<1x512xf32>
    %352 = vector.broadcast %350 : vector<2x1xf32> to vector<2x512xf32>
    %353 = vector.broadcast %351 : vector<1x512xf32> to vector<2x512xf32>
    %354 = arith.mulf %352, %353 : vector<2x512xf32>
    %355 = arith.addf %343, %354 : vector<2x512xf32>
    %356 = vector.extract_strided_slice %1 {offsets = [0, 17], sizes = [2, 1], strides = [1, 1]} : vector<2x36xf32> to vector<2x1xf32>
    %357 = vector.extract_strided_slice %0 {offsets = [1, 0], sizes = [1, 512], strides = [1, 1]} : vector<4x512xf32> to vector<1x512xf32>
    %358 = vector.broadcast %356 : vector<2x1xf32> to vector<2x512xf32>
    %359 = vector.broadcast %357 : vector<1x512xf32> to vector<2x512xf32>
    %360 = arith.mulf %358, %359 : vector<2x512xf32>
    %361 = arith.addf %349, %360 : vector<2x512xf32>
    %362 = vector.extract_strided_slice %2 {offsets = [0, 17], sizes = [2, 1], strides = [1, 1]} : vector<2x36xf32> to vector<2x1xf32>
    %363 = vector.extract_strided_slice %0 {offsets = [1, 0], sizes = [1, 512], strides = [1, 1]} : vector<4x512xf32> to vector<1x512xf32>
    %364 = vector.broadcast %362 : vector<2x1xf32> to vector<2x512xf32>
    %365 = vector.broadcast %363 : vector<1x512xf32> to vector<2x512xf32>
    %366 = arith.mulf %364, %365 : vector<2x512xf32>
    %367 = arith.addf %355, %366 : vector<2x512xf32>
    %368 = vector.extract_strided_slice %1 {offsets = [0, 18], sizes = [2, 1], strides = [1, 1]} : vector<2x36xf32> to vector<2x1xf32>
    %369 = vector.extract_strided_slice %0 {offsets = [2, 0], sizes = [1, 512], strides = [1, 1]} : vector<4x512xf32> to vector<1x512xf32>
    %370 = vector.broadcast %368 : vector<2x1xf32> to vector<2x512xf32>
    %371 = vector.broadcast %369 : vector<1x512xf32> to vector<2x512xf32>
    %372 = arith.mulf %370, %371 : vector<2x512xf32>
    %373 = arith.addf %361, %372 : vector<2x512xf32>
    %374 = vector.extract_strided_slice %2 {offsets = [0, 18], sizes = [2, 1], strides = [1, 1]} : vector<2x36xf32> to vector<2x1xf32>
    %375 = vector.extract_strided_slice %0 {offsets = [2, 0], sizes = [1, 512], strides = [1, 1]} : vector<4x512xf32> to vector<1x512xf32>
    %376 = vector.broadcast %374 : vector<2x1xf32> to vector<2x512xf32>
    %377 = vector.broadcast %375 : vector<1x512xf32> to vector<2x512xf32>
    %378 = arith.mulf %376, %377 : vector<2x512xf32>
    %379 = arith.addf %367, %378 : vector<2x512xf32>
    %380 = vector.extract_strided_slice %1 {offsets = [0, 19], sizes = [2, 1], strides = [1, 1]} : vector<2x36xf32> to vector<2x1xf32>
    %381 = vector.extract_strided_slice %0 {offsets = [3, 0], sizes = [1, 512], strides = [1, 1]} : vector<4x512xf32> to vector<1x512xf32>
    %382 = vector.broadcast %380 : vector<2x1xf32> to vector<2x512xf32>
    %383 = vector.broadcast %381 : vector<1x512xf32> to vector<2x512xf32>
    %384 = arith.mulf %382, %383 : vector<2x512xf32>
    %385 = arith.addf %373, %384 : vector<2x512xf32>
    %386 = vector.extract_strided_slice %2 {offsets = [0, 19], sizes = [2, 1], strides = [1, 1]} : vector<2x36xf32> to vector<2x1xf32>
    %387 = vector.extract_strided_slice %0 {offsets = [3, 0], sizes = [1, 512], strides = [1, 1]} : vector<4x512xf32> to vector<1x512xf32>
    %388 = vector.broadcast %386 : vector<2x1xf32> to vector<2x512xf32>
    %389 = vector.broadcast %387 : vector<1x512xf32> to vector<2x512xf32>
    %390 = arith.mulf %388, %389 : vector<2x512xf32>
    %391 = arith.addf %379, %390 : vector<2x512xf32>
    %c511_i32 = arith.constant 511 : i32
    %392 = tpu.dynamic_rotate %0 by %c511_i32 dim 1 : vector<4x512xf32>, i32 -> vector<4x512xf32>
    %c1_i32_52 = arith.constant 1 : i32
    %393 = vector.broadcast %c1_i32_52 : i32 to vector<1x512xi32>
    %394 = arith.addi %21, %393 : vector<1x512xi32>
    %c0_i32_53 = arith.constant 0 : i32
    %395 = vector.broadcast %c0_i32_53 : i32 to vector<1x512xi32>
    %396 = arith.cmpi sge, %394, %395 : vector<1x512xi32>
    %c1_i32_54 = arith.constant 1 : i32
    %397 = vector.broadcast %c1_i32_54 : i32 to vector<1x512xi32>
    %398 = arith.addi %21, %397 : vector<1x512xi32>
    %c16_i32_55 = arith.constant 16 : i32
    %399 = vector.broadcast %c16_i32_55 : i32 to vector<1x512xi32>
    %400 = arith.cmpi slt, %398, %399 : vector<1x512xi32>
    %401 = arith.andi %396, %400 : vector<1x512xi1>
    %cst_56 = arith.constant 0.000000e+00 : f32
    %402 = vector.shape_cast %401 : vector<1x512xi1> to vector<1x512xi1>
    %403 = vector.broadcast %402 : vector<1x512xi1> to vector<4x512xi1>
    %404 = vector.broadcast %cst_56 : f32 to vector<4x512xf32>
    %405 = arith.select %403, %392, %404 : vector<4x512xi1>, vector<4x512xf32>
    %c496_i32 = arith.constant 496 : i32
    %406 = tpu.dynamic_rotate %0 by %c496_i32 dim 1 : vector<4x512xf32>, i32 -> vector<4x512xf32>
    %c16_i32_57 = arith.constant 16 : i32
    %407 = vector.broadcast %c16_i32_57 : i32 to vector<1x512xi32>
    %408 = arith.addi %37, %407 : vector<1x512xi32>
    %c0_i32_58 = arith.constant 0 : i32
    %409 = vector.broadcast %c0_i32_58 : i32 to vector<1x512xi32>
    %410 = arith.cmpi sge, %408, %409 : vector<1x512xi32>
    %c16_i32_59 = arith.constant 16 : i32
    %411 = vector.broadcast %c16_i32_59 : i32 to vector<1x512xi32>
    %412 = arith.addi %37, %411 : vector<1x512xi32>
    %c256_i32_60 = arith.constant 256 : i32
    %413 = vector.broadcast %c256_i32_60 : i32 to vector<1x512xi32>
    %414 = arith.cmpi slt, %412, %413 : vector<1x512xi32>
    %415 = arith.andi %410, %414 : vector<1x512xi1>
    %cst_61 = arith.constant 0.000000e+00 : f32
    %416 = vector.shape_cast %415 : vector<1x512xi1> to vector<1x512xi1>
    %417 = vector.broadcast %416 : vector<1x512xi1> to vector<4x512xi1>
    %418 = vector.broadcast %cst_61 : f32 to vector<4x512xf32>
    %419 = arith.select %417, %406, %418 : vector<4x512xi1>, vector<4x512xf32>
    %420 = vector.extract_strided_slice %1 {offsets = [0, 20], sizes = [2, 1], strides = [1, 1]} : vector<2x36xf32> to vector<2x1xf32>
    %421 = vector.extract_strided_slice %405 {offsets = [0, 0], sizes = [1, 512], strides = [1, 1]} : vector<4x512xf32> to vector<1x512xf32>
    %422 = vector.broadcast %420 : vector<2x1xf32> to vector<2x512xf32>
    %423 = vector.broadcast %421 : vector<1x512xf32> to vector<2x512xf32>
    %424 = arith.mulf %422, %423 : vector<2x512xf32>
    %425 = arith.addf %385, %424 : vector<2x512xf32>
    %426 = vector.extract_strided_slice %2 {offsets = [0, 20], sizes = [2, 1], strides = [1, 1]} : vector<2x36xf32> to vector<2x1xf32>
    %427 = vector.extract_strided_slice %419 {offsets = [0, 0], sizes = [1, 512], strides = [1, 1]} : vector<4x512xf32> to vector<1x512xf32>
    %428 = vector.broadcast %426 : vector<2x1xf32> to vector<2x512xf32>
    %429 = vector.broadcast %427 : vector<1x512xf32> to vector<2x512xf32>
    %430 = arith.mulf %428, %429 : vector<2x512xf32>
    %431 = arith.addf %391, %430 : vector<2x512xf32>
    %432 = vector.extract_strided_slice %1 {offsets = [0, 21], sizes = [2, 1], strides = [1, 1]} : vector<2x36xf32> to vector<2x1xf32>
    %433 = vector.extract_strided_slice %405 {offsets = [1, 0], sizes = [1, 512], strides = [1, 1]} : vector<4x512xf32> to vector<1x512xf32>
    %434 = vector.broadcast %432 : vector<2x1xf32> to vector<2x512xf32>
    %435 = vector.broadcast %433 : vector<1x512xf32> to vector<2x512xf32>
    %436 = arith.mulf %434, %435 : vector<2x512xf32>
    %437 = arith.addf %425, %436 : vector<2x512xf32>
    %438 = vector.extract_strided_slice %2 {offsets = [0, 21], sizes = [2, 1], strides = [1, 1]} : vector<2x36xf32> to vector<2x1xf32>
    %439 = vector.extract_strided_slice %419 {offsets = [1, 0], sizes = [1, 512], strides = [1, 1]} : vector<4x512xf32> to vector<1x512xf32>
    %440 = vector.broadcast %438 : vector<2x1xf32> to vector<2x512xf32>
    %441 = vector.broadcast %439 : vector<1x512xf32> to vector<2x512xf32>
    %442 = arith.mulf %440, %441 : vector<2x512xf32>
    %443 = arith.addf %431, %442 : vector<2x512xf32>
    %444 = vector.extract_strided_slice %1 {offsets = [0, 22], sizes = [2, 1], strides = [1, 1]} : vector<2x36xf32> to vector<2x1xf32>
    %445 = vector.extract_strided_slice %405 {offsets = [2, 0], sizes = [1, 512], strides = [1, 1]} : vector<4x512xf32> to vector<1x512xf32>
    %446 = vector.broadcast %444 : vector<2x1xf32> to vector<2x512xf32>
    %447 = vector.broadcast %445 : vector<1x512xf32> to vector<2x512xf32>
    %448 = arith.mulf %446, %447 : vector<2x512xf32>
    %449 = arith.addf %437, %448 : vector<2x512xf32>
    %450 = vector.extract_strided_slice %2 {offsets = [0, 22], sizes = [2, 1], strides = [1, 1]} : vector<2x36xf32> to vector<2x1xf32>
    %451 = vector.extract_strided_slice %419 {offsets = [2, 0], sizes = [1, 512], strides = [1, 1]} : vector<4x512xf32> to vector<1x512xf32>
    %452 = vector.broadcast %450 : vector<2x1xf32> to vector<2x512xf32>
    %453 = vector.broadcast %451 : vector<1x512xf32> to vector<2x512xf32>
    %454 = arith.mulf %452, %453 : vector<2x512xf32>
    %455 = arith.addf %443, %454 : vector<2x512xf32>
    %456 = vector.extract_strided_slice %1 {offsets = [0, 23], sizes = [2, 1], strides = [1, 1]} : vector<2x36xf32> to vector<2x1xf32>
    %457 = vector.extract_strided_slice %405 {offsets = [3, 0], sizes = [1, 512], strides = [1, 1]} : vector<4x512xf32> to vector<1x512xf32>
    %458 = vector.broadcast %456 : vector<2x1xf32> to vector<2x512xf32>
    %459 = vector.broadcast %457 : vector<1x512xf32> to vector<2x512xf32>
    %460 = arith.mulf %458, %459 : vector<2x512xf32>
    %461 = arith.addf %449, %460 : vector<2x512xf32>
    %462 = vector.extract_strided_slice %2 {offsets = [0, 23], sizes = [2, 1], strides = [1, 1]} : vector<2x36xf32> to vector<2x1xf32>
    %463 = vector.extract_strided_slice %419 {offsets = [3, 0], sizes = [1, 512], strides = [1, 1]} : vector<4x512xf32> to vector<1x512xf32>
    %464 = vector.broadcast %462 : vector<2x1xf32> to vector<2x512xf32>
    %465 = vector.broadcast %463 : vector<1x512xf32> to vector<2x512xf32>
    %466 = arith.mulf %464, %465 : vector<2x512xf32>
    %467 = arith.addf %455, %466 : vector<2x512xf32>
    %c510_i32 = arith.constant 510 : i32
    %468 = tpu.dynamic_rotate %0 by %c510_i32 dim 1 : vector<4x512xf32>, i32 -> vector<4x512xf32>
    %c2_i32_62 = arith.constant 2 : i32
    %469 = vector.broadcast %c2_i32_62 : i32 to vector<1x512xi32>
    %470 = arith.addi %21, %469 : vector<1x512xi32>
    %c0_i32_63 = arith.constant 0 : i32
    %471 = vector.broadcast %c0_i32_63 : i32 to vector<1x512xi32>
    %472 = arith.cmpi sge, %470, %471 : vector<1x512xi32>
    %c2_i32_64 = arith.constant 2 : i32
    %473 = vector.broadcast %c2_i32_64 : i32 to vector<1x512xi32>
    %474 = arith.addi %21, %473 : vector<1x512xi32>
    %c16_i32_65 = arith.constant 16 : i32
    %475 = vector.broadcast %c16_i32_65 : i32 to vector<1x512xi32>
    %476 = arith.cmpi slt, %474, %475 : vector<1x512xi32>
    %477 = arith.andi %472, %476 : vector<1x512xi1>
    %cst_66 = arith.constant 0.000000e+00 : f32
    %478 = vector.shape_cast %477 : vector<1x512xi1> to vector<1x512xi1>
    %479 = vector.broadcast %478 : vector<1x512xi1> to vector<4x512xi1>
    %480 = vector.broadcast %cst_66 : f32 to vector<4x512xf32>
    %481 = arith.select %479, %468, %480 : vector<4x512xi1>, vector<4x512xf32>
    %c480_i32 = arith.constant 480 : i32
    %482 = tpu.dynamic_rotate %0 by %c480_i32 dim 1 : vector<4x512xf32>, i32 -> vector<4x512xf32>
    %c32_i32_67 = arith.constant 32 : i32
    %483 = vector.broadcast %c32_i32_67 : i32 to vector<1x512xi32>
    %484 = arith.addi %37, %483 : vector<1x512xi32>
    %c0_i32_68 = arith.constant 0 : i32
    %485 = vector.broadcast %c0_i32_68 : i32 to vector<1x512xi32>
    %486 = arith.cmpi sge, %484, %485 : vector<1x512xi32>
    %c32_i32_69 = arith.constant 32 : i32
    %487 = vector.broadcast %c32_i32_69 : i32 to vector<1x512xi32>
    %488 = arith.addi %37, %487 : vector<1x512xi32>
    %c256_i32_70 = arith.constant 256 : i32
    %489 = vector.broadcast %c256_i32_70 : i32 to vector<1x512xi32>
    %490 = arith.cmpi slt, %488, %489 : vector<1x512xi32>
    %491 = arith.andi %486, %490 : vector<1x512xi1>
    %cst_71 = arith.constant 0.000000e+00 : f32
    %492 = vector.shape_cast %491 : vector<1x512xi1> to vector<1x512xi1>
    %493 = vector.broadcast %492 : vector<1x512xi1> to vector<4x512xi1>
    %494 = vector.broadcast %cst_71 : f32 to vector<4x512xf32>
    %495 = arith.select %493, %482, %494 : vector<4x512xi1>, vector<4x512xf32>
    %496 = vector.extract_strided_slice %1 {offsets = [0, 24], sizes = [2, 1], strides = [1, 1]} : vector<2x36xf32> to vector<2x1xf32>
    %497 = vector.extract_strided_slice %481 {offsets = [0, 0], sizes = [1, 512], strides = [1, 1]} : vector<4x512xf32> to vector<1x512xf32>
    %498 = vector.broadcast %496 : vector<2x1xf32> to vector<2x512xf32>
    %499 = vector.broadcast %497 : vector<1x512xf32> to vector<2x512xf32>
    %500 = arith.mulf %498, %499 : vector<2x512xf32>
    %501 = arith.addf %461, %500 : vector<2x512xf32>
    %502 = vector.extract_strided_slice %2 {offsets = [0, 24], sizes = [2, 1], strides = [1, 1]} : vector<2x36xf32> to vector<2x1xf32>
    %503 = vector.extract_strided_slice %495 {offsets = [0, 0], sizes = [1, 512], strides = [1, 1]} : vector<4x512xf32> to vector<1x512xf32>
    %504 = vector.broadcast %502 : vector<2x1xf32> to vector<2x512xf32>
    %505 = vector.broadcast %503 : vector<1x512xf32> to vector<2x512xf32>
    %506 = arith.mulf %504, %505 : vector<2x512xf32>
    %507 = arith.addf %467, %506 : vector<2x512xf32>
    %508 = vector.extract_strided_slice %1 {offsets = [0, 25], sizes = [2, 1], strides = [1, 1]} : vector<2x36xf32> to vector<2x1xf32>
    %509 = vector.extract_strided_slice %481 {offsets = [1, 0], sizes = [1, 512], strides = [1, 1]} : vector<4x512xf32> to vector<1x512xf32>
    %510 = vector.broadcast %508 : vector<2x1xf32> to vector<2x512xf32>
    %511 = vector.broadcast %509 : vector<1x512xf32> to vector<2x512xf32>
    %512 = arith.mulf %510, %511 : vector<2x512xf32>
    %513 = arith.addf %501, %512 : vector<2x512xf32>
    %514 = vector.extract_strided_slice %2 {offsets = [0, 25], sizes = [2, 1], strides = [1, 1]} : vector<2x36xf32> to vector<2x1xf32>
    %515 = vector.extract_strided_slice %495 {offsets = [1, 0], sizes = [1, 512], strides = [1, 1]} : vector<4x512xf32> to vector<1x512xf32>
    %516 = vector.broadcast %514 : vector<2x1xf32> to vector<2x512xf32>
    %517 = vector.broadcast %515 : vector<1x512xf32> to vector<2x512xf32>
    %518 = arith.mulf %516, %517 : vector<2x512xf32>
    %519 = arith.addf %507, %518 : vector<2x512xf32>
    %520 = vector.extract_strided_slice %1 {offsets = [0, 26], sizes = [2, 1], strides = [1, 1]} : vector<2x36xf32> to vector<2x1xf32>
    %521 = vector.extract_strided_slice %481 {offsets = [2, 0], sizes = [1, 512], strides = [1, 1]} : vector<4x512xf32> to vector<1x512xf32>
    %522 = vector.broadcast %520 : vector<2x1xf32> to vector<2x512xf32>
    %523 = vector.broadcast %521 : vector<1x512xf32> to vector<2x512xf32>
    %524 = arith.mulf %522, %523 : vector<2x512xf32>
    %525 = arith.addf %513, %524 : vector<2x512xf32>
    %526 = vector.extract_strided_slice %2 {offsets = [0, 26], sizes = [2, 1], strides = [1, 1]} : vector<2x36xf32> to vector<2x1xf32>
    %527 = vector.extract_strided_slice %495 {offsets = [2, 0], sizes = [1, 512], strides = [1, 1]} : vector<4x512xf32> to vector<1x512xf32>
    %528 = vector.broadcast %526 : vector<2x1xf32> to vector<2x512xf32>
    %529 = vector.broadcast %527 : vector<1x512xf32> to vector<2x512xf32>
    %530 = arith.mulf %528, %529 : vector<2x512xf32>
    %531 = arith.addf %519, %530 : vector<2x512xf32>
    %532 = vector.extract_strided_slice %1 {offsets = [0, 27], sizes = [2, 1], strides = [1, 1]} : vector<2x36xf32> to vector<2x1xf32>
    %533 = vector.extract_strided_slice %481 {offsets = [3, 0], sizes = [1, 512], strides = [1, 1]} : vector<4x512xf32> to vector<1x512xf32>
    %534 = vector.broadcast %532 : vector<2x1xf32> to vector<2x512xf32>
    %535 = vector.broadcast %533 : vector<1x512xf32> to vector<2x512xf32>
    %536 = arith.mulf %534, %535 : vector<2x512xf32>
    %537 = arith.addf %525, %536 : vector<2x512xf32>
    %538 = vector.extract_strided_slice %2 {offsets = [0, 27], sizes = [2, 1], strides = [1, 1]} : vector<2x36xf32> to vector<2x1xf32>
    %539 = vector.extract_strided_slice %495 {offsets = [3, 0], sizes = [1, 512], strides = [1, 1]} : vector<4x512xf32> to vector<1x512xf32>
    %540 = vector.broadcast %538 : vector<2x1xf32> to vector<2x512xf32>
    %541 = vector.broadcast %539 : vector<1x512xf32> to vector<2x512xf32>
    %542 = arith.mulf %540, %541 : vector<2x512xf32>
    %543 = arith.addf %531, %542 : vector<2x512xf32>
    %c509_i32 = arith.constant 509 : i32
    %544 = tpu.dynamic_rotate %0 by %c509_i32 dim 1 : vector<4x512xf32>, i32 -> vector<4x512xf32>
    %c3_i32_72 = arith.constant 3 : i32
    %545 = vector.broadcast %c3_i32_72 : i32 to vector<1x512xi32>
    %546 = arith.addi %21, %545 : vector<1x512xi32>
    %c0_i32_73 = arith.constant 0 : i32
    %547 = vector.broadcast %c0_i32_73 : i32 to vector<1x512xi32>
    %548 = arith.cmpi sge, %546, %547 : vector<1x512xi32>
    %c3_i32_74 = arith.constant 3 : i32
    %549 = vector.broadcast %c3_i32_74 : i32 to vector<1x512xi32>
    %550 = arith.addi %21, %549 : vector<1x512xi32>
    %c16_i32_75 = arith.constant 16 : i32
    %551 = vector.broadcast %c16_i32_75 : i32 to vector<1x512xi32>
    %552 = arith.cmpi slt, %550, %551 : vector<1x512xi32>
    %553 = arith.andi %548, %552 : vector<1x512xi1>
    %cst_76 = arith.constant 0.000000e+00 : f32
    %554 = vector.shape_cast %553 : vector<1x512xi1> to vector<1x512xi1>
    %555 = vector.broadcast %554 : vector<1x512xi1> to vector<4x512xi1>
    %556 = vector.broadcast %cst_76 : f32 to vector<4x512xf32>
    %557 = arith.select %555, %544, %556 : vector<4x512xi1>, vector<4x512xf32>
    %c464_i32 = arith.constant 464 : i32
    %558 = tpu.dynamic_rotate %0 by %c464_i32 dim 1 : vector<4x512xf32>, i32 -> vector<4x512xf32>
    %c48_i32_77 = arith.constant 48 : i32
    %559 = vector.broadcast %c48_i32_77 : i32 to vector<1x512xi32>
    %560 = arith.addi %37, %559 : vector<1x512xi32>
    %c0_i32_78 = arith.constant 0 : i32
    %561 = vector.broadcast %c0_i32_78 : i32 to vector<1x512xi32>
    %562 = arith.cmpi sge, %560, %561 : vector<1x512xi32>
    %c48_i32_79 = arith.constant 48 : i32
    %563 = vector.broadcast %c48_i32_79 : i32 to vector<1x512xi32>
    %564 = arith.addi %37, %563 : vector<1x512xi32>
    %c256_i32_80 = arith.constant 256 : i32
    %565 = vector.broadcast %c256_i32_80 : i32 to vector<1x512xi32>
    %566 = arith.cmpi slt, %564, %565 : vector<1x512xi32>
    %567 = arith.andi %562, %566 : vector<1x512xi1>
    %cst_81 = arith.constant 0.000000e+00 : f32
    %568 = vector.shape_cast %567 : vector<1x512xi1> to vector<1x512xi1>
    %569 = vector.broadcast %568 : vector<1x512xi1> to vector<4x512xi1>
    %570 = vector.broadcast %cst_81 : f32 to vector<4x512xf32>
    %571 = arith.select %569, %558, %570 : vector<4x512xi1>, vector<4x512xf32>
    %572 = vector.extract_strided_slice %1 {offsets = [0, 28], sizes = [2, 1], strides = [1, 1]} : vector<2x36xf32> to vector<2x1xf32>
    %573 = vector.extract_strided_slice %557 {offsets = [0, 0], sizes = [1, 512], strides = [1, 1]} : vector<4x512xf32> to vector<1x512xf32>
    %574 = vector.broadcast %572 : vector<2x1xf32> to vector<2x512xf32>
    %575 = vector.broadcast %573 : vector<1x512xf32> to vector<2x512xf32>
    %576 = arith.mulf %574, %575 : vector<2x512xf32>
    %577 = arith.addf %537, %576 : vector<2x512xf32>
    %578 = vector.extract_strided_slice %2 {offsets = [0, 28], sizes = [2, 1], strides = [1, 1]} : vector<2x36xf32> to vector<2x1xf32>
    %579 = vector.extract_strided_slice %571 {offsets = [0, 0], sizes = [1, 512], strides = [1, 1]} : vector<4x512xf32> to vector<1x512xf32>
    %580 = vector.broadcast %578 : vector<2x1xf32> to vector<2x512xf32>
    %581 = vector.broadcast %579 : vector<1x512xf32> to vector<2x512xf32>
    %582 = arith.mulf %580, %581 : vector<2x512xf32>
    %583 = arith.addf %543, %582 : vector<2x512xf32>
    %584 = vector.extract_strided_slice %1 {offsets = [0, 29], sizes = [2, 1], strides = [1, 1]} : vector<2x36xf32> to vector<2x1xf32>
    %585 = vector.extract_strided_slice %557 {offsets = [1, 0], sizes = [1, 512], strides = [1, 1]} : vector<4x512xf32> to vector<1x512xf32>
    %586 = vector.broadcast %584 : vector<2x1xf32> to vector<2x512xf32>
    %587 = vector.broadcast %585 : vector<1x512xf32> to vector<2x512xf32>
    %588 = arith.mulf %586, %587 : vector<2x512xf32>
    %589 = arith.addf %577, %588 : vector<2x512xf32>
    %590 = vector.extract_strided_slice %2 {offsets = [0, 29], sizes = [2, 1], strides = [1, 1]} : vector<2x36xf32> to vector<2x1xf32>
    %591 = vector.extract_strided_slice %571 {offsets = [1, 0], sizes = [1, 512], strides = [1, 1]} : vector<4x512xf32> to vector<1x512xf32>
    %592 = vector.broadcast %590 : vector<2x1xf32> to vector<2x512xf32>
    %593 = vector.broadcast %591 : vector<1x512xf32> to vector<2x512xf32>
    %594 = arith.mulf %592, %593 : vector<2x512xf32>
    %595 = arith.addf %583, %594 : vector<2x512xf32>
    %596 = vector.extract_strided_slice %1 {offsets = [0, 30], sizes = [2, 1], strides = [1, 1]} : vector<2x36xf32> to vector<2x1xf32>
    %597 = vector.extract_strided_slice %557 {offsets = [2, 0], sizes = [1, 512], strides = [1, 1]} : vector<4x512xf32> to vector<1x512xf32>
    %598 = vector.broadcast %596 : vector<2x1xf32> to vector<2x512xf32>
    %599 = vector.broadcast %597 : vector<1x512xf32> to vector<2x512xf32>
    %600 = arith.mulf %598, %599 : vector<2x512xf32>
    %601 = arith.addf %589, %600 : vector<2x512xf32>
    %602 = vector.extract_strided_slice %2 {offsets = [0, 30], sizes = [2, 1], strides = [1, 1]} : vector<2x36xf32> to vector<2x1xf32>
    %603 = vector.extract_strided_slice %571 {offsets = [2, 0], sizes = [1, 512], strides = [1, 1]} : vector<4x512xf32> to vector<1x512xf32>
    %604 = vector.broadcast %602 : vector<2x1xf32> to vector<2x512xf32>
    %605 = vector.broadcast %603 : vector<1x512xf32> to vector<2x512xf32>
    %606 = arith.mulf %604, %605 : vector<2x512xf32>
    %607 = arith.addf %595, %606 : vector<2x512xf32>
    %608 = vector.extract_strided_slice %1 {offsets = [0, 31], sizes = [2, 1], strides = [1, 1]} : vector<2x36xf32> to vector<2x1xf32>
    %609 = vector.extract_strided_slice %557 {offsets = [3, 0], sizes = [1, 512], strides = [1, 1]} : vector<4x512xf32> to vector<1x512xf32>
    %610 = vector.broadcast %608 : vector<2x1xf32> to vector<2x512xf32>
    %611 = vector.broadcast %609 : vector<1x512xf32> to vector<2x512xf32>
    %612 = arith.mulf %610, %611 : vector<2x512xf32>
    %613 = arith.addf %601, %612 : vector<2x512xf32>
    %614 = vector.extract_strided_slice %2 {offsets = [0, 31], sizes = [2, 1], strides = [1, 1]} : vector<2x36xf32> to vector<2x1xf32>
    %615 = vector.extract_strided_slice %571 {offsets = [3, 0], sizes = [1, 512], strides = [1, 1]} : vector<4x512xf32> to vector<1x512xf32>
    %616 = vector.broadcast %614 : vector<2x1xf32> to vector<2x512xf32>
    %617 = vector.broadcast %615 : vector<1x512xf32> to vector<2x512xf32>
    %618 = arith.mulf %616, %617 : vector<2x512xf32>
    %619 = arith.addf %607, %618 : vector<2x512xf32>
    %c508_i32 = arith.constant 508 : i32
    %620 = tpu.dynamic_rotate %0 by %c508_i32 dim 1 : vector<4x512xf32>, i32 -> vector<4x512xf32>
    %c4_i32_82 = arith.constant 4 : i32
    %621 = vector.broadcast %c4_i32_82 : i32 to vector<1x512xi32>
    %622 = arith.addi %21, %621 : vector<1x512xi32>
    %c0_i32_83 = arith.constant 0 : i32
    %623 = vector.broadcast %c0_i32_83 : i32 to vector<1x512xi32>
    %624 = arith.cmpi sge, %622, %623 : vector<1x512xi32>
    %c4_i32_84 = arith.constant 4 : i32
    %625 = vector.broadcast %c4_i32_84 : i32 to vector<1x512xi32>
    %626 = arith.addi %21, %625 : vector<1x512xi32>
    %c16_i32_85 = arith.constant 16 : i32
    %627 = vector.broadcast %c16_i32_85 : i32 to vector<1x512xi32>
    %628 = arith.cmpi slt, %626, %627 : vector<1x512xi32>
    %629 = arith.andi %624, %628 : vector<1x512xi1>
    %cst_86 = arith.constant 0.000000e+00 : f32
    %630 = vector.shape_cast %629 : vector<1x512xi1> to vector<1x512xi1>
    %631 = vector.broadcast %630 : vector<1x512xi1> to vector<4x512xi1>
    %632 = vector.broadcast %cst_86 : f32 to vector<4x512xf32>
    %633 = arith.select %631, %620, %632 : vector<4x512xi1>, vector<4x512xf32>
    %c448_i32 = arith.constant 448 : i32
    %634 = tpu.dynamic_rotate %0 by %c448_i32 dim 1 : vector<4x512xf32>, i32 -> vector<4x512xf32>
    %c64_i32_87 = arith.constant 64 : i32
    %635 = vector.broadcast %c64_i32_87 : i32 to vector<1x512xi32>
    %636 = arith.addi %37, %635 : vector<1x512xi32>
    %c0_i32_88 = arith.constant 0 : i32
    %637 = vector.broadcast %c0_i32_88 : i32 to vector<1x512xi32>
    %638 = arith.cmpi sge, %636, %637 : vector<1x512xi32>
    %c64_i32_89 = arith.constant 64 : i32
    %639 = vector.broadcast %c64_i32_89 : i32 to vector<1x512xi32>
    %640 = arith.addi %37, %639 : vector<1x512xi32>
    %c256_i32_90 = arith.constant 256 : i32
    %641 = vector.broadcast %c256_i32_90 : i32 to vector<1x512xi32>
    %642 = arith.cmpi slt, %640, %641 : vector<1x512xi32>
    %643 = arith.andi %638, %642 : vector<1x512xi1>
    %cst_91 = arith.constant 0.000000e+00 : f32
    %644 = vector.shape_cast %643 : vector<1x512xi1> to vector<1x512xi1>
    %645 = vector.broadcast %644 : vector<1x512xi1> to vector<4x512xi1>
    %646 = vector.broadcast %cst_91 : f32 to vector<4x512xf32>
    %647 = arith.select %645, %634, %646 : vector<4x512xi1>, vector<4x512xf32>
    %648 = vector.extract_strided_slice %1 {offsets = [0, 32], sizes = [2, 1], strides = [1, 1]} : vector<2x36xf32> to vector<2x1xf32>
    %649 = vector.extract_strided_slice %633 {offsets = [0, 0], sizes = [1, 512], strides = [1, 1]} : vector<4x512xf32> to vector<1x512xf32>
    %650 = vector.broadcast %648 : vector<2x1xf32> to vector<2x512xf32>
    %651 = vector.broadcast %649 : vector<1x512xf32> to vector<2x512xf32>
    %652 = arith.mulf %650, %651 : vector<2x512xf32>
    %653 = arith.addf %613, %652 : vector<2x512xf32>
    %654 = vector.extract_strided_slice %2 {offsets = [0, 32], sizes = [2, 1], strides = [1, 1]} : vector<2x36xf32> to vector<2x1xf32>
    %655 = vector.extract_strided_slice %647 {offsets = [0, 0], sizes = [1, 512], strides = [1, 1]} : vector<4x512xf32> to vector<1x512xf32>
    %656 = vector.broadcast %654 : vector<2x1xf32> to vector<2x512xf32>
    %657 = vector.broadcast %655 : vector<1x512xf32> to vector<2x512xf32>
    %658 = arith.mulf %656, %657 : vector<2x512xf32>
    %659 = arith.addf %619, %658 : vector<2x512xf32>
    %660 = vector.extract_strided_slice %1 {offsets = [0, 33], sizes = [2, 1], strides = [1, 1]} : vector<2x36xf32> to vector<2x1xf32>
    %661 = vector.extract_strided_slice %633 {offsets = [1, 0], sizes = [1, 512], strides = [1, 1]} : vector<4x512xf32> to vector<1x512xf32>
    %662 = vector.broadcast %660 : vector<2x1xf32> to vector<2x512xf32>
    %663 = vector.broadcast %661 : vector<1x512xf32> to vector<2x512xf32>
    %664 = arith.mulf %662, %663 : vector<2x512xf32>
    %665 = arith.addf %653, %664 : vector<2x512xf32>
    %666 = vector.extract_strided_slice %2 {offsets = [0, 33], sizes = [2, 1], strides = [1, 1]} : vector<2x36xf32> to vector<2x1xf32>
    %667 = vector.extract_strided_slice %647 {offsets = [1, 0], sizes = [1, 512], strides = [1, 1]} : vector<4x512xf32> to vector<1x512xf32>
    %668 = vector.broadcast %666 : vector<2x1xf32> to vector<2x512xf32>
    %669 = vector.broadcast %667 : vector<1x512xf32> to vector<2x512xf32>
    %670 = arith.mulf %668, %669 : vector<2x512xf32>
    %671 = arith.addf %659, %670 : vector<2x512xf32>
    %672 = vector.extract_strided_slice %1 {offsets = [0, 34], sizes = [2, 1], strides = [1, 1]} : vector<2x36xf32> to vector<2x1xf32>
    %673 = vector.extract_strided_slice %633 {offsets = [2, 0], sizes = [1, 512], strides = [1, 1]} : vector<4x512xf32> to vector<1x512xf32>
    %674 = vector.broadcast %672 : vector<2x1xf32> to vector<2x512xf32>
    %675 = vector.broadcast %673 : vector<1x512xf32> to vector<2x512xf32>
    %676 = arith.mulf %674, %675 : vector<2x512xf32>
    %677 = arith.addf %665, %676 : vector<2x512xf32>
    %678 = vector.extract_strided_slice %2 {offsets = [0, 34], sizes = [2, 1], strides = [1, 1]} : vector<2x36xf32> to vector<2x1xf32>
    %679 = vector.extract_strided_slice %647 {offsets = [2, 0], sizes = [1, 512], strides = [1, 1]} : vector<4x512xf32> to vector<1x512xf32>
    %680 = vector.broadcast %678 : vector<2x1xf32> to vector<2x512xf32>
    %681 = vector.broadcast %679 : vector<1x512xf32> to vector<2x512xf32>
    %682 = arith.mulf %680, %681 : vector<2x512xf32>
    %683 = arith.addf %671, %682 : vector<2x512xf32>
    %684 = vector.extract_strided_slice %1 {offsets = [0, 35], sizes = [2, 1], strides = [1, 1]} : vector<2x36xf32> to vector<2x1xf32>
    %685 = vector.extract_strided_slice %633 {offsets = [3, 0], sizes = [1, 512], strides = [1, 1]} : vector<4x512xf32> to vector<1x512xf32>
    %686 = vector.broadcast %684 : vector<2x1xf32> to vector<2x512xf32>
    %687 = vector.broadcast %685 : vector<1x512xf32> to vector<2x512xf32>
    %688 = arith.mulf %686, %687 : vector<2x512xf32>
    %689 = arith.addf %677, %688 : vector<2x512xf32>
    %690 = vector.extract_strided_slice %2 {offsets = [0, 35], sizes = [2, 1], strides = [1, 1]} : vector<2x36xf32> to vector<2x1xf32>
    %691 = vector.extract_strided_slice %647 {offsets = [3, 0], sizes = [1, 512], strides = [1, 1]} : vector<4x512xf32> to vector<1x512xf32>
    %692 = vector.broadcast %690 : vector<2x1xf32> to vector<2x512xf32>
    %693 = vector.broadcast %691 : vector<1x512xf32> to vector<2x512xf32>
    %694 = arith.mulf %692, %693 : vector<2x512xf32>
    %695 = arith.addf %683, %694 : vector<2x512xf32>
    %c0_92 = arith.constant 0 : index
    %c0_93 = arith.constant 0 : index
    %696 = vector.load %arg6[%c0_92, %c0_93] : memref<2x1xf32, #tpu.memory_space<vmem>>, vector<2x1xf32>
    %697 = vector.broadcast %696 : vector<2x1xf32> to vector<2x512xf32>
    %698 = arith.addf %689, %697 : vector<2x512xf32>
    %cst_94 = arith.constant 0.000000e+00 : f32
    %699 = vector.broadcast %cst_94 : f32 to vector<2x512xf32>
    %700 = arith.maximumf %698, %699 : vector<2x512xf32>
    %c0_95 = arith.constant 0 : index
    %c0_96 = arith.constant 0 : index
    %701 = vector.load %arg7[%c0_95, %c0_96] : memref<2x1xf32, #tpu.memory_space<vmem>>, vector<2x1xf32>
    %702 = vector.broadcast %701 : vector<2x1xf32> to vector<2x512xf32>
    %703 = arith.addf %695, %702 : vector<2x512xf32>
    %cst_97 = arith.constant 0.000000e+00 : f32
    %704 = vector.broadcast %cst_97 : f32 to vector<2x512xf32>
    %705 = arith.maximumf %703, %704 : vector<2x512xf32>
    %cst_98 = arith.constant 0.000000e+00 : f32
    %706 = vector.broadcast %cst_98 : f32 to vector<2x512xf32>
    %cst_99 = arith.constant 0.000000e+00 : f32
    %707 = vector.broadcast %cst_99 : f32 to vector<2x512xf32>
    %708 = vector.extract_strided_slice %3 {offsets = [0, 0], sizes = [2, 1], strides = [1, 1]} : vector<2x9xf32> to vector<2x1xf32>
    %c64_i32_100 = arith.constant 64 : i32
    %709 = tpu.dynamic_rotate %700 by %c64_i32_100 dim 1 : vector<2x512xf32>, i32 -> vector<2x512xf32>
    %c-64_i32_101 = arith.constant -64 : i32
    %710 = vector.broadcast %c-64_i32_101 : i32 to vector<1x512xi32>
    %711 = arith.addi %37, %710 : vector<1x512xi32>
    %c0_i32_102 = arith.constant 0 : i32
    %712 = vector.broadcast %c0_i32_102 : i32 to vector<1x512xi32>
    %713 = arith.cmpi sge, %711, %712 : vector<1x512xi32>
    %c-64_i32_103 = arith.constant -64 : i32
    %714 = vector.broadcast %c-64_i32_103 : i32 to vector<1x512xi32>
    %715 = arith.addi %37, %714 : vector<1x512xi32>
    %c256_i32_104 = arith.constant 256 : i32
    %716 = vector.broadcast %c256_i32_104 : i32 to vector<1x512xi32>
    %717 = arith.cmpi slt, %715, %716 : vector<1x512xi32>
    %718 = arith.andi %713, %717 : vector<1x512xi1>
    %cst_105 = arith.constant 0.000000e+00 : f32
    %719 = vector.shape_cast %718 : vector<1x512xi1> to vector<1x512xi1>
    %720 = vector.broadcast %719 : vector<1x512xi1> to vector<2x512xi1>
    %721 = vector.broadcast %cst_105 : f32 to vector<2x512xf32>
    %722 = arith.select %720, %709, %721 : vector<2x512xi1>, vector<2x512xf32>
    %723 = vector.broadcast %708 : vector<2x1xf32> to vector<2x512xf32>
    %724 = arith.mulf %723, %722 : vector<2x512xf32>
    %725 = arith.addf %706, %724 : vector<2x512xf32>
    %726 = vector.extract_strided_slice %4 {offsets = [0, 0], sizes = [2, 1], strides = [1, 1]} : vector<2x9xf32> to vector<2x1xf32>
    %c4_i32_106 = arith.constant 4 : i32
    %727 = tpu.dynamic_rotate %705 by %c4_i32_106 dim 1 : vector<2x512xf32>, i32 -> vector<2x512xf32>
    %c-4_i32_107 = arith.constant -4 : i32
    %728 = vector.broadcast %c-4_i32_107 : i32 to vector<1x512xi32>
    %729 = arith.addi %21, %728 : vector<1x512xi32>
    %c0_i32_108 = arith.constant 0 : i32
    %730 = vector.broadcast %c0_i32_108 : i32 to vector<1x512xi32>
    %731 = arith.cmpi sge, %729, %730 : vector<1x512xi32>
    %c-4_i32_109 = arith.constant -4 : i32
    %732 = vector.broadcast %c-4_i32_109 : i32 to vector<1x512xi32>
    %733 = arith.addi %21, %732 : vector<1x512xi32>
    %c16_i32_110 = arith.constant 16 : i32
    %734 = vector.broadcast %c16_i32_110 : i32 to vector<1x512xi32>
    %735 = arith.cmpi slt, %733, %734 : vector<1x512xi32>
    %736 = arith.andi %731, %735 : vector<1x512xi1>
    %cst_111 = arith.constant 0.000000e+00 : f32
    %737 = vector.shape_cast %736 : vector<1x512xi1> to vector<1x512xi1>
    %738 = vector.broadcast %737 : vector<1x512xi1> to vector<2x512xi1>
    %739 = vector.broadcast %cst_111 : f32 to vector<2x512xf32>
    %740 = arith.select %738, %727, %739 : vector<2x512xi1>, vector<2x512xf32>
    %741 = vector.broadcast %726 : vector<2x1xf32> to vector<2x512xf32>
    %742 = arith.mulf %741, %740 : vector<2x512xf32>
    %743 = arith.addf %707, %742 : vector<2x512xf32>
    %744 = vector.extract_strided_slice %3 {offsets = [0, 1], sizes = [2, 1], strides = [1, 1]} : vector<2x9xf32> to vector<2x1xf32>
    %c48_i32_112 = arith.constant 48 : i32
    %745 = tpu.dynamic_rotate %700 by %c48_i32_112 dim 1 : vector<2x512xf32>, i32 -> vector<2x512xf32>
    %c-48_i32_113 = arith.constant -48 : i32
    %746 = vector.broadcast %c-48_i32_113 : i32 to vector<1x512xi32>
    %747 = arith.addi %37, %746 : vector<1x512xi32>
    %c0_i32_114 = arith.constant 0 : i32
    %748 = vector.broadcast %c0_i32_114 : i32 to vector<1x512xi32>
    %749 = arith.cmpi sge, %747, %748 : vector<1x512xi32>
    %c-48_i32_115 = arith.constant -48 : i32
    %750 = vector.broadcast %c-48_i32_115 : i32 to vector<1x512xi32>
    %751 = arith.addi %37, %750 : vector<1x512xi32>
    %c256_i32_116 = arith.constant 256 : i32
    %752 = vector.broadcast %c256_i32_116 : i32 to vector<1x512xi32>
    %753 = arith.cmpi slt, %751, %752 : vector<1x512xi32>
    %754 = arith.andi %749, %753 : vector<1x512xi1>
    %cst_117 = arith.constant 0.000000e+00 : f32
    %755 = vector.shape_cast %754 : vector<1x512xi1> to vector<1x512xi1>
    %756 = vector.broadcast %755 : vector<1x512xi1> to vector<2x512xi1>
    %757 = vector.broadcast %cst_117 : f32 to vector<2x512xf32>
    %758 = arith.select %756, %745, %757 : vector<2x512xi1>, vector<2x512xf32>
    %759 = vector.broadcast %744 : vector<2x1xf32> to vector<2x512xf32>
    %760 = arith.mulf %759, %758 : vector<2x512xf32>
    %761 = arith.addf %725, %760 : vector<2x512xf32>
    %762 = vector.extract_strided_slice %4 {offsets = [0, 1], sizes = [2, 1], strides = [1, 1]} : vector<2x9xf32> to vector<2x1xf32>
    %c3_i32_118 = arith.constant 3 : i32
    %763 = tpu.dynamic_rotate %705 by %c3_i32_118 dim 1 : vector<2x512xf32>, i32 -> vector<2x512xf32>
    %c-3_i32_119 = arith.constant -3 : i32
    %764 = vector.broadcast %c-3_i32_119 : i32 to vector<1x512xi32>
    %765 = arith.addi %21, %764 : vector<1x512xi32>
    %c0_i32_120 = arith.constant 0 : i32
    %766 = vector.broadcast %c0_i32_120 : i32 to vector<1x512xi32>
    %767 = arith.cmpi sge, %765, %766 : vector<1x512xi32>
    %c-3_i32_121 = arith.constant -3 : i32
    %768 = vector.broadcast %c-3_i32_121 : i32 to vector<1x512xi32>
    %769 = arith.addi %21, %768 : vector<1x512xi32>
    %c16_i32_122 = arith.constant 16 : i32
    %770 = vector.broadcast %c16_i32_122 : i32 to vector<1x512xi32>
    %771 = arith.cmpi slt, %769, %770 : vector<1x512xi32>
    %772 = arith.andi %767, %771 : vector<1x512xi1>
    %cst_123 = arith.constant 0.000000e+00 : f32
    %773 = vector.shape_cast %772 : vector<1x512xi1> to vector<1x512xi1>
    %774 = vector.broadcast %773 : vector<1x512xi1> to vector<2x512xi1>
    %775 = vector.broadcast %cst_123 : f32 to vector<2x512xf32>
    %776 = arith.select %774, %763, %775 : vector<2x512xi1>, vector<2x512xf32>
    %777 = vector.broadcast %762 : vector<2x1xf32> to vector<2x512xf32>
    %778 = arith.mulf %777, %776 : vector<2x512xf32>
    %779 = arith.addf %743, %778 : vector<2x512xf32>
    %780 = vector.extract_strided_slice %3 {offsets = [0, 2], sizes = [2, 1], strides = [1, 1]} : vector<2x9xf32> to vector<2x1xf32>
    %c32_i32_124 = arith.constant 32 : i32
    %781 = tpu.dynamic_rotate %700 by %c32_i32_124 dim 1 : vector<2x512xf32>, i32 -> vector<2x512xf32>
    %c-32_i32_125 = arith.constant -32 : i32
    %782 = vector.broadcast %c-32_i32_125 : i32 to vector<1x512xi32>
    %783 = arith.addi %37, %782 : vector<1x512xi32>
    %c0_i32_126 = arith.constant 0 : i32
    %784 = vector.broadcast %c0_i32_126 : i32 to vector<1x512xi32>
    %785 = arith.cmpi sge, %783, %784 : vector<1x512xi32>
    %c-32_i32_127 = arith.constant -32 : i32
    %786 = vector.broadcast %c-32_i32_127 : i32 to vector<1x512xi32>
    %787 = arith.addi %37, %786 : vector<1x512xi32>
    %c256_i32_128 = arith.constant 256 : i32
    %788 = vector.broadcast %c256_i32_128 : i32 to vector<1x512xi32>
    %789 = arith.cmpi slt, %787, %788 : vector<1x512xi32>
    %790 = arith.andi %785, %789 : vector<1x512xi1>
    %cst_129 = arith.constant 0.000000e+00 : f32
    %791 = vector.shape_cast %790 : vector<1x512xi1> to vector<1x512xi1>
    %792 = vector.broadcast %791 : vector<1x512xi1> to vector<2x512xi1>
    %793 = vector.broadcast %cst_129 : f32 to vector<2x512xf32>
    %794 = arith.select %792, %781, %793 : vector<2x512xi1>, vector<2x512xf32>
    %795 = vector.broadcast %780 : vector<2x1xf32> to vector<2x512xf32>
    %796 = arith.mulf %795, %794 : vector<2x512xf32>
    %797 = arith.addf %761, %796 : vector<2x512xf32>
    %798 = vector.extract_strided_slice %4 {offsets = [0, 2], sizes = [2, 1], strides = [1, 1]} : vector<2x9xf32> to vector<2x1xf32>
    %c2_i32_130 = arith.constant 2 : i32
    %799 = tpu.dynamic_rotate %705 by %c2_i32_130 dim 1 : vector<2x512xf32>, i32 -> vector<2x512xf32>
    %c-2_i32_131 = arith.constant -2 : i32
    %800 = vector.broadcast %c-2_i32_131 : i32 to vector<1x512xi32>
    %801 = arith.addi %21, %800 : vector<1x512xi32>
    %c0_i32_132 = arith.constant 0 : i32
    %802 = vector.broadcast %c0_i32_132 : i32 to vector<1x512xi32>
    %803 = arith.cmpi sge, %801, %802 : vector<1x512xi32>
    %c-2_i32_133 = arith.constant -2 : i32
    %804 = vector.broadcast %c-2_i32_133 : i32 to vector<1x512xi32>
    %805 = arith.addi %21, %804 : vector<1x512xi32>
    %c16_i32_134 = arith.constant 16 : i32
    %806 = vector.broadcast %c16_i32_134 : i32 to vector<1x512xi32>
    %807 = arith.cmpi slt, %805, %806 : vector<1x512xi32>
    %808 = arith.andi %803, %807 : vector<1x512xi1>
    %cst_135 = arith.constant 0.000000e+00 : f32
    %809 = vector.shape_cast %808 : vector<1x512xi1> to vector<1x512xi1>
    %810 = vector.broadcast %809 : vector<1x512xi1> to vector<2x512xi1>
    %811 = vector.broadcast %cst_135 : f32 to vector<2x512xf32>
    %812 = arith.select %810, %799, %811 : vector<2x512xi1>, vector<2x512xf32>
    %813 = vector.broadcast %798 : vector<2x1xf32> to vector<2x512xf32>
    %814 = arith.mulf %813, %812 : vector<2x512xf32>
    %815 = arith.addf %779, %814 : vector<2x512xf32>
    %816 = vector.extract_strided_slice %3 {offsets = [0, 3], sizes = [2, 1], strides = [1, 1]} : vector<2x9xf32> to vector<2x1xf32>
    %c16_i32_136 = arith.constant 16 : i32
    %817 = tpu.dynamic_rotate %700 by %c16_i32_136 dim 1 : vector<2x512xf32>, i32 -> vector<2x512xf32>
    %c-16_i32_137 = arith.constant -16 : i32
    %818 = vector.broadcast %c-16_i32_137 : i32 to vector<1x512xi32>
    %819 = arith.addi %37, %818 : vector<1x512xi32>
    %c0_i32_138 = arith.constant 0 : i32
    %820 = vector.broadcast %c0_i32_138 : i32 to vector<1x512xi32>
    %821 = arith.cmpi sge, %819, %820 : vector<1x512xi32>
    %c-16_i32_139 = arith.constant -16 : i32
    %822 = vector.broadcast %c-16_i32_139 : i32 to vector<1x512xi32>
    %823 = arith.addi %37, %822 : vector<1x512xi32>
    %c256_i32_140 = arith.constant 256 : i32
    %824 = vector.broadcast %c256_i32_140 : i32 to vector<1x512xi32>
    %825 = arith.cmpi slt, %823, %824 : vector<1x512xi32>
    %826 = arith.andi %821, %825 : vector<1x512xi1>
    %cst_141 = arith.constant 0.000000e+00 : f32
    %827 = vector.shape_cast %826 : vector<1x512xi1> to vector<1x512xi1>
    %828 = vector.broadcast %827 : vector<1x512xi1> to vector<2x512xi1>
    %829 = vector.broadcast %cst_141 : f32 to vector<2x512xf32>
    %830 = arith.select %828, %817, %829 : vector<2x512xi1>, vector<2x512xf32>
    %831 = vector.broadcast %816 : vector<2x1xf32> to vector<2x512xf32>
    %832 = arith.mulf %831, %830 : vector<2x512xf32>
    %833 = arith.addf %797, %832 : vector<2x512xf32>
    %834 = vector.extract_strided_slice %4 {offsets = [0, 3], sizes = [2, 1], strides = [1, 1]} : vector<2x9xf32> to vector<2x1xf32>
    %c1_i32_142 = arith.constant 1 : i32
    %835 = tpu.dynamic_rotate %705 by %c1_i32_142 dim 1 : vector<2x512xf32>, i32 -> vector<2x512xf32>
    %c-1_i32_143 = arith.constant -1 : i32
    %836 = vector.broadcast %c-1_i32_143 : i32 to vector<1x512xi32>
    %837 = arith.addi %21, %836 : vector<1x512xi32>
    %c0_i32_144 = arith.constant 0 : i32
    %838 = vector.broadcast %c0_i32_144 : i32 to vector<1x512xi32>
    %839 = arith.cmpi sge, %837, %838 : vector<1x512xi32>
    %c-1_i32_145 = arith.constant -1 : i32
    %840 = vector.broadcast %c-1_i32_145 : i32 to vector<1x512xi32>
    %841 = arith.addi %21, %840 : vector<1x512xi32>
    %c16_i32_146 = arith.constant 16 : i32
    %842 = vector.broadcast %c16_i32_146 : i32 to vector<1x512xi32>
    %843 = arith.cmpi slt, %841, %842 : vector<1x512xi32>
    %844 = arith.andi %839, %843 : vector<1x512xi1>
    %cst_147 = arith.constant 0.000000e+00 : f32
    %845 = vector.shape_cast %844 : vector<1x512xi1> to vector<1x512xi1>
    %846 = vector.broadcast %845 : vector<1x512xi1> to vector<2x512xi1>
    %847 = vector.broadcast %cst_147 : f32 to vector<2x512xf32>
    %848 = arith.select %846, %835, %847 : vector<2x512xi1>, vector<2x512xf32>
    %849 = vector.broadcast %834 : vector<2x1xf32> to vector<2x512xf32>
    %850 = arith.mulf %849, %848 : vector<2x512xf32>
    %851 = arith.addf %815, %850 : vector<2x512xf32>
    %852 = vector.extract_strided_slice %3 {offsets = [0, 4], sizes = [2, 1], strides = [1, 1]} : vector<2x9xf32> to vector<2x1xf32>
    %853 = vector.broadcast %852 : vector<2x1xf32> to vector<2x512xf32>
    %854 = arith.mulf %853, %700 : vector<2x512xf32>
    %855 = arith.addf %833, %854 : vector<2x512xf32>
    %856 = vector.extract_strided_slice %4 {offsets = [0, 4], sizes = [2, 1], strides = [1, 1]} : vector<2x9xf32> to vector<2x1xf32>
    %857 = vector.broadcast %856 : vector<2x1xf32> to vector<2x512xf32>
    %858 = arith.mulf %857, %705 : vector<2x512xf32>
    %859 = arith.addf %851, %858 : vector<2x512xf32>
    %860 = vector.extract_strided_slice %3 {offsets = [0, 5], sizes = [2, 1], strides = [1, 1]} : vector<2x9xf32> to vector<2x1xf32>
    %c496_i32_148 = arith.constant 496 : i32
    %861 = tpu.dynamic_rotate %700 by %c496_i32_148 dim 1 : vector<2x512xf32>, i32 -> vector<2x512xf32>
    %c16_i32_149 = arith.constant 16 : i32
    %862 = vector.broadcast %c16_i32_149 : i32 to vector<1x512xi32>
    %863 = arith.addi %37, %862 : vector<1x512xi32>
    %c0_i32_150 = arith.constant 0 : i32
    %864 = vector.broadcast %c0_i32_150 : i32 to vector<1x512xi32>
    %865 = arith.cmpi sge, %863, %864 : vector<1x512xi32>
    %c16_i32_151 = arith.constant 16 : i32
    %866 = vector.broadcast %c16_i32_151 : i32 to vector<1x512xi32>
    %867 = arith.addi %37, %866 : vector<1x512xi32>
    %c256_i32_152 = arith.constant 256 : i32
    %868 = vector.broadcast %c256_i32_152 : i32 to vector<1x512xi32>
    %869 = arith.cmpi slt, %867, %868 : vector<1x512xi32>
    %870 = arith.andi %865, %869 : vector<1x512xi1>
    %cst_153 = arith.constant 0.000000e+00 : f32
    %871 = vector.shape_cast %870 : vector<1x512xi1> to vector<1x512xi1>
    %872 = vector.broadcast %871 : vector<1x512xi1> to vector<2x512xi1>
    %873 = vector.broadcast %cst_153 : f32 to vector<2x512xf32>
    %874 = arith.select %872, %861, %873 : vector<2x512xi1>, vector<2x512xf32>
    %875 = vector.broadcast %860 : vector<2x1xf32> to vector<2x512xf32>
    %876 = arith.mulf %875, %874 : vector<2x512xf32>
    %877 = arith.addf %855, %876 : vector<2x512xf32>
    %878 = vector.extract_strided_slice %4 {offsets = [0, 5], sizes = [2, 1], strides = [1, 1]} : vector<2x9xf32> to vector<2x1xf32>
    %c511_i32_154 = arith.constant 511 : i32
    %879 = tpu.dynamic_rotate %705 by %c511_i32_154 dim 1 : vector<2x512xf32>, i32 -> vector<2x512xf32>
    %c1_i32_155 = arith.constant 1 : i32
    %880 = vector.broadcast %c1_i32_155 : i32 to vector<1x512xi32>
    %881 = arith.addi %21, %880 : vector<1x512xi32>
    %c0_i32_156 = arith.constant 0 : i32
    %882 = vector.broadcast %c0_i32_156 : i32 to vector<1x512xi32>
    %883 = arith.cmpi sge, %881, %882 : vector<1x512xi32>
    %c1_i32_157 = arith.constant 1 : i32
    %884 = vector.broadcast %c1_i32_157 : i32 to vector<1x512xi32>
    %885 = arith.addi %21, %884 : vector<1x512xi32>
    %c16_i32_158 = arith.constant 16 : i32
    %886 = vector.broadcast %c16_i32_158 : i32 to vector<1x512xi32>
    %887 = arith.cmpi slt, %885, %886 : vector<1x512xi32>
    %888 = arith.andi %883, %887 : vector<1x512xi1>
    %cst_159 = arith.constant 0.000000e+00 : f32
    %889 = vector.shape_cast %888 : vector<1x512xi1> to vector<1x512xi1>
    %890 = vector.broadcast %889 : vector<1x512xi1> to vector<2x512xi1>
    %891 = vector.broadcast %cst_159 : f32 to vector<2x512xf32>
    %892 = arith.select %890, %879, %891 : vector<2x512xi1>, vector<2x512xf32>
    %893 = vector.broadcast %878 : vector<2x1xf32> to vector<2x512xf32>
    %894 = arith.mulf %893, %892 : vector<2x512xf32>
    %895 = arith.addf %859, %894 : vector<2x512xf32>
    %896 = vector.extract_strided_slice %3 {offsets = [0, 6], sizes = [2, 1], strides = [1, 1]} : vector<2x9xf32> to vector<2x1xf32>
    %c480_i32_160 = arith.constant 480 : i32
    %897 = tpu.dynamic_rotate %700 by %c480_i32_160 dim 1 : vector<2x512xf32>, i32 -> vector<2x512xf32>
    %c32_i32_161 = arith.constant 32 : i32
    %898 = vector.broadcast %c32_i32_161 : i32 to vector<1x512xi32>
    %899 = arith.addi %37, %898 : vector<1x512xi32>
    %c0_i32_162 = arith.constant 0 : i32
    %900 = vector.broadcast %c0_i32_162 : i32 to vector<1x512xi32>
    %901 = arith.cmpi sge, %899, %900 : vector<1x512xi32>
    %c32_i32_163 = arith.constant 32 : i32
    %902 = vector.broadcast %c32_i32_163 : i32 to vector<1x512xi32>
    %903 = arith.addi %37, %902 : vector<1x512xi32>
    %c256_i32_164 = arith.constant 256 : i32
    %904 = vector.broadcast %c256_i32_164 : i32 to vector<1x512xi32>
    %905 = arith.cmpi slt, %903, %904 : vector<1x512xi32>
    %906 = arith.andi %901, %905 : vector<1x512xi1>
    %cst_165 = arith.constant 0.000000e+00 : f32
    %907 = vector.shape_cast %906 : vector<1x512xi1> to vector<1x512xi1>
    %908 = vector.broadcast %907 : vector<1x512xi1> to vector<2x512xi1>
    %909 = vector.broadcast %cst_165 : f32 to vector<2x512xf32>
    %910 = arith.select %908, %897, %909 : vector<2x512xi1>, vector<2x512xf32>
    %911 = vector.broadcast %896 : vector<2x1xf32> to vector<2x512xf32>
    %912 = arith.mulf %911, %910 : vector<2x512xf32>
    %913 = arith.addf %877, %912 : vector<2x512xf32>
    %914 = vector.extract_strided_slice %4 {offsets = [0, 6], sizes = [2, 1], strides = [1, 1]} : vector<2x9xf32> to vector<2x1xf32>
    %c510_i32_166 = arith.constant 510 : i32
    %915 = tpu.dynamic_rotate %705 by %c510_i32_166 dim 1 : vector<2x512xf32>, i32 -> vector<2x512xf32>
    %c2_i32_167 = arith.constant 2 : i32
    %916 = vector.broadcast %c2_i32_167 : i32 to vector<1x512xi32>
    %917 = arith.addi %21, %916 : vector<1x512xi32>
    %c0_i32_168 = arith.constant 0 : i32
    %918 = vector.broadcast %c0_i32_168 : i32 to vector<1x512xi32>
    %919 = arith.cmpi sge, %917, %918 : vector<1x512xi32>
    %c2_i32_169 = arith.constant 2 : i32
    %920 = vector.broadcast %c2_i32_169 : i32 to vector<1x512xi32>
    %921 = arith.addi %21, %920 : vector<1x512xi32>
    %c16_i32_170 = arith.constant 16 : i32
    %922 = vector.broadcast %c16_i32_170 : i32 to vector<1x512xi32>
    %923 = arith.cmpi slt, %921, %922 : vector<1x512xi32>
    %924 = arith.andi %919, %923 : vector<1x512xi1>
    %cst_171 = arith.constant 0.000000e+00 : f32
    %925 = vector.shape_cast %924 : vector<1x512xi1> to vector<1x512xi1>
    %926 = vector.broadcast %925 : vector<1x512xi1> to vector<2x512xi1>
    %927 = vector.broadcast %cst_171 : f32 to vector<2x512xf32>
    %928 = arith.select %926, %915, %927 : vector<2x512xi1>, vector<2x512xf32>
    %929 = vector.broadcast %914 : vector<2x1xf32> to vector<2x512xf32>
    %930 = arith.mulf %929, %928 : vector<2x512xf32>
    %931 = arith.addf %895, %930 : vector<2x512xf32>
    %932 = vector.extract_strided_slice %3 {offsets = [0, 7], sizes = [2, 1], strides = [1, 1]} : vector<2x9xf32> to vector<2x1xf32>
    %c464_i32_172 = arith.constant 464 : i32
    %933 = tpu.dynamic_rotate %700 by %c464_i32_172 dim 1 : vector<2x512xf32>, i32 -> vector<2x512xf32>
    %c48_i32_173 = arith.constant 48 : i32
    %934 = vector.broadcast %c48_i32_173 : i32 to vector<1x512xi32>
    %935 = arith.addi %37, %934 : vector<1x512xi32>
    %c0_i32_174 = arith.constant 0 : i32
    %936 = vector.broadcast %c0_i32_174 : i32 to vector<1x512xi32>
    %937 = arith.cmpi sge, %935, %936 : vector<1x512xi32>
    %c48_i32_175 = arith.constant 48 : i32
    %938 = vector.broadcast %c48_i32_175 : i32 to vector<1x512xi32>
    %939 = arith.addi %37, %938 : vector<1x512xi32>
    %c256_i32_176 = arith.constant 256 : i32
    %940 = vector.broadcast %c256_i32_176 : i32 to vector<1x512xi32>
    %941 = arith.cmpi slt, %939, %940 : vector<1x512xi32>
    %942 = arith.andi %937, %941 : vector<1x512xi1>
    %cst_177 = arith.constant 0.000000e+00 : f32
    %943 = vector.shape_cast %942 : vector<1x512xi1> to vector<1x512xi1>
    %944 = vector.broadcast %943 : vector<1x512xi1> to vector<2x512xi1>
    %945 = vector.broadcast %cst_177 : f32 to vector<2x512xf32>
    %946 = arith.select %944, %933, %945 : vector<2x512xi1>, vector<2x512xf32>
    %947 = vector.broadcast %932 : vector<2x1xf32> to vector<2x512xf32>
    %948 = arith.mulf %947, %946 : vector<2x512xf32>
    %949 = arith.addf %913, %948 : vector<2x512xf32>
    %950 = vector.extract_strided_slice %4 {offsets = [0, 7], sizes = [2, 1], strides = [1, 1]} : vector<2x9xf32> to vector<2x1xf32>
    %c509_i32_178 = arith.constant 509 : i32
    %951 = tpu.dynamic_rotate %705 by %c509_i32_178 dim 1 : vector<2x512xf32>, i32 -> vector<2x512xf32>
    %c3_i32_179 = arith.constant 3 : i32
    %952 = vector.broadcast %c3_i32_179 : i32 to vector<1x512xi32>
    %953 = arith.addi %21, %952 : vector<1x512xi32>
    %c0_i32_180 = arith.constant 0 : i32
    %954 = vector.broadcast %c0_i32_180 : i32 to vector<1x512xi32>
    %955 = arith.cmpi sge, %953, %954 : vector<1x512xi32>
    %c3_i32_181 = arith.constant 3 : i32
    %956 = vector.broadcast %c3_i32_181 : i32 to vector<1x512xi32>
    %957 = arith.addi %21, %956 : vector<1x512xi32>
    %c16_i32_182 = arith.constant 16 : i32
    %958 = vector.broadcast %c16_i32_182 : i32 to vector<1x512xi32>
    %959 = arith.cmpi slt, %957, %958 : vector<1x512xi32>
    %960 = arith.andi %955, %959 : vector<1x512xi1>
    %cst_183 = arith.constant 0.000000e+00 : f32
    %961 = vector.shape_cast %960 : vector<1x512xi1> to vector<1x512xi1>
    %962 = vector.broadcast %961 : vector<1x512xi1> to vector<2x512xi1>
    %963 = vector.broadcast %cst_183 : f32 to vector<2x512xf32>
    %964 = arith.select %962, %951, %963 : vector<2x512xi1>, vector<2x512xf32>
    %965 = vector.broadcast %950 : vector<2x1xf32> to vector<2x512xf32>
    %966 = arith.mulf %965, %964 : vector<2x512xf32>
    %967 = arith.addf %931, %966 : vector<2x512xf32>
    %968 = vector.extract_strided_slice %3 {offsets = [0, 8], sizes = [2, 1], strides = [1, 1]} : vector<2x9xf32> to vector<2x1xf32>
    %c448_i32_184 = arith.constant 448 : i32
    %969 = tpu.dynamic_rotate %700 by %c448_i32_184 dim 1 : vector<2x512xf32>, i32 -> vector<2x512xf32>
    %c64_i32_185 = arith.constant 64 : i32
    %970 = vector.broadcast %c64_i32_185 : i32 to vector<1x512xi32>
    %971 = arith.addi %37, %970 : vector<1x512xi32>
    %c0_i32_186 = arith.constant 0 : i32
    %972 = vector.broadcast %c0_i32_186 : i32 to vector<1x512xi32>
    %973 = arith.cmpi sge, %971, %972 : vector<1x512xi32>
    %c64_i32_187 = arith.constant 64 : i32
    %974 = vector.broadcast %c64_i32_187 : i32 to vector<1x512xi32>
    %975 = arith.addi %37, %974 : vector<1x512xi32>
    %c256_i32_188 = arith.constant 256 : i32
    %976 = vector.broadcast %c256_i32_188 : i32 to vector<1x512xi32>
    %977 = arith.cmpi slt, %975, %976 : vector<1x512xi32>
    %978 = arith.andi %973, %977 : vector<1x512xi1>
    %cst_189 = arith.constant 0.000000e+00 : f32
    %979 = vector.shape_cast %978 : vector<1x512xi1> to vector<1x512xi1>
    %980 = vector.broadcast %979 : vector<1x512xi1> to vector<2x512xi1>
    %981 = vector.broadcast %cst_189 : f32 to vector<2x512xf32>
    %982 = arith.select %980, %969, %981 : vector<2x512xi1>, vector<2x512xf32>
    %983 = vector.broadcast %968 : vector<2x1xf32> to vector<2x512xf32>
    %984 = arith.mulf %983, %982 : vector<2x512xf32>
    %985 = arith.addf %949, %984 : vector<2x512xf32>
    %986 = vector.extract_strided_slice %4 {offsets = [0, 8], sizes = [2, 1], strides = [1, 1]} : vector<2x9xf32> to vector<2x1xf32>
    %c508_i32_190 = arith.constant 508 : i32
    %987 = tpu.dynamic_rotate %705 by %c508_i32_190 dim 1 : vector<2x512xf32>, i32 -> vector<2x512xf32>
    %c4_i32_191 = arith.constant 4 : i32
    %988 = vector.broadcast %c4_i32_191 : i32 to vector<1x512xi32>
    %989 = arith.addi %21, %988 : vector<1x512xi32>
    %c0_i32_192 = arith.constant 0 : i32
    %990 = vector.broadcast %c0_i32_192 : i32 to vector<1x512xi32>
    %991 = arith.cmpi sge, %989, %990 : vector<1x512xi32>
    %c4_i32_193 = arith.constant 4 : i32
    %992 = vector.broadcast %c4_i32_193 : i32 to vector<1x512xi32>
    %993 = arith.addi %21, %992 : vector<1x512xi32>
    %c16_i32_194 = arith.constant 16 : i32
    %994 = vector.broadcast %c16_i32_194 : i32 to vector<1x512xi32>
    %995 = arith.cmpi slt, %993, %994 : vector<1x512xi32>
    %996 = arith.andi %991, %995 : vector<1x512xi1>
    %cst_195 = arith.constant 0.000000e+00 : f32
    %997 = vector.shape_cast %996 : vector<1x512xi1> to vector<1x512xi1>
    %998 = vector.broadcast %997 : vector<1x512xi1> to vector<2x512xi1>
    %999 = vector.broadcast %cst_195 : f32 to vector<2x512xf32>
    %1000 = arith.select %998, %987, %999 : vector<2x512xi1>, vector<2x512xf32>
    %1001 = vector.broadcast %986 : vector<2x1xf32> to vector<2x512xf32>
    %1002 = arith.mulf %1001, %1000 : vector<2x512xf32>
    %1003 = arith.addf %967, %1002 : vector<2x512xf32>
    %cst_196 = arith.constant dense<0.000000e+00> : vector<512xf32>
    %1004 = vector.multi_reduction <add>, %985, %cst_196 [0] : vector<2x512xf32> to vector<512xf32>
    %1005 = vector.shape_cast %1004 : vector<512xf32> to vector<1x512xf32>
    %cst_197 = arith.constant dense<0.000000e+00> : vector<512xf32>
    %1006 = vector.multi_reduction <add>, %1003, %cst_197 [0] : vector<2x512xf32> to vector<512xf32>
    %1007 = vector.shape_cast %1006 : vector<512xf32> to vector<1x512xf32>
    %c0_198 = arith.constant 0 : index
    %c0_199 = arith.constant 0 : index
    %1008 = vector.load %arg8[%c0_198, %c0_199] : memref<1x2xf32, #tpu.memory_space<vmem>>, vector<1x1xf32>
    %1009 = vector.broadcast %1008 : vector<1x1xf32> to vector<1x512xf32>
    %1010 = arith.addf %1005, %1009 : vector<1x512xf32>
    %cst_200 = arith.constant 0.000000e+00 : f32
    %1011 = vector.broadcast %cst_200 : f32 to vector<1x512xf32>
    %1012 = arith.maximumf %1010, %1011 : vector<1x512xf32>
    %c0_201 = arith.constant 0 : index
    %c1 = arith.constant 1 : index
    %1013 = vector.load %arg8[%c0_201, %c1] : memref<1x2xf32, #tpu.memory_space<vmem>>, vector<1x1xf32>
    %1014 = vector.broadcast %1013 : vector<1x1xf32> to vector<1x512xf32>
    %1015 = arith.addf %1007, %1014 : vector<1x512xf32>
    %cst_202 = arith.constant 0.000000e+00 : f32
    %1016 = vector.broadcast %cst_202 : f32 to vector<1x512xf32>
    %1017 = arith.maximumf %1015, %1016 : vector<1x512xf32>
    %1018 = arith.addf %1012, %1017 : vector<1x512xf32>
    %1019 = arith.negf %1018 : vector<1x512xf32>
    %1020 = math.exp %1019 : vector<1x512xf32>
    %cst_203 = arith.constant 1.000000e+00 : f32
    %1021 = vector.broadcast %cst_203 : f32 to vector<1x512xf32>
    %1022 = arith.addf %1021, %1020 : vector<1x512xf32>
    %1023 = arith.divf %1021, %1022 : vector<1x512xf32>
    %c0_204 = arith.constant 0 : index
    %c0_205 = arith.constant 0 : index
    %1024 = vector.load %arg9[%c0_204, %c0_205] : memref<1x512xf32, #tpu.memory_space<vmem>>, vector<1x512xf32>
    tpu.vector_store %arg9[%c0_204, %c0_205], %1023 {strides = array<i32>} : memref<1x512xf32, #tpu.memory_space<vmem>>, vector<1x512xf32>,
    return
  }
  func.func @transform_0(%arg0: i32) -> (i32, i32) {
    %c0_i32 = arith.constant 0 : i32
    %c0_i32_0 = arith.constant 0 : i32
    return %c0_i32, %arg0 : i32, i32
  }
  func.func @transform_1(%arg0: i32) -> (i32, i32) {
    %c0_i32 = arith.constant 0 : i32
    %c0_i32_0 = arith.constant 0 : i32
    %c0_i32_1 = arith.constant 0 : i32
    return %c0_i32, %c0_i32_0 : i32, i32
  }
  func.func @transform_2(%arg0: i32) -> (i32, i32) {
    %c0_i32 = arith.constant 0 : i32
    %c0_i32_0 = arith.constant 0 : i32
    %c0_i32_1 = arith.constant 0 : i32
    return %c0_i32, %c0_i32_0 : i32, i32
  }
  func.func @transform_3(%arg0: i32) -> (i32, i32) {
    %c0_i32 = arith.constant 0 : i32
    %c0_i32_0 = arith.constant 0 : i32
    %c0_i32_1 = arith.constant 0 : i32
    return %c0_i32, %c0_i32_0 : i32, i32
  }
  func.func @transform_4(%arg0: i32) -> (i32, i32) {
    %c0_i32 = arith.constant 0 : i32
    %c0_i32_0 = arith.constant 0 : i32
    %c0_i32_1 = arith.constant 0 : i32
    return %c0_i32, %c0_i32_0 : i32, i32
  }
  func.func @transform_5(%arg0: i32) -> (i32, i32) {
    %c0_i32 = arith.constant 0 : i32
    %c0_i32_0 = arith.constant 0 : i32
    %c0_i32_1 = arith.constant 0 : i32
    return %c0_i32, %c0_i32_0 : i32, i32
  }
  func.func @transform_6(%arg0: i32) -> (i32, i32) {
    %c0_i32 = arith.constant 0 : i32
    %c0_i32_0 = arith.constant 0 : i32
    %c0_i32_1 = arith.constant 0 : i32
    return %c0_i32, %c0_i32_0 : i32, i32
  }
  func.func @transform_7(%arg0: i32) -> (i32, i32) {
    %c0_i32 = arith.constant 0 : i32
    %c0_i32_0 = arith.constant 0 : i32
    %c0_i32_1 = arith.constant 0 : i32
    return %c0_i32, %c0_i32_0 : i32, i32
  }
  func.func @transform_8(%arg0: i32) -> (i32, i32) {
    %c0_i32 = arith.constant 0 : i32
    %c0_i32_0 = arith.constant 0 : i32
    return %c0_i32, %arg0 : i32, i32
  }
}

</mosaic_0001>

<llo_original>
// kernel: spatial_attention_pallas.1
$region0: #{spatial_attention_pallas.1}
  #allocation0 [shape = 'u32[]', space=smem, size = 0x4, offset = 0x4, fixed_abs, tag = 'smem constant byte address 0x4 - core index']
  #allocation1 [shape = 'u32[144,128]{1,0:T(1,128)}', space=vmem, size = 0x12000, scoped, tag = 'internal scratch']
  %s0 = inlined_call_operand.vmem [shape: f32[4,512], index: 0, kind: input, shape index: {}]
  %s1 = inlined_call_operand.vmem [shape: f32[2,36], index: 1, kind: input, shape index: {}]
  %s2 = inlined_call_operand.vmem [shape: f32[2,36], index: 2, kind: input, shape index: {}]
  %s3 = inlined_call_operand.vmem [shape: f32[2,9], index: 3, kind: input, shape index: {}]
  %s4 = inlined_call_operand.vmem [shape: f32[2,9], index: 4, kind: input, shape index: {}]
  %s5 = inlined_call_operand.vmem [shape: f32[2,1], index: 5, kind: input, shape index: {}]
  %s6 = inlined_call_operand.vmem [shape: f32[2,1], index: 6, kind: input, shape index: {}]
  %s7 = inlined_call_operand.vmem [shape: f32[1,2], index: 7, kind: input, shape index: {}]
  %s8 = inlined_call_operand.vmem [shape: f32[1,512], index: 8, kind: output, shape index: {}]
  %s9 = sld [smem:[#allocation0]]
  $region42: #{spatial_attention_pallas.1} parent=0
    _
  %s11 = ssub.s32 1, %s9
  %s12 = scalar_select 0, %s11, %s9
  // Predicated region
  $region2: #{spatial_attention_pallas.1} parent=0 // pred_check
    _
  $region3: #{spatial_attention_pallas.1} parent=0 // pred_check_branch
    %14 = sbr.rel (0) target = $region5
  $region4: #{spatial_attention_pallas.1} parent=0 // pred_region
    _
  $region5: #{spatial_attention_pallas.1} parent=0 // pred_fallthru
    _
  // Predicated region
  $region6: #{spatial_attention_pallas.1} parent=0 // pred_check
    _
  $region7: #{spatial_attention_pallas.1} parent=0 // pred_check_branch
    %16 = sbr.rel (0) target = $region9
  $region8: #{spatial_attention_pallas.1} parent=0 // pred_region
    _
  $region9: #{spatial_attention_pallas.1} parent=0 // pred_fallthru
    _
  // Predicated region
  $region10: #{spatial_attention_pallas.1} parent=0 // pred_check
    _
  $region11: #{spatial_attention_pallas.1} parent=0 // pred_check_branch
    %18 = sbr.rel (0) target = $region13
  $region12: #{spatial_attention_pallas.1} parent=0 // pred_region
    _
  $region13: #{spatial_attention_pallas.1} parent=0 // pred_fallthru
    _
  // Predicated region
  $region14: #{spatial_attention_pallas.1} parent=0 // pred_check
    _
  $region15: #{spatial_attention_pallas.1} parent=0 // pred_check_branch
    %20 = sbr.rel (0) target = $region17
  $region16: #{spatial_attention_pallas.1} parent=0 // pred_region
    _
  $region17: #{spatial_attention_pallas.1} parent=0 // pred_fallthru
    _
  // Predicated region
  $region18: #{spatial_attention_pallas.1} parent=0 // pred_check
    _
  $region19: #{spatial_attention_pallas.1} parent=0 // pred_check_branch
    %22 = sbr.rel (0) target = $region21
  $region20: #{spatial_attention_pallas.1} parent=0 // pred_region
    _
  $region21: #{spatial_attention_pallas.1} parent=0 // pred_fallthru
    _
  // Predicated region
  $region22: #{spatial_attention_pallas.1} parent=0 // pred_check
    _
  $region23: #{spatial_attention_pallas.1} parent=0 // pred_check_branch
    %24 = sbr.rel (0) target = $region25
  $region24: #{spatial_attention_pallas.1} parent=0 // pred_region
    _
  $region25: #{spatial_attention_pallas.1} parent=0 // pred_fallthru
    _
  // Predicated region
  $region26: #{spatial_attention_pallas.1} parent=0 // pred_check
    _
  $region27: #{spatial_attention_pallas.1} parent=0 // pred_check_branch
    %26 = sbr.rel (0) target = $region29
  $region28: #{spatial_attention_pallas.1} parent=0 // pred_region
    _
  $region29: #{spatial_attention_pallas.1} parent=0 // pred_fallthru
    _
  // Predicated region
  $region30: #{spatial_attention_pallas.1} parent=0 // pred_check
    _
  $region31: #{spatial_attention_pallas.1} parent=0 // pred_check_branch
    %28 = sbr.rel (0) target = $region33
  $region32: #{spatial_attention_pallas.1} parent=0 // pred_region
    _
  $region33: #{spatial_attention_pallas.1} parent=0 // pred_fallthru
    _
  %v29 = vld [vmem:[%s0] sm:$0xff]
  %v30 = vld [vmem:[%s0 + $0x8] sm:$0xff]
  %v31 = vld [vmem:[%s1] sm:$0x3]
  %v32 = vld [vmem:[%s2] sm:$0x3]
  %v33 = vld [vmem:[%s3] sm:$0x3]
  %v34 = vld [vmem:[%s4] sm:$0x3]
  %v35 = vlaneseq
  %v36 = vand.u32 %v35, 127
  %v37 = vadd.s32 %v36, 128
  %v38 = vadd.s32 %v36, 256
  %v39 = vadd.s32 %v36, 384
  %vm40 = vcmp.lt.s32.totalorder %v36, 0
  %v41 = vsub.s32 0, %v36
  %v42 = vsel %vm40, %v41, %v36
  %v43 = vshrl.u32 %v42, 4
  %v44 = vand.u32 %v42, 15
  %v45 = vsub.s32 0, %v44
  %v46 = vsel %vm40, %v45, %v44
  %vm47 = vcmp.lt.s32.totalorder %v37, 0
  %v48 = vsub.s32 0, %v37
  %v49 = vsel %vm47, %v48, %v37
  %v50 = vshrl.u32 %v49, 4
  %v51 = vand.u32 %v49, 15
  %v52 = vsub.s32 0, %v51
  %v53 = vsel %vm47, %v52, %v51
  %vm54 = vcmp.lt.s32.totalorder %v38, 0
  %v55 = vsub.s32 0, %v38
  %v56 = vsel %vm54, %v55, %v38
  %v57 = vshrl.u32 %v56, 4
  %v58 = vand.u32 %v56, 15
  %v59 = vsub.s32 0, %v58
  %v60 = vsel %vm54, %v59, %v58
  %vm61 = vcmp.lt.s32.totalorder %v39, 0
  %v62 = vsub.s32 0, %v39
  %v63 = vsel %vm61, %v62, %v39
  %v64 = vshrl.u32 %v63, 4
  %v65 = vand.u32 %v63, 15
  %v66 = vsub.s32 0, %v65
  %v67 = vsel %vm61, %v66, %v65
  %vm68 = vcmp.ne.s32.totalorder %v46, 0
  %vm69 = vcmp.ne.s32.totalorder %v53, 0
  %vm70 = vcmp.ne.s32.totalorder %v60, 0
  %vm71 = vcmp.ne.s32.totalorder %v67, 0
  %vm72 = vcmp.lt.s32.totalorder %v46, 0
  %vm73 = vcmp.lt.s32.totalorder %v53, 0
  %vm74 = vcmp.lt.s32.totalorder %v60, 0
  %vm75 = vcmp.lt.s32.totalorder %v67, 0
  %vm76 = vmand %vm72, %vm68
  %vm77 = vmand %vm73, %vm69
  %vm78 = vmand %vm74, %vm70
  %vm79 = vmand %vm75, %vm71
  %v80 = vadd.s32 %v46, 16
  %v81 = vadd.s32 %v53, 16
  %v82 = vadd.s32 %v60, 16
  %v83 = vadd.s32 %v67, 16
  %v84 = vsel %vm76, %v80, %v46
  %v85 = vsel %vm77, %v81, %v53
  %v86 = vsel %vm78, %v82, %v60
  %v87 = vsel %vm79, %v83, %v67
  %vm88 = vcmp.lt.s32.totalorder %v36, 0
  %v89 = vsub.s32 0, %v36
  %v90 = vsel %vm88, %v89, %v36
  %v91 = vshrl.u32 %v90, 8
  %v92 = vand.u32 %v90, 255
  %v93 = vsub.s32 0, %v92
  %v94 = vsel %vm88, %v93, %v92
  %vm95 = vcmp.lt.s32.totalorder %v37, 0
  %v96 = vsub.s32 0, %v37
  %v97 = vsel %vm95, %v96, %v37
  %v98 = vshrl.u32 %v97, 8
  %v99 = vand.u32 %v97, 255
  %v100 = vsub.s32 0, %v99
  %v101 = vsel %vm95, %v100, %v99
  %vm102 = vcmp.lt.s32.totalorder %v38, 0
  %v103 = vsub.s32 0, %v38
  %v104 = vsel %vm102, %v103, %v38
  %v105 = vshrl.u32 %v104, 8
  %v106 = vand.u32 %v104, 255
  %v107 = vsub.s32 0, %v106
  %v108 = vsel %vm102, %v107, %v106
  %vm109 = vcmp.lt.s32.totalorder %v39, 0
  %v110 = vsub.s32 0, %v39
  %v111 = vsel %vm109, %v110, %v39
  %v112 = vshrl.u32 %v111, 8
  %v113 = vand.u32 %v111, 255
  %v114 = vsub.s32 0, %v113
  %v115 = vsel %vm109, %v114, %v113
  %vm116 = vcmp.ne.s32.totalorder %v94, 0
  %vm117 = vcmp.ne.s32.totalorder %v101, 0
  %vm118 = vcmp.ne.s32.totalorder %v108, 0
  %vm119 = vcmp.ne.s32.totalorder %v115, 0
  %vm120 = vcmp.lt.s32.totalorder %v94, 0
  %vm121 = vcmp.lt.s32.totalorder %v101, 0
  %vm122 = vcmp.lt.s32.totalorder %v108, 0
  %vm123 = vcmp.lt.s32.totalorder %v115, 0
  %vm124 = vmand %vm120, %vm116
  %vm125 = vmand %vm121, %vm117
  %vm126 = vmand %vm122, %vm118
  %vm127 = vmand %vm123, %vm119
  %v128 = vadd.s32 %v94, 256
  %v129 = vadd.s32 %v101, 256
  %v130 = vadd.s32 %v108, 256
  %v131 = vadd.s32 %v115, 256
  %v132 = vsel %vm124, %v128, %v94
  %v133 = vsel %vm125, %v129, %v101
  %v134 = vsel %vm126, %v130, %v108
  %v135 = vsel %vm127, %v131, %v115
  %v138 = vcombine.high %v29, %v29
  %v139 = vcombine.high %v30, %v30
  %142 = vrot.lane.b32.xlu0 %v29, 4
  %v143 = vpop.permute.xlu0 %142
  %144 = vrot.lane.b32.xlu0 %v138, 4
  %v145 = vpop.permute.xlu0 %144
  %146 = vrot.lane.b32.xlu0 %v30, 4
  %v147 = vpop.permute.xlu0 %146
  %148 = vrot.lane.b32.xlu0 %v139, 4
  %v149 = vpop.permute.xlu0 %148
  %vm150 = vcmp.lt.s32.totalorder %v36, 4
  %v151 = vsel %vm150, %v147, %v149
  %v152 = vsel %vm150, %v145, %v147
  %v153 = vsel %vm150, %v143, %v145
  %v154 = vsel %vm150, %v149, %v143
  %v155 = vadd.s32 %v84, 4294967292
  %v156 = vadd.s32 %v85, 4294967292
  %v157 = vadd.s32 %v86, 4294967292
  %v158 = vadd.s32 %v87, 4294967292
  %vm159 = vcmp.ge.s32.totalorder %v155, 0
  %vm160 = vcmp.ge.s32.totalorder %v156, 0
  %vm161 = vcmp.ge.s32.totalorder %v157, 0
  %vm162 = vcmp.ge.s32.totalorder %v158, 0
  %vm163 = vcmp.lt.s32.totalorder %v155, 16
  %vm164 = vcmp.lt.s32.totalorder %v156, 16
  %vm165 = vcmp.lt.s32.totalorder %v157, 16
  %vm166 = vcmp.lt.s32.totalorder %v158, 16
  %vm167 = vmand %vm159, %vm163
  %vm168 = vmand %vm160, %vm164
  %vm169 = vmand %vm161, %vm165
  %vm170 = vmand %vm162, %vm166
  %v171 = vsel %vm167, 1, 0
  %v172 = vsel %vm168, 1, 0
  %v173 = vsel %vm169, 1, 0
  %v174 = vsel %vm170, 1, 0
  %vm175 = vcmp.eq.s32.totalorder %v171, 1
  %vm176 = vcmp.eq.s32.totalorder %v172, 1
  %vm177 = vcmp.eq.s32.totalorder %v173, 1
  %vm178 = vcmp.eq.s32.totalorder %v174, 1
  %v179 = vsel %vm175, %v154, 0.0
  %v180 = vsel %vm176, %v153, 0.0
  %v181 = vsel %vm177, %v152, 0.0
  %v182 = vsel %vm178, %v151, 0.0
  %183 = vrot.lane.b32.xlu0 %v29, 64
  %v184 = vpop.permute.xlu0 %183
  %185 = vrot.lane.b32.xlu0 %v138, 64
  %v186 = vpop.permute.xlu0 %185
  %187 = vrot.lane.b32.xlu0 %v30, 64
  %v188 = vpop.permute.xlu0 %187
  %189 = vrot.lane.b32.xlu0 %v139, 64
  %v190 = vpop.permute.xlu0 %189
  %vm191 = vcmp.lt.s32.totalorder %v36, 64
  %v192 = vsel %vm191, %v188, %v190
  %v193 = vsel %vm191, %v186, %v188
  %v194 = vsel %vm191, %v184, %v186
  %v195 = vsel %vm191, %v190, %v184
  %v196 = vadd.s32 %v132, 4294967232
  %v197 = vadd.s32 %v133, 4294967232
  %v198 = vadd.s32 %v134, 4294967232
  %v199 = vadd.s32 %v135, 4294967232
  %vm200 = vcmp.ge.s32.totalorder %v196, 0
  %vm201 = vcmp.ge.s32.totalorder %v197, 0
  %vm202 = vcmp.ge.s32.totalorder %v198, 0
  %vm203 = vcmp.ge.s32.totalorder %v199, 0
  %vm204 = vcmp.lt.s32.totalorder %v196, 256
  %vm205 = vcmp.lt.s32.totalorder %v197, 256
  %vm206 = vcmp.lt.s32.totalorder %v198, 256
  %vm207 = vcmp.lt.s32.totalorder %v199, 256
  %vm208 = vmand %vm200, %vm204
  %vm209 = vmand %vm201, %vm205
  %vm210 = vmand %vm202, %vm206
  %vm211 = vmand %vm203, %vm207
  %v212 = vsel %vm208, 1, 0
  %v213 = vsel %vm209, 1, 0
  %v214 = vsel %vm210, 1, 0
  %v215 = vsel %vm211, 1, 0
  %vm216 = vcmp.eq.s32.totalorder %v212, 1
  %vm217 = vcmp.eq.s32.totalorder %v213, 1
  %vm218 = vcmp.eq.s32.totalorder %v214, 1
  %vm219 = vcmp.eq.s32.totalorder %v215, 1
  %v220 = vsel %vm216, %v195, 0.0
  %v221 = vsel %vm217, %v194, 0.0
  %v222 = vsel %vm218, %v193, 0.0
  %v223 = vsel %vm219, %v192, 0.0
  %225 = vset.pattern.permute.xlu0 0
  %226 = vperm.xlu0 %225, %v31
  %v227 = vpop.permute.xlu0 %226
  %v229 = vlaneseq
  %v230 = vshrl.u32 %v229, 7
  %v231 = vsub.s32 0, %v230
  %v232 = vrot.slane %v179, %v231
  %v233 = vlaneseq
  %v234 = vshrl.u32 %v233, 7
  %v235 = vsub.s32 0, %v234
  %v236 = vrot.slane %v180, %v235
  %v237 = vlaneseq
  %v238 = vshrl.u32 %v237, 7
  %v239 = vsub.s32 0, %v238
  %v240 = vrot.slane %v181, %v239
  %v241 = vlaneseq
  %v242 = vshrl.u32 %v241, 7
  %v243 = vsub.s32 0, %v242
  %v244 = vrot.slane %v182, %v243
  %v245 = vmul.f32 %v227, %v232
  %v246 = vmul.f32 %v227, %v236
  %v247 = vmul.f32 %v227, %v240
  %v248 = vmul.f32 %v227, %v244
  %v249 = vadd.f32 %v245, 0.0
  %v250 = vadd.f32 %v246, 0.0
  %v251 = vadd.f32 %v247, 0.0
  %v252 = vadd.f32 %v248, 0.0
  %254 = vset.pattern.permute.xlu0 0
  %255 = vperm.xlu0 %254, %v32
  %v256 = vpop.permute.xlu0 %255
  %v258 = vlaneseq
  %v259 = vshrl.u32 %v258, 7
  %v260 = vsub.s32 0, %v259
  %v261 = vrot.slane %v220, %v260
  %v262 = vlaneseq
  %v263 = vshrl.u32 %v262, 7
  %v264 = vsub.s32 0, %v263
  %v265 = vrot.slane %v221, %v264
  %v266 = vlaneseq
  %v267 = vshrl.u32 %v266, 7
  %v268 = vsub.s32 0, %v267
  %v269 = vrot.slane %v222, %v268
  %v270 = vlaneseq
  %v271 = vshrl.u32 %v270, 7
  %v272 = vsub.s32 0, %v271
  %v273 = vrot.slane %v223, %v272
  %v274 = vmul.f32 %v256, %v261
  %v275 = vmul.f32 %v256, %v265
  %v276 = vmul.f32 %v256, %v269
  %v277 = vmul.f32 %v256, %v273
  %v278 = vadd.f32 %v274, 0.0
  %v279 = vadd.f32 %v275, 0.0
  %v280 = vadd.f32 %v276, 0.0
  %v281 = vadd.f32 %v277, 0.0
  %282 = vset.pattern.permute.xlu0 1
  %283 = vperm.xlu0 %282, %v31
  %v284 = vpop.permute.xlu0 %283
  %v286 = vlaneseq
  %v287 = vshrl.u32 %v286, 7
  %v288 = vsub.s32 1, %v287
  %v289 = vrot.slane %v179, %v288
  %v290 = vlaneseq
  %v291 = vshrl.u32 %v290, 7
  %v292 = vsub.s32 1, %v291
  %v293 = vrot.slane %v180, %v292
  %v294 = vlaneseq
  %v295 = vshrl.u32 %v294, 7
  %v296 = vsub.s32 1, %v295
  %v297 = vrot.slane %v181, %v296
  %v298 = vlaneseq
  %v299 = vshrl.u32 %v298, 7
  %v300 = vsub.s32 1, %v299
  %v301 = vrot.slane %v182, %v300
  %v302 = vmul.f32 %v284, %v289
  %v303 = vmul.f32 %v284, %v293
  %v304 = vmul.f32 %v284, %v297
  %v305 = vmul.f32 %v284, %v301
  %v306 = vadd.f32 %v249, %v302
  %v307 = vadd.f32 %v250, %v303
  %v308 = vadd.f32 %v251, %v304
  %v309 = vadd.f32 %v252, %v305
  %310 = vset.pattern.permute.xlu0 1
  %311 = vperm.xlu0 %310, %v32
  %v312 = vpop.permute.xlu0 %311
  %v314 = vlaneseq
  %v315 = vshrl.u32 %v314, 7
  %v316 = vsub.s32 1, %v315
  %v317 = vrot.slane %v220, %v316
  %v318 = vlaneseq
  %v319 = vshrl.u32 %v318, 7
  %v320 = vsub.s32 1, %v319
  %v321 = vrot.slane %v221, %v320
  %v322 = vlaneseq
  %v323 = vshrl.u32 %v322, 7
  %v324 = vsub.s32 1, %v323
  %v325 = vrot.slane %v222, %v324
  %v326 = vlaneseq
  %v327 = vshrl.u32 %v326, 7
  %v328 = vsub.s32 1, %v327
  %v329 = vrot.slane %v223, %v328
  %v330 = vmul.f32 %v312, %v317
  %v331 = vmul.f32 %v312, %v321
  %v332 = vmul.f32 %v312, %v325
  %v333 = vmul.f32 %v312, %v329
  %v334 = vadd.f32 %v278, %v330
  %v335 = vadd.f32 %v279, %v331
  %v336 = vadd.f32 %v280, %v332
  %v337 = vadd.f32 %v281, %v333
  %338 = vset.pattern.permute.xlu0 2
  %339 = vperm.xlu0 %338, %v31
  %v340 = vpop.permute.xlu0 %339
  %v342 = vlaneseq
  %v343 = vshrl.u32 %v342, 7
  %v344 = vsub.s32 2, %v343
  %v345 = vrot.slane %v179, %v344
  %v346 = vlaneseq
  %v347 = vshrl.u32 %v346, 7
  %v348 = vsub.s32 2, %v347
  %v349 = vrot.slane %v180, %v348
  %v350 = vlaneseq
  %v351 = vshrl.u32 %v350, 7
  %v352 = vsub.s32 2, %v351
  %v353 = vrot.slane %v181, %v352
  %v354 = vlaneseq
  %v355 = vshrl.u32 %v354, 7
  %v356 = vsub.s32 2, %v355
  %v357 = vrot.slane %v182, %v356
  %v358 = vmul.f32 %v340, %v345
  %v359 = vmul.f32 %v340, %v349
  %v360 = vmul.f32 %v340, %v353
  %v361 = vmul.f32 %v340, %v357
  %v362 = vadd.f32 %v306, %v358
  %v363 = vadd.f32 %v307, %v359
  %v364 = vadd.f32 %v308, %v360
  %v365 = vadd.f32 %v309, %v361
  %366 = vset.pattern.permute.xlu0 2
  %367 = vperm.xlu0 %366, %v32
  %v368 = vpop.permute.xlu0 %367
  %v370 = vlaneseq
  %v371 = vshrl.u32 %v370, 7
  %v372 = vsub.s32 2, %v371
  %v373 = vrot.slane %v220, %v372
  %v374 = vlaneseq
  %v375 = vshrl.u32 %v374, 7
  %v376 = vsub.s32 2, %v375
  %v377 = vrot.slane %v221, %v376
  %v378 = vlaneseq
  %v379 = vshrl.u32 %v378, 7
  %v380 = vsub.s32 2, %v379
  %v381 = vrot.slane %v222, %v380
  %v382 = vlaneseq
  %v383 = vshrl.u32 %v382, 7
  %v384 = vsub.s32 2, %v383
  %v385 = vrot.slane %v223, %v384
  %v386 = vmul.f32 %v368, %v373
  %v387 = vmul.f32 %v368, %v377
  %v388 = vmul.f32 %v368, %v381
  %v389 = vmul.f32 %v368, %v385
  %v390 = vadd.f32 %v334, %v386
  %v391 = vadd.f32 %v335, %v387
  %v392 = vadd.f32 %v336, %v388
  %v393 = vadd.f32 %v337, %v389
  %394 = vset.pattern.permute.xlu0 3
  %395 = vperm.xlu0 %394, %v31
  %v396 = vpop.permute.xlu0 %395
  %v398 = vlaneseq
  %v399 = vshrl.u32 %v398, 7
  %v400 = vsub.s32 3, %v399
  %v401 = vrot.slane %v179, %v400
  %v402 = vlaneseq
  %v403 = vshrl.u32 %v402, 7
  %v404 = vsub.s32 3, %v403
  %v405 = vrot.slane %v180, %v404
  %v406 = vlaneseq
  %v407 = vshrl.u32 %v406, 7
  %v408 = vsub.s32 3, %v407
  %v409 = vrot.slane %v181, %v408
  %v410 = vlaneseq
  %v411 = vshrl.u32 %v410, 7
  %v412 = vsub.s32 3, %v411
  %v413 = vrot.slane %v182, %v412
  %v414 = vmul.f32 %v396, %v401
  %v415 = vmul.f32 %v396, %v405
  %v416 = vmul.f32 %v396, %v409
  %v417 = vmul.f32 %v396, %v413
  %v418 = vadd.f32 %v362, %v414
  %v419 = vadd.f32 %v363, %v415
  %v420 = vadd.f32 %v364, %v416
  %v421 = vadd.f32 %v365, %v417
  %422 = vset.pattern.permute.xlu0 3
  %423 = vperm.xlu0 %422, %v32
  %v424 = vpop.permute.xlu0 %423
  %v426 = vlaneseq
  %v427 = vshrl.u32 %v426, 7
  %v428 = vsub.s32 3, %v427
  %v429 = vrot.slane %v220, %v428
  %v430 = vlaneseq
  %v431 = vshrl.u32 %v430, 7
  %v432 = vsub.s32 3, %v431
  %v433 = vrot.slane %v221, %v432
  %v434 = vlaneseq
  %v435 = vshrl.u32 %v434, 7
  %v436 = vsub.s32 3, %v435
  %v437 = vrot.slane %v222, %v436
  %v438 = vlaneseq
  %v439 = vshrl.u32 %v438, 7
  %v440 = vsub.s32 3, %v439
  %v441 = vrot.slane %v223, %v440
  %v442 = vmul.f32 %v424, %v429
  %v443 = vmul.f32 %v424, %v433
  %v444 = vmul.f32 %v424, %v437
  %v445 = vmul.f32 %v424, %v441
  %v446 = vadd.f32 %v390, %v442
  %v447 = vadd.f32 %v391, %v443
  %v448 = vadd.f32 %v392, %v444
  %v449 = vadd.f32 %v393, %v445
  %450 = vrot.lane.b32.xlu0 %v29, 3
  %v451 = vpop.permute.xlu0 %450
  %452 = vrot.lane.b32.xlu0 %v138, 3
  %v453 = vpop.permute.xlu0 %452
  %454 = vrot.lane.b32.xlu0 %v30, 3
  %v455 = vpop.permute.xlu0 %454
  %456 = vrot.lane.b32.xlu0 %v139, 3
  %v457 = vpop.permute.xlu0 %456
  %vm458 = vcmp.lt.s32.totalorder %v36, 3
  %v459 = vsel %vm458, %v455, %v457
  %v460 = vsel %vm458, %v453, %v455
  %v461 = vsel %vm458, %v451, %v453
  %v462 = vsel %vm458, %v457, %v451
  %v463 = vadd.s32 %v84, 4294967293
  %v464 = vadd.s32 %v85, 4294967293
  %v465 = vadd.s32 %v86, 4294967293
  %v466 = vadd.s32 %v87, 4294967293
  %vm467 = vcmp.ge.s32.totalorder %v463, 0
  %vm468 = vcmp.ge.s32.totalorder %v464, 0
  %vm469 = vcmp.ge.s32.totalorder %v465, 0
  %vm470 = vcmp.ge.s32.totalorder %v466, 0
  %vm471 = vcmp.lt.s32.totalorder %v463, 16
  %vm472 = vcmp.lt.s32.totalorder %v464, 16
  %vm473 = vcmp.lt.s32.totalorder %v465, 16
  %vm474 = vcmp.lt.s32.totalorder %v466, 16
  %vm475 = vmand %vm467, %vm471
  %vm476 = vmand %vm468, %vm472
  %vm477 = vmand %vm469, %vm473
  %vm478 = vmand %vm470, %vm474
  %v479 = vsel %vm475, 1, 0
  %v480 = vsel %vm476, 1, 0
  %v481 = vsel %vm477, 1, 0
  %v482 = vsel %vm478, 1, 0
  %vm483 = vcmp.eq.s32.totalorder %v479, 1
  %vm484 = vcmp.eq.s32.totalorder %v480, 1
  %vm485 = vcmp.eq.s32.totalorder %v481, 1
  %vm486 = vcmp.eq.s32.totalorder %v482, 1
  %v487 = vsel %vm483, %v462, 0.0
  %v488 = vsel %vm484, %v461, 0.0
  %v489 = vsel %vm485, %v460, 0.0
  %v490 = vsel %vm486, %v459, 0.0
  %491 = vrot.lane.b32.xlu0 %v29, 48
  %v492 = vpop.permute.xlu0 %491
  %493 = vrot.lane.b32.xlu0 %v138, 48
  %v494 = vpop.permute.xlu0 %493
  %495 = vrot.lane.b32.xlu0 %v30, 48
  %v496 = vpop.permute.xlu0 %495
  %497 = vrot.lane.b32.xlu0 %v139, 48
  %v498 = vpop.permute.xlu0 %497
  %vm499 = vcmp.lt.s32.totalorder %v36, 48
  %v500 = vsel %vm499, %v496, %v498
  %v501 = vsel %vm499, %v494, %v496
  %v502 = vsel %vm499, %v492, %v494
  %v503 = vsel %vm499, %v498, %v492
  %v504 = vadd.s32 %v132, 4294967248
  %v505 = vadd.s32 %v133, 4294967248
  %v506 = vadd.s32 %v134, 4294967248
  %v507 = vadd.s32 %v135, 4294967248
  %vm508 = vcmp.ge.s32.totalorder %v504, 0
  %vm509 = vcmp.ge.s32.totalorder %v505, 0
  %vm510 = vcmp.ge.s32.totalorder %v506, 0
  %vm511 = vcmp.ge.s32.totalorder %v507, 0
  %vm512 = vcmp.lt.s32.totalorder %v504, 256
  %vm513 = vcmp.lt.s32.totalorder %v505, 256
  %vm514 = vcmp.lt.s32.totalorder %v506, 256
  %vm515 = vcmp.lt.s32.totalorder %v507, 256
  %vm516 = vmand %vm508, %vm512
  %vm517 = vmand %vm509, %vm513
  %vm518 = vmand %vm510, %vm514
  %vm519 = vmand %vm511, %vm515
  %v520 = vsel %vm516, 1, 0
  %v521 = vsel %vm517, 1, 0
  %v522 = vsel %vm518, 1, 0
  %v523 = vsel %vm519, 1, 0
  %vm524 = vcmp.eq.s32.totalorder %v520, 1
  %vm525 = vcmp.eq.s32.totalorder %v521, 1
  %vm526 = vcmp.eq.s32.totalorder %v522, 1
  %vm527 = vcmp.eq.s32.totalorder %v523, 1
  %v528 = vsel %vm524, %v503, 0.0
  %v529 = vsel %vm525, %v502, 0.0
  %v530 = vsel %vm526, %v501, 0.0
  %v531 = vsel %vm527, %v500, 0.0
  %532 = vset.pattern.permute.xlu0 4
  %533 = vperm.xlu0 %532, %v31
  %v534 = vpop.permute.xlu0 %533
  %v536 = vlaneseq
  %v537 = vshrl.u32 %v536, 7
  %v538 = vsub.s32 0, %v537
  %v539 = vrot.slane %v487, %v538
  %v540 = vlaneseq
  %v541 = vshrl.u32 %v540, 7
  %v542 = vsub.s32 0, %v541
  %v543 = vrot.slane %v488, %v542
  %v544 = vlaneseq
  %v545 = vshrl.u32 %v544, 7
  %v546 = vsub.s32 0, %v545
  %v547 = vrot.slane %v489, %v546
  %v548 = vlaneseq
  %v549 = vshrl.u32 %v548, 7
  %v550 = vsub.s32 0, %v549
  %v551 = vrot.slane %v490, %v550
  %v552 = vmul.f32 %v534, %v539
  %v553 = vmul.f32 %v534, %v543
  %v554 = vmul.f32 %v534, %v547
  %v555 = vmul.f32 %v534, %v551
  %v556 = vadd.f32 %v418, %v552
  %v557 = vadd.f32 %v419, %v553
  %v558 = vadd.f32 %v420, %v554
  %v559 = vadd.f32 %v421, %v555
  %560 = vset.pattern.permute.xlu0 4
  %561 = vperm.xlu0 %560, %v32
  %v562 = vpop.permute.xlu0 %561
  %v564 = vlaneseq
  %v565 = vshrl.u32 %v564, 7
  %v566 = vsub.s32 0, %v565
  %v567 = vrot.slane %v528, %v566
  %v568 = vlaneseq
  %v569 = vshrl.u32 %v568, 7
  %v570 = vsub.s32 0, %v569
  %v571 = vrot.slane %v529, %v570
  %v572 = vlaneseq
  %v573 = vshrl.u32 %v572, 7
  %v574 = vsub.s32 0, %v573
  %v575 = vrot.slane %v530, %v574
  %v576 = vlaneseq
  %v577 = vshrl.u32 %v576, 7
  %v578 = vsub.s32 0, %v577
  %v579 = vrot.slane %v531, %v578
  %v580 = vmul.f32 %v562, %v567
  %v581 = vmul.f32 %v562, %v571
  %v582 = vmul.f32 %v562, %v575
  %v583 = vmul.f32 %v562, %v579
  %v584 = vadd.f32 %v446, %v580
  %v585 = vadd.f32 %v447, %v581
  %v586 = vadd.f32 %v448, %v582
  %v587 = vadd.f32 %v449, %v583
  %588 = vset.pattern.permute.xlu0 5
  %589 = vperm.xlu0 %588, %v31
  %v590 = vpop.permute.xlu0 %589
  %v592 = vlaneseq
  %v593 = vshrl.u32 %v592, 7
  %v594 = vsub.s32 1, %v593
  %v595 = vrot.slane %v487, %v594
  %v596 = vlaneseq
  %v597 = vshrl.u32 %v596, 7
  %v598 = vsub.s32 1, %v597
  %v599 = vrot.slane %v488, %v598
  %v600 = vlaneseq
  %v601 = vshrl.u32 %v600, 7
  %v602 = vsub.s32 1, %v601
  %v603 = vrot.slane %v489, %v602
  %v604 = vlaneseq
  %v605 = vshrl.u32 %v604, 7
  %v606 = vsub.s32 1, %v605
  %v607 = vrot.slane %v490, %v606
  %v608 = vmul.f32 %v590, %v595
  %v609 = vmul.f32 %v590, %v599
  %v610 = vmul.f32 %v590, %v603
  %v611 = vmul.f32 %v590, %v607
  %v612 = vadd.f32 %v556, %v608
  %v613 = vadd.f32 %v557, %v609
  %v614 = vadd.f32 %v558, %v610
  %v615 = vadd.f32 %v559, %v611
  %616 = vset.pattern.permute.xlu0 5
  %617 = vperm.xlu0 %616, %v32
  %v618 = vpop.permute.xlu0 %617
  %v620 = vlaneseq
  %v621 = vshrl.u32 %v620, 7
  %v622 = vsub.s32 1, %v621
  %v623 = vrot.slane %v528, %v622
  %v624 = vlaneseq
  %v625 = vshrl.u32 %v624, 7
  %v626 = vsub.s32 1, %v625
  %v627 = vrot.slane %v529, %v626
  %v628 = vlaneseq
  %v629 = vshrl.u32 %v628, 7
  %v630 = vsub.s32 1, %v629
  %v631 = vrot.slane %v530, %v630
  %v632 = vlaneseq
  %v633 = vshrl.u32 %v632, 7
  %v634 = vsub.s32 1, %v633
  %v635 = vrot.slane %v531, %v634
  %v636 = vmul.f32 %v618, %v623
  %v637 = vmul.f32 %v618, %v627
  %v638 = vmul.f32 %v618, %v631
  %v639 = vmul.f32 %v618, %v635
  %v640 = vadd.f32 %v584, %v636
  %v641 = vadd.f32 %v585, %v637
  %v642 = vadd.f32 %v586, %v638
  %v643 = vadd.f32 %v587, %v639
  %644 = vset.pattern.permute.xlu0 6
  %645 = vperm.xlu0 %644, %v31
  %v646 = vpop.permute.xlu0 %645
  %v648 = vlaneseq
  %v649 = vshrl.u32 %v648, 7
  %v650 = vsub.s32 2, %v649
  %v651 = vrot.slane %v487, %v650
  %v652 = vlaneseq
  %v653 = vshrl.u32 %v652, 7
  %v654 = vsub.s32 2, %v653
  %v655 = vrot.slane %v488, %v654
  %v656 = vlaneseq
  %v657 = vshrl.u32 %v656, 7
  %v658 = vsub.s32 2, %v657
  %v659 = vrot.slane %v489, %v658
  %v660 = vlaneseq
  %v661 = vshrl.u32 %v660, 7
  %v662 = vsub.s32 2, %v661
  %v663 = vrot.slane %v490, %v662
  %v664 = vmul.f32 %v646, %v651
  %v665 = vmul.f32 %v646, %v655
  %v666 = vmul.f32 %v646, %v659
  %v667 = vmul.f32 %v646, %v663
  %v668 = vadd.f32 %v612, %v664
  %v669 = vadd.f32 %v613, %v665
  %v670 = vadd.f32 %v614, %v666
  %v671 = vadd.f32 %v615, %v667
  %672 = vset.pattern.permute.xlu0 6
  %673 = vperm.xlu0 %672, %v32
  %v674 = vpop.permute.xlu0 %673
  %v676 = vlaneseq
  %v677 = vshrl.u32 %v676, 7
  %v678 = vsub.s32 2, %v677
  %v679 = vrot.slane %v528, %v678
  %v680 = vlaneseq
  %v681 = vshrl.u32 %v680, 7
  %v682 = vsub.s32 2, %v681
  %v683 = vrot.slane %v529, %v682
  %v684 = vlaneseq
  %v685 = vshrl.u32 %v684, 7
  %v686 = vsub.s32 2, %v685
  %v687 = vrot.slane %v530, %v686
  %v688 = vlaneseq
  %v689 = vshrl.u32 %v688, 7
  %v690 = vsub.s32 2, %v689
  %v691 = vrot.slane %v531, %v690
  %v692 = vmul.f32 %v674, %v679
  %v693 = vmul.f32 %v674, %v683
  %v694 = vmul.f32 %v674, %v687
  %v695 = vmul.f32 %v674, %v691
  %v696 = vadd.f32 %v640, %v692
  %v697 = vadd.f32 %v641, %v693
  %v698 = vadd.f32 %v642, %v694
  %v699 = vadd.f32 %v643, %v695
  %700 = vset.pattern.permute.xlu0 7
  %701 = vperm.xlu0 %700, %v31
  %v702 = vpop.permute.xlu0 %701
  %v704 = vlaneseq
  %v705 = vshrl.u32 %v704, 7
  %v706 = vsub.s32 3, %v705
  %v707 = vrot.slane %v487, %v706
  %v708 = vlaneseq
  %v709 = vshrl.u32 %v708, 7
  %v710 = vsub.s32 3, %v709
  %v711 = vrot.slane %v488, %v710
  %v712 = vlaneseq
  %v713 = vshrl.u32 %v712, 7
  %v714 = vsub.s32 3, %v713
  %v715 = vrot.slane %v489, %v714
  %v716 = vlaneseq
  %v717 = vshrl.u32 %v716, 7
  %v718 = vsub.s32 3, %v717
  %v719 = vrot.slane %v490, %v718
  %v720 = vmul.f32 %v702, %v707
  %v721 = vmul.f32 %v702, %v711
  %v722 = vmul.f32 %v702, %v715
  %v723 = vmul.f32 %v702, %v719
  %v724 = vadd.f32 %v668, %v720
  %v725 = vadd.f32 %v669, %v721
  %v726 = vadd.f32 %v670, %v722
  %v727 = vadd.f32 %v671, %v723
  %728 = vset.pattern.permute.xlu0 7
  %729 = vperm.xlu0 %728, %v32
  %v730 = vpop.permute.xlu0 %729
  %v732 = vlaneseq
  %v733 = vshrl.u32 %v732, 7
  %v734 = vsub.s32 3, %v733
  %v735 = vrot.slane %v528, %v734
  %v736 = vlaneseq
  %v737 = vshrl.u32 %v736, 7
  %v738 = vsub.s32 3, %v737
  %v739 = vrot.slane %v529, %v738
  %v740 = vlaneseq
  %v741 = vshrl.u32 %v740, 7
  %v742 = vsub.s32 3, %v741
  %v743 = vrot.slane %v530, %v742
  %v744 = vlaneseq
  %v745 = vshrl.u32 %v744, 7
  %v746 = vsub.s32 3, %v745
  %v747 = vrot.slane %v531, %v746
  %v748 = vmul.f32 %v730, %v735
  %v749 = vmul.f32 %v730, %v739
  %v750 = vmul.f32 %v730, %v743
  %v751 = vmul.f32 %v730, %v747
  %v752 = vadd.f32 %v696, %v748
  %v753 = vadd.f32 %v697, %v749
  %v754 = vadd.f32 %v698, %v750
  %v755 = vadd.f32 %v699, %v751
  %756 = vrot.lane.b32.xlu0 %v29, 2
  %v757 = vpop.permute.xlu0 %756
  %758 = vrot.lane.b32.xlu0 %v138, 2
  %v759 = vpop.permute.xlu0 %758
  %760 = vrot.lane.b32.xlu0 %v30, 2
  %v761 = vpop.permute.xlu0 %760
  %762 = vrot.lane.b32.xlu0 %v139, 2
  %v763 = vpop.permute.xlu0 %762
  %vm764 = vcmp.lt.s32.totalorder %v36, 2
  %v765 = vsel %vm764, %v761, %v763
  %v766 = vsel %vm764, %v759, %v761
  %v767 = vsel %vm764, %v757, %v759
  %v768 = vsel %vm764, %v763, %v757
  %v769 = vadd.s32 %v84, 4294967294
  %v770 = vadd.s32 %v85, 4294967294
  %v771 = vadd.s32 %v86, 4294967294
  %v772 = vadd.s32 %v87, 4294967294
  %vm773 = vcmp.ge.s32.totalorder %v769, 0
  %vm774 = vcmp.ge.s32.totalorder %v770, 0
  %vm775 = vcmp.ge.s32.totalorder %v771, 0
  %vm776 = vcmp.ge.s32.totalorder %v772, 0
  %vm777 = vcmp.lt.s32.totalorder %v769, 16
  %vm778 = vcmp.lt.s32.totalorder %v770, 16
  %vm779 = vcmp.lt.s32.totalorder %v771, 16
  %vm780 = vcmp.lt.s32.totalorder %v772, 16
  %vm781 = vmand %vm773, %vm777
  %vm782 = vmand %vm774, %vm778
  %vm783 = vmand %vm775, %vm779
  %vm784 = vmand %vm776, %vm780
  %v785 = vsel %vm781, 1, 0
  %v786 = vsel %vm782, 1, 0
  %v787 = vsel %vm783, 1, 0
  %v788 = vsel %vm784, 1, 0
  %vm789 = vcmp.eq.s32.totalorder %v785, 1
  %vm790 = vcmp.eq.s32.totalorder %v786, 1
  %vm791 = vcmp.eq.s32.totalorder %v787, 1
  %vm792 = vcmp.eq.s32.totalorder %v788, 1
  %v793 = vsel %vm789, %v768, 0.0
  %v794 = vsel %vm790, %v767, 0.0
  %v795 = vsel %vm791, %v766, 0.0
  %v796 = vsel %vm792, %v765, 0.0
  %797 = vrot.lane.b32.xlu0 %v29, 32
  %v798 = vpop.permute.xlu0 %797
  %799 = vrot.lane.b32.xlu0 %v138, 32
  %v800 = vpop.permute.xlu0 %799
  %801 = vrot.lane.b32.xlu0 %v30, 32
  %v802 = vpop.permute.xlu0 %801
  %803 = vrot.lane.b32.xlu0 %v139, 32
  %v804 = vpop.permute.xlu0 %803
  %vm805 = vcmp.lt.s32.totalorder %v36, 32
  %v806 = vsel %vm805, %v802, %v804
  %v807 = vsel %vm805, %v800, %v802
  %v808 = vsel %vm805, %v798, %v800
  %v809 = vsel %vm805, %v804, %v798
  %v810 = vadd.s32 %v132, 4294967264
  %v811 = vadd.s32 %v133, 4294967264
  %v812 = vadd.s32 %v134, 4294967264
  %v813 = vadd.s32 %v135, 4294967264
  %vm814 = vcmp.ge.s32.totalorder %v810, 0
  %vm815 = vcmp.ge.s32.totalorder %v811, 0
  %vm816 = vcmp.ge.s32.totalorder %v812, 0
  %vm817 = vcmp.ge.s32.totalorder %v813, 0
  %vm818 = vcmp.lt.s32.totalorder %v810, 256
  %vm819 = vcmp.lt.s32.totalorder %v811, 256
  %vm820 = vcmp.lt.s32.totalorder %v812, 256
  %vm821 = vcmp.lt.s32.totalorder %v813, 256
  %vm822 = vmand %vm814, %vm818
  %vm823 = vmand %vm815, %vm819
  %vm824 = vmand %vm816, %vm820
  %vm825 = vmand %vm817, %vm821
  %v826 = vsel %vm822, 1, 0
  %v827 = vsel %vm823, 1, 0
  %v828 = vsel %vm824, 1, 0
  %v829 = vsel %vm825, 1, 0
  %vm830 = vcmp.eq.s32.totalorder %v826, 1
  %vm831 = vcmp.eq.s32.totalorder %v827, 1
  %vm832 = vcmp.eq.s32.totalorder %v828, 1
  %vm833 = vcmp.eq.s32.totalorder %v829, 1
  %v834 = vsel %vm830, %v809, 0.0
  %v835 = vsel %vm831, %v808, 0.0
  %v836 = vsel %vm832, %v807, 0.0
  %v837 = vsel %vm833, %v806, 0.0
  %838 = vset.pattern.permute.xlu0 8
  %839 = vperm.xlu0 %838, %v31
  %v840 = vpop.permute.xlu0 %839
  %v842 = vlaneseq
  %v843 = vshrl.u32 %v842, 7
  %v844 = vsub.s32 0, %v843
  %v845 = vrot.slane %v793, %v844
  %v846 = vlaneseq
  %v847 = vshrl.u32 %v846, 7
  %v848 = vsub.s32 0, %v847
  %v849 = vrot.slane %v794, %v848
  %v850 = vlaneseq
  %v851 = vshrl.u32 %v850, 7
  %v852 = vsub.s32 0, %v851
  %v853 = vrot.slane %v795, %v852
  %v854 = vlaneseq
  %v855 = vshrl.u32 %v854, 7
  %v856 = vsub.s32 0, %v855
  %v857 = vrot.slane %v796, %v856
  %v858 = vmul.f32 %v840, %v845
  %v859 = vmul.f32 %v840, %v849
  %v860 = vmul.f32 %v840, %v853
  %v861 = vmul.f32 %v840, %v857
  %v862 = vadd.f32 %v724, %v858
  %v863 = vadd.f32 %v725, %v859
  %v864 = vadd.f32 %v726, %v860
  %v865 = vadd.f32 %v727, %v861
  %866 = vset.pattern.permute.xlu0 8
  %867 = vperm.xlu0 %866, %v32
  %v868 = vpop.permute.xlu0 %867
  %v870 = vlaneseq
  %v871 = vshrl.u32 %v870, 7
  %v872 = vsub.s32 0, %v871
  %v873 = vrot.slane %v834, %v872
  %v874 = vlaneseq
  %v875 = vshrl.u32 %v874, 7
  %v876 = vsub.s32 0, %v875
  %v877 = vrot.slane %v835, %v876
  %v878 = vlaneseq
  %v879 = vshrl.u32 %v878, 7
  %v880 = vsub.s32 0, %v879
  %v881 = vrot.slane %v836, %v880
  %v882 = vlaneseq
  %v883 = vshrl.u32 %v882, 7
  %v884 = vsub.s32 0, %v883
  %v885 = vrot.slane %v837, %v884
  %v886 = vmul.f32 %v868, %v873
  %v887 = vmul.f32 %v868, %v877
  %v888 = vmul.f32 %v868, %v881
  %v889 = vmul.f32 %v868, %v885
  %v890 = vadd.f32 %v752, %v886
  %v891 = vadd.f32 %v753, %v887
  %v892 = vadd.f32 %v754, %v888
  %v893 = vadd.f32 %v755, %v889
  %894 = vset.pattern.permute.xlu0 9
  %895 = vperm.xlu0 %894, %v31
  %v896 = vpop.permute.xlu0 %895
  %v898 = vlaneseq
  %v899 = vshrl.u32 %v898, 7
  %v900 = vsub.s32 1, %v899
  %v901 = vrot.slane %v793, %v900
  %v902 = vlaneseq
  %v903 = vshrl.u32 %v902, 7
  %v904 = vsub.s32 1, %v903
  %v905 = vrot.slane %v794, %v904
  %v906 = vlaneseq
  %v907 = vshrl.u32 %v906, 7
  %v908 = vsub.s32 1, %v907
  %v909 = vrot.slane %v795, %v908
  %v910 = vlaneseq
  %v911 = vshrl.u32 %v910, 7
  %v912 = vsub.s32 1, %v911
  %v913 = vrot.slane %v796, %v912
  %v914 = vmul.f32 %v896, %v901
  %v915 = vmul.f32 %v896, %v905
  %v916 = vmul.f32 %v896, %v909
  %v917 = vmul.f32 %v896, %v913
  %v918 = vadd.f32 %v862, %v914
  %v919 = vadd.f32 %v863, %v915
  %v920 = vadd.f32 %v864, %v916
  %v921 = vadd.f32 %v865, %v917
  %922 = vset.pattern.permute.xlu0 9
  %923 = vperm.xlu0 %922, %v32
  %v924 = vpop.permute.xlu0 %923
  %v926 = vlaneseq
  %v927 = vshrl.u32 %v926, 7
  %v928 = vsub.s32 1, %v927
  %v929 = vrot.slane %v834, %v928
  %v930 = vlaneseq
  %v931 = vshrl.u32 %v930, 7
  %v932 = vsub.s32 1, %v931
  %v933 = vrot.slane %v835, %v932
  %v934 = vlaneseq
  %v935 = vshrl.u32 %v934, 7
  %v936 = vsub.s32 1, %v935
  %v937 = vrot.slane %v836, %v936
  %v938 = vlaneseq
  %v939 = vshrl.u32 %v938, 7
  %v940 = vsub.s32 1, %v939
  %v941 = vrot.slane %v837, %v940
  %v942 = vmul.f32 %v924, %v929
  %v943 = vmul.f32 %v924, %v933
  %v944 = vmul.f32 %v924, %v937
  %v945 = vmul.f32 %v924, %v941
  %v946 = vadd.f32 %v890, %v942
  %v947 = vadd.f32 %v891, %v943
  %v948 = vadd.f32 %v892, %v944
  %v949 = vadd.f32 %v893, %v945
  %950 = vset.pattern.permute.xlu0 10
  %951 = vperm.xlu0 %950, %v31
  %v952 = vpop.permute.xlu0 %951
  %v954 = vlaneseq
  %v955 = vshrl.u32 %v954, 7
  %v956 = vsub.s32 2, %v955
  %v957 = vrot.slane %v793, %v956
  %v958 = vlaneseq
  %v959 = vshrl.u32 %v958, 7
  %v960 = vsub.s32 2, %v959
  %v961 = vrot.slane %v794, %v960
  %v962 = vlaneseq
  %v963 = vshrl.u32 %v962, 7
  %v964 = vsub.s32 2, %v963
  %v965 = vrot.slane %v795, %v964
  %v966 = vlaneseq
  %v967 = vshrl.u32 %v966, 7
  %v968 = vsub.s32 2, %v967
  %v969 = vrot.slane %v796, %v968
  %v970 = vmul.f32 %v952, %v957
  %v971 = vmul.f32 %v952, %v961
  %v972 = vmul.f32 %v952, %v965
  %v973 = vmul.f32 %v952, %v969
  %v974 = vadd.f32 %v918, %v970
  %v975 = vadd.f32 %v919, %v971
  %v976 = vadd.f32 %v920, %v972
  %v977 = vadd.f32 %v921, %v973
  %978 = vset.pattern.permute.xlu0 10
  %979 = vperm.xlu0 %978, %v32
  %v980 = vpop.permute.xlu0 %979
  %v982 = vlaneseq
  %v983 = vshrl.u32 %v982, 7
  %v984 = vsub.s32 2, %v983
  %v985 = vrot.slane %v834, %v984
  %v986 = vlaneseq
  %v987 = vshrl.u32 %v986, 7
  %v988 = vsub.s32 2, %v987
  %v989 = vrot.slane %v835, %v988
  %v990 = vlaneseq
  %v991 = vshrl.u32 %v990, 7
  %v992 = vsub.s32 2, %v991
  %v993 = vrot.slane %v836, %v992
  %v994 = vlaneseq
  %v995 = vshrl.u32 %v994, 7
  %v996 = vsub.s32 2, %v995
  %v997 = vrot.slane %v837, %v996
  %v998 = vmul.f32 %v980, %v985
  %v999 = vmul.f32 %v980, %v989
  %v1000 = vmul.f32 %v980, %v993
  %v1001 = vmul.f32 %v980, %v997
  %v1002 = vadd.f32 %v946, %v998
  %v1003 = vadd.f32 %v947, %v999
  %v1004 = vadd.f32 %v948, %v1000
  %v1005 = vadd.f32 %v949, %v1001
  %1006 = vset.pattern.permute.xlu0 11
  %1007 = vperm.xlu0 %1006, %v31
  %v1008 = vpop.permute.xlu0 %1007
  %v1010 = vlaneseq
  %v1011 = vshrl.u32 %v1010, 7
  %v1012 = vsub.s32 3, %v1011
  %v1013 = vrot.slane %v793, %v1012
  %v1014 = vlaneseq
  %v1015 = vshrl.u32 %v1014, 7
  %v1016 = vsub.s32 3, %v1015
  %v1017 = vrot.slane %v794, %v1016
  %v1018 = vlaneseq
  %v1019 = vshrl.u32 %v1018, 7
  %v1020 = vsub.s32 3, %v1019
  %v1021 = vrot.slane %v795, %v1020
  %v1022 = vlaneseq
  %v1023 = vshrl.u32 %v1022, 7
  %v1024 = vsub.s32 3, %v1023
  %v1025 = vrot.slane %v796, %v1024
  %v1026 = vmul.f32 %v1008, %v1013
  %v1027 = vmul.f32 %v1008, %v1017
  %v1028 = vmul.f32 %v1008, %v1021
  %v1029 = vmul.f32 %v1008, %v1025
  %v1030 = vadd.f32 %v974, %v1026
  %v1031 = vadd.f32 %v975, %v1027
  %v1032 = vadd.f32 %v976, %v1028
  %v1033 = vadd.f32 %v977, %v1029
  %1034 = vset.pattern.permute.xlu0 11
  %1035 = vperm.xlu0 %1034, %v32
  %v1036 = vpop.permute.xlu0 %1035
  %v1038 = vlaneseq
  %v1039 = vshrl.u32 %v1038, 7
  %v1040 = vsub.s32 3, %v1039
  %v1041 = vrot.slane %v834, %v1040
  %v1042 = vlaneseq
  %v1043 = vshrl.u32 %v1042, 7
  %v1044 = vsub.s32 3, %v1043
  %v1045 = vrot.slane %v835, %v1044
  %v1046 = vlaneseq
  %v1047 = vshrl.u32 %v1046, 7
  %v1048 = vsub.s32 3, %v1047
  %v1049 = vrot.slane %v836, %v1048
  %v1050 = vlaneseq
  %v1051 = vshrl.u32 %v1050, 7
  %v1052 = vsub.s32 3, %v1051
  %v1053 = vrot.slane %v837, %v1052
  %v1054 = vmul.f32 %v1036, %v1041
  %v1055 = vmul.f32 %v1036, %v1045
  %v1056 = vmul.f32 %v1036, %v1049
  %v1057 = vmul.f32 %v1036, %v1053
  %v1058 = vadd.f32 %v1002, %v1054
  %v1059 = vadd.f32 %v1003, %v1055
  %v1060 = vadd.f32 %v1004, %v1056
  %v1061 = vadd.f32 %v1005, %v1057
  %1062 = vrot.lane.b32.xlu0 %v29, 1
  %v1063 = vpop.permute.xlu0 %1062
  %1064 = vrot.lane.b32.xlu0 %v138, 1
  %v1065 = vpop.permute.xlu0 %1064
  %1066 = vrot.lane.b32.xlu0 %v30, 1
  %v1067 = vpop.permute.xlu0 %1066
  %1068 = vrot.lane.b32.xlu0 %v139, 1
  %v1069 = vpop.permute.xlu0 %1068
  %vm1070 = vcmp.lt.s32.totalorder %v36, 1
  %v1071 = vsel %vm1070, %v1067, %v1069
  %v1072 = vsel %vm1070, %v1065, %v1067
  %v1073 = vsel %vm1070, %v1063, %v1065
  %v1074 = vsel %vm1070, %v1069, %v1063
  %v1075 = vadd.s32 %v84, 4294967295
  %v1076 = vadd.s32 %v85, 4294967295
  %v1077 = vadd.s32 %v86, 4294967295
  %v1078 = vadd.s32 %v87, 4294967295
  %vm1079 = vcmp.ge.s32.totalorder %v1075, 0
  %vm1080 = vcmp.ge.s32.totalorder %v1076, 0
  %vm1081 = vcmp.ge.s32.totalorder %v1077, 0
  %vm1082 = vcmp.ge.s32.totalorder %v1078, 0
  %vm1083 = vcmp.lt.s32.totalorder %v1075, 16
  %vm1084 = vcmp.lt.s32.totalorder %v1076, 16
  %vm1085 = vcmp.lt.s32.totalorder %v1077, 16
  %vm1086 = vcmp.lt.s32.totalorder %v1078, 16
  %vm1087 = vmand %vm1079, %vm1083
  %vm1088 = vmand %vm1080, %vm1084
  %vm1089 = vmand %vm1081, %vm1085
  %vm1090 = vmand %vm1082, %vm1086
  %v1091 = vsel %vm1087, 1, 0
  %v1092 = vsel %vm1088, 1, 0
  %v1093 = vsel %vm1089, 1, 0
  %v1094 = vsel %vm1090, 1, 0
  %vm1095 = vcmp.eq.s32.totalorder %v1091, 1
  %vm1096 = vcmp.eq.s32.totalorder %v1092, 1
  %vm1097 = vcmp.eq.s32.totalorder %v1093, 1
  %vm1098 = vcmp.eq.s32.totalorder %v1094, 1
  %v1099 = vsel %vm1095, %v1074, 0.0
  %v1100 = vsel %vm1096, %v1073, 0.0
  %v1101 = vsel %vm1097, %v1072, 0.0
  %v1102 = vsel %vm1098, %v1071, 0.0
  %1103 = vrot.lane.b32.xlu0 %v29, 16
  %v1104 = vpop.permute.xlu0 %1103
  %1105 = vrot.lane.b32.xlu0 %v138, 16
  %v1106 = vpop.permute.xlu0 %1105
  %1107 = vrot.lane.b32.xlu0 %v30, 16
  %v1108 = vpop.permute.xlu0 %1107
  %1109 = vrot.lane.b32.xlu0 %v139, 16
  %v1110 = vpop.permute.xlu0 %1109
  %vm1111 = vcmp.lt.s32.totalorder %v36, 16
  %v1112 = vsel %vm1111, %v1108, %v1110
  %v1113 = vsel %vm1111, %v1106, %v1108
  %v1114 = vsel %vm1111, %v1104, %v1106
  %v1115 = vsel %vm1111, %v1110, %v1104
  %v1116 = vadd.s32 %v132, 4294967280
  %v1117 = vadd.s32 %v133, 4294967280
  %v1118 = vadd.s32 %v134, 4294967280
  %v1119 = vadd.s32 %v135, 4294967280
  %vm1120 = vcmp.ge.s32.totalorder %v1116, 0
  %vm1121 = vcmp.ge.s32.totalorder %v1117, 0
  %vm1122 = vcmp.ge.s32.totalorder %v1118, 0
  %vm1123 = vcmp.ge.s32.totalorder %v1119, 0
  %vm1124 = vcmp.lt.s32.totalorder %v1116, 256
  %vm1125 = vcmp.lt.s32.totalorder %v1117, 256
  %vm1126 = vcmp.lt.s32.totalorder %v1118, 256
  %vm1127 = vcmp.lt.s32.totalorder %v1119, 256
  %vm1128 = vmand %vm1120, %vm1124
  %vm1129 = vmand %vm1121, %vm1125
  %vm1130 = vmand %vm1122, %vm1126
  %vm1131 = vmand %vm1123, %vm1127
  %v1132 = vsel %vm1128, 1, 0
  %v1133 = vsel %vm1129, 1, 0
  %v1134 = vsel %vm1130, 1, 0
  %v1135 = vsel %vm1131, 1, 0
  %vm1136 = vcmp.eq.s32.totalorder %v1132, 1
  %vm1137 = vcmp.eq.s32.totalorder %v1133, 1
  %vm1138 = vcmp.eq.s32.totalorder %v1134, 1
  %vm1139 = vcmp.eq.s32.totalorder %v1135, 1
  %v1140 = vsel %vm1136, %v1115, 0.0
  %v1141 = vsel %vm1137, %v1114, 0.0
  %v1142 = vsel %vm1138, %v1113, 0.0
  %v1143 = vsel %vm1139, %v1112, 0.0
  %1144 = vset.pattern.permute.xlu0 12
  %1145 = vperm.xlu0 %1144, %v31
  %v1146 = vpop.permute.xlu0 %1145
  %v1148 = vlaneseq
  %v1149 = vshrl.u32 %v1148, 7
  %v1150 = vsub.s32 0, %v1149
  %v1151 = vrot.slane %v1099, %v1150
  %v1152 = vlaneseq
  %v1153 = vshrl.u32 %v1152, 7
  %v1154 = vsub.s32 0, %v1153
  %v1155 = vrot.slane %v1100, %v1154
  %v1156 = vlaneseq
  %v1157 = vshrl.u32 %v1156, 7
  %v1158 = vsub.s32 0, %v1157
  %v1159 = vrot.slane %v1101, %v1158
  %v1160 = vlaneseq
  %v1161 = vshrl.u32 %v1160, 7
  %v1162 = vsub.s32 0, %v1161
  %v1163 = vrot.slane %v1102, %v1162
  %v1164 = vmul.f32 %v1146, %v1151
  %v1165 = vmul.f32 %v1146, %v1155
  %v1166 = vmul.f32 %v1146, %v1159
  %v1167 = vmul.f32 %v1146, %v1163
  %v1168 = vadd.f32 %v1030, %v1164
  %v1169 = vadd.f32 %v1031, %v1165
  %v1170 = vadd.f32 %v1032, %v1166
  %v1171 = vadd.f32 %v1033, %v1167
  %1172 = vset.pattern.permute.xlu0 12
  %1173 = vperm.xlu0 %1172, %v32
  %v1174 = vpop.permute.xlu0 %1173
  %v1176 = vlaneseq
  %v1177 = vshrl.u32 %v1176, 7
  %v1178 = vsub.s32 0, %v1177
  %v1179 = vrot.slane %v1140, %v1178
  %v1180 = vlaneseq
  %v1181 = vshrl.u32 %v1180, 7
  %v1182 = vsub.s32 0, %v1181
  %v1183 = vrot.slane %v1141, %v1182
  %v1184 = vlaneseq
  %v1185 = vshrl.u32 %v1184, 7
  %v1186 = vsub.s32 0, %v1185
  %v1187 = vrot.slane %v1142, %v1186
  %v1188 = vlaneseq
  %v1189 = vshrl.u32 %v1188, 7
  %v1190 = vsub.s32 0, %v1189
  %v1191 = vrot.slane %v1143, %v1190
  %v1192 = vmul.f32 %v1174, %v1179
  %v1193 = vmul.f32 %v1174, %v1183
  %v1194 = vmul.f32 %v1174, %v1187
  %v1195 = vmul.f32 %v1174, %v1191
  %v1196 = vadd.f32 %v1058, %v1192
  %v1197 = vadd.f32 %v1059, %v1193
  %v1198 = vadd.f32 %v1060, %v1194
  %v1199 = vadd.f32 %v1061, %v1195
  %1200 = vset.pattern.permute.xlu0 13
  %1201 = vperm.xlu0 %1200, %v31
  %v1202 = vpop.permute.xlu0 %1201
  %v1204 = vlaneseq
  %v1205 = vshrl.u32 %v1204, 7
  %v1206 = vsub.s32 1, %v1205
  %v1207 = vrot.slane %v1099, %v1206
  %v1208 = vlaneseq
  %v1209 = vshrl.u32 %v1208, 7
  %v1210 = vsub.s32 1, %v1209
  %v1211 = vrot.slane %v1100, %v1210
  %v1212 = vlaneseq
  %v1213 = vshrl.u32 %v1212, 7
  %v1214 = vsub.s32 1, %v1213
  %v1215 = vrot.slane %v1101, %v1214
  %v1216 = vlaneseq
  %v1217 = vshrl.u32 %v1216, 7
  %v1218 = vsub.s32 1, %v1217
  %v1219 = vrot.slane %v1102, %v1218
  %v1220 = vmul.f32 %v1202, %v1207
  %v1221 = vmul.f32 %v1202, %v1211
  %v1222 = vmul.f32 %v1202, %v1215
  %v1223 = vmul.f32 %v1202, %v1219
  %v1224 = vadd.f32 %v1168, %v1220
  %v1225 = vadd.f32 %v1169, %v1221
  %v1226 = vadd.f32 %v1170, %v1222
  %v1227 = vadd.f32 %v1171, %v1223
  %1228 = vset.pattern.permute.xlu0 13
  %1229 = vperm.xlu0 %1228, %v32
  %v1230 = vpop.permute.xlu0 %1229
  %v1232 = vlaneseq
  %v1233 = vshrl.u32 %v1232, 7
  %v1234 = vsub.s32 1, %v1233
  %v1235 = vrot.slane %v1140, %v1234
  %v1236 = vlaneseq
  %v1237 = vshrl.u32 %v1236, 7
  %v1238 = vsub.s32 1, %v1237
  %v1239 = vrot.slane %v1141, %v1238
  %v1240 = vlaneseq
  %v1241 = vshrl.u32 %v1240, 7
  %v1242 = vsub.s32 1, %v1241
  %v1243 = vrot.slane %v1142, %v1242
  %v1244 = vlaneseq
  %v1245 = vshrl.u32 %v1244, 7
  %v1246 = vsub.s32 1, %v1245
  %v1247 = vrot.slane %v1143, %v1246
  %v1248 = vmul.f32 %v1230, %v1235
  %v1249 = vmul.f32 %v1230, %v1239
  %v1250 = vmul.f32 %v1230, %v1243
  %v1251 = vmul.f32 %v1230, %v1247
  %v1252 = vadd.f32 %v1196, %v1248
  %v1253 = vadd.f32 %v1197, %v1249
  %v1254 = vadd.f32 %v1198, %v1250
  %v1255 = vadd.f32 %v1199, %v1251
  %1256 = vset.pattern.permute.xlu0 14
  %1257 = vperm.xlu0 %1256, %v31
  %v1258 = vpop.permute.xlu0 %1257
  %v1260 = vlaneseq
  %v1261 = vshrl.u32 %v1260, 7
  %v1262 = vsub.s32 2, %v1261
  %v1263 = vrot.slane %v1099, %v1262
  %v1264 = vlaneseq
  %v1265 = vshrl.u32 %v1264, 7
  %v1266 = vsub.s32 2, %v1265
  %v1267 = vrot.slane %v1100, %v1266
  %v1268 = vlaneseq
  %v1269 = vshrl.u32 %v1268, 7
  %v1270 = vsub.s32 2, %v1269
  %v1271 = vrot.slane %v1101, %v1270
  %v1272 = vlaneseq
  %v1273 = vshrl.u32 %v1272, 7
  %v1274 = vsub.s32 2, %v1273
  %v1275 = vrot.slane %v1102, %v1274
  %v1276 = vmul.f32 %v1258, %v1263
  %v1277 = vmul.f32 %v1258, %v1267
  %v1278 = vmul.f32 %v1258, %v1271
  %v1279 = vmul.f32 %v1258, %v1275
  %v1280 = vadd.f32 %v1224, %v1276
  %v1281 = vadd.f32 %v1225, %v1277
  %v1282 = vadd.f32 %v1226, %v1278
  %v1283 = vadd.f32 %v1227, %v1279
  %1284 = vset.pattern.permute.xlu0 14
  %1285 = vperm.xlu0 %1284, %v32
  %v1286 = vpop.permute.xlu0 %1285
  %v1288 = vlaneseq
  %v1289 = vshrl.u32 %v1288, 7
  %v1290 = vsub.s32 2, %v1289
  %v1291 = vrot.slane %v1140, %v1290
  %v1292 = vlaneseq
  %v1293 = vshrl.u32 %v1292, 7
  %v1294 = vsub.s32 2, %v1293
  %v1295 = vrot.slane %v1141, %v1294
  %v1296 = vlaneseq
  %v1297 = vshrl.u32 %v1296, 7
  %v1298 = vsub.s32 2, %v1297
  %v1299 = vrot.slane %v1142, %v1298
  %v1300 = vlaneseq
  %v1301 = vshrl.u32 %v1300, 7
  %v1302 = vsub.s32 2, %v1301
  %v1303 = vrot.slane %v1143, %v1302
  %v1304 = vmul.f32 %v1286, %v1291
  %v1305 = vmul.f32 %v1286, %v1295
  %v1306 = vmul.f32 %v1286, %v1299
  %v1307 = vmul.f32 %v1286, %v1303
  %v1308 = vadd.f32 %v1252, %v1304
  %v1309 = vadd.f32 %v1253, %v1305
  %v1310 = vadd.f32 %v1254, %v1306
  %v1311 = vadd.f32 %v1255, %v1307
  %1312 = vset.pattern.permute.xlu0 15
  %1313 = vperm.xlu0 %1312, %v31
  %v1314 = vpop.permute.xlu0 %1313
  %v1316 = vlaneseq
  %v1317 = vshrl.u32 %v1316, 7
  %v1318 = vsub.s32 3, %v1317
  %v1319 = vrot.slane %v1099, %v1318
  %v1320 = vlaneseq
  %v1321 = vshrl.u32 %v1320, 7
  %v1322 = vsub.s32 3, %v1321
  %v1323 = vrot.slane %v1100, %v1322
  %v1324 = vlaneseq
  %v1325 = vshrl.u32 %v1324, 7
  %v1326 = vsub.s32 3, %v1325
  %v1327 = vrot.slane %v1101, %v1326
  %v1328 = vlaneseq
  %v1329 = vshrl.u32 %v1328, 7
  %v1330 = vsub.s32 3, %v1329
  %v1331 = vrot.slane %v1102, %v1330
  %v1332 = vmul.f32 %v1314, %v1319
  %v1333 = vmul.f32 %v1314, %v1323
  %v1334 = vmul.f32 %v1314, %v1327
  %v1335 = vmul.f32 %v1314, %v1331
  %v1336 = vadd.f32 %v1280, %v1332
  %v1337 = vadd.f32 %v1281, %v1333
  %v1338 = vadd.f32 %v1282, %v1334
  %v1339 = vadd.f32 %v1283, %v1335
  %1340 = vset.pattern.permute.xlu0 15
  %1341 = vperm.xlu0 %1340, %v32
  %v1342 = vpop.permute.xlu0 %1341
  %v1344 = vlaneseq
  %v1345 = vshrl.u32 %v1344, 7
  %v1346 = vsub.s32 3, %v1345
  %v1347 = vrot.slane %v1140, %v1346
  %v1348 = vlaneseq
  %v1349 = vshrl.u32 %v1348, 7
  %v1350 = vsub.s32 3, %v1349
  %v1351 = vrot.slane %v1141, %v1350
  %v1352 = vlaneseq
  %v1353 = vshrl.u32 %v1352, 7
  %v1354 = vsub.s32 3, %v1353
  %v1355 = vrot.slane %v1142, %v1354
  %v1356 = vlaneseq
  %v1357 = vshrl.u32 %v1356, 7
  %v1358 = vsub.s32 3, %v1357
  %v1359 = vrot.slane %v1143, %v1358
  %v1360 = vmul.f32 %v1342, %v1347
  %v1361 = vmul.f32 %v1342, %v1351
  %v1362 = vmul.f32 %v1342, %v1355
  %v1363 = vmul.f32 %v1342, %v1359
  %v1364 = vadd.f32 %v1308, %v1360
  %v1365 = vadd.f32 %v1309, %v1361
  %v1366 = vadd.f32 %v1310, %v1362
  %v1367 = vadd.f32 %v1311, %v1363
  %1368 = vset.pattern.permute.xlu0 16
  %1369 = vperm.xlu0 %1368, %v31
  %v1370 = vpop.permute.xlu0 %1369
  %v1372 = vlaneseq
  %v1373 = vshrl.u32 %v1372, 7
  %v1374 = vsub.s32 0, %v1373
  %v1375 = vrot.slane %v29, %v1374
  %v1376 = vlaneseq
  %v1377 = vshrl.u32 %v1376, 7
  %v1378 = vsub.s32 4, %v1377
  %v1379 = vrot.slane %v29, %v1378
  %v1380 = vlaneseq
  %v1381 = vshrl.u32 %v1380, 7
  %v1382 = vsub.s32 0, %v1381
  %v1383 = vrot.slane %v30, %v1382
  %v1384 = vlaneseq
  %v1385 = vshrl.u32 %v1384, 7
  %v1386 = vsub.s32 4, %v1385
  %v1387 = vrot.slane %v30, %v1386
  %v1392 = vlaneseq
  %v1393 = vshrl.u32 %v1392, 7
  %v1394 = vsub.s32 0, %v1393
  %v1395 = vrot.slane %v1375, %v1394
  %v1396 = vlaneseq
  %v1397 = vshrl.u32 %v1396, 7
  %v1398 = vsub.s32 0, %v1397
  %v1399 = vrot.slane %v1379, %v1398
  %v1400 = vlaneseq
  %v1401 = vshrl.u32 %v1400, 7
  %v1402 = vsub.s32 0, %v1401
  %v1403 = vrot.slane %v1383, %v1402
  %v1404 = vlaneseq
  %v1405 = vshrl.u32 %v1404, 7
  %v1406 = vsub.s32 0, %v1405
  %v1407 = vrot.slane %v1387, %v1406
  %v1408 = vmul.f32 %v1370, %v1395
  %v1409 = vmul.f32 %v1370, %v1399
  %v1410 = vmul.f32 %v1370, %v1403
  %v1411 = vmul.f32 %v1370, %v1407
  %v1412 = vadd.f32 %v1336, %v1408
  %v1413 = vadd.f32 %v1337, %v1409
  %v1414 = vadd.f32 %v1338, %v1410
  %v1415 = vadd.f32 %v1339, %v1411
  %1416 = vset.pattern.permute.xlu0 16
  %1417 = vperm.xlu0 %1416, %v32
  %v1418 = vpop.permute.xlu0 %1417
  %v1420 = vmul.f32 %v1418, %v1395
  %v1421 = vmul.f32 %v1418, %v1399
  %v1422 = vmul.f32 %v1418, %v1403
  %v1423 = vmul.f32 %v1418, %v1407
  %v1424 = vadd.f32 %v1364, %v1420
  %v1425 = vadd.f32 %v1365, %v1421
  %v1426 = vadd.f32 %v1366, %v1422
  %v1427 = vadd.f32 %v1367, %v1423
  %1428 = vset.pattern.permute.xlu0 17
  %1429 = vperm.xlu0 %1428, %v31
  %v1430 = vpop.permute.xlu0 %1429
  %v1432 = vlaneseq
  %v1433 = vshrl.u32 %v1432, 7
  %v1434 = vsub.s32 1, %v1433
  %v1435 = vrot.slane %v29, %v1434
  %v1436 = vlaneseq
  %v1437 = vshrl.u32 %v1436, 7
  %v1438 = vsub.s32 5, %v1437
  %v1439 = vrot.slane %v29, %v1438
  %v1440 = vlaneseq
  %v1441 = vshrl.u32 %v1440, 7
  %v1442 = vsub.s32 1, %v1441
  %v1443 = vrot.slane %v30, %v1442
  %v1444 = vlaneseq
  %v1445 = vshrl.u32 %v1444, 7
  %v1446 = vsub.s32 5, %v1445
  %v1447 = vrot.slane %v30, %v1446
  %v1452 = vlaneseq
  %v1453 = vshrl.u32 %v1452, 7
  %v1454 = vsub.s32 1, %v1453
  %v1455 = vrot.slane %v1435, %v1454
  %v1456 = vlaneseq
  %v1457 = vshrl.u32 %v1456, 7
  %v1458 = vsub.s32 1, %v1457
  %v1459 = vrot.slane %v1439, %v1458
  %v1460 = vlaneseq
  %v1461 = vshrl.u32 %v1460, 7
  %v1462 = vsub.s32 1, %v1461
  %v1463 = vrot.slane %v1443, %v1462
  %v1464 = vlaneseq
  %v1465 = vshrl.u32 %v1464, 7
  %v1466 = vsub.s32 1, %v1465
  %v1467 = vrot.slane %v1447, %v1466
  %v1468 = vmul.f32 %v1430, %v1455
  %v1469 = vmul.f32 %v1430, %v1459
  %v1470 = vmul.f32 %v1430, %v1463
  %v1471 = vmul.f32 %v1430, %v1467
  %v1472 = vadd.f32 %v1412, %v1468
  %v1473 = vadd.f32 %v1413, %v1469
  %v1474 = vadd.f32 %v1414, %v1470
  %v1475 = vadd.f32 %v1415, %v1471
  %1476 = vset.pattern.permute.xlu0 17
  %1477 = vperm.xlu0 %1476, %v32
  %v1478 = vpop.permute.xlu0 %1477
  %v1480 = vmul.f32 %v1478, %v1455
  %v1481 = vmul.f32 %v1478, %v1459
  %v1482 = vmul.f32 %v1478, %v1463
  %v1483 = vmul.f32 %v1478, %v1467
  %v1484 = vadd.f32 %v1424, %v1480
  %v1485 = vadd.f32 %v1425, %v1481
  %v1486 = vadd.f32 %v1426, %v1482
  %v1487 = vadd.f32 %v1427, %v1483
  %1488 = vset.pattern.permute.xlu0 18
  %1489 = vperm.xlu0 %1488, %v31
  %v1490 = vpop.permute.xlu0 %1489
  %v1492 = vlaneseq
  %v1493 = vshrl.u32 %v1492, 7
  %v1494 = vsub.s32 2, %v1493
  %v1495 = vrot.slane %v29, %v1494
  %v1496 = vlaneseq
  %v1497 = vshrl.u32 %v1496, 7
  %v1498 = vsub.s32 6, %v1497
  %v1499 = vrot.slane %v29, %v1498
  %v1500 = vlaneseq
  %v1501 = vshrl.u32 %v1500, 7
  %v1502 = vsub.s32 2, %v1501
  %v1503 = vrot.slane %v30, %v1502
  %v1504 = vlaneseq
  %v1505 = vshrl.u32 %v1504, 7
  %v1506 = vsub.s32 6, %v1505
  %v1507 = vrot.slane %v30, %v1506
  %v1512 = vlaneseq
  %v1513 = vshrl.u32 %v1512, 7
  %v1514 = vsub.s32 2, %v1513
  %v1515 = vrot.slane %v1495, %v1514
  %v1516 = vlaneseq
  %v1517 = vshrl.u32 %v1516, 7
  %v1518 = vsub.s32 2, %v1517
  %v1519 = vrot.slane %v1499, %v1518
  %v1520 = vlaneseq
  %v1521 = vshrl.u32 %v1520, 7
  %v1522 = vsub.s32 2, %v1521
  %v1523 = vrot.slane %v1503, %v1522
  %v1524 = vlaneseq
  %v1525 = vshrl.u32 %v1524, 7
  %v1526 = vsub.s32 2, %v1525
  %v1527 = vrot.slane %v1507, %v1526
  %v1528 = vmul.f32 %v1490, %v1515
  %v1529 = vmul.f32 %v1490, %v1519
  %v1530 = vmul.f32 %v1490, %v1523
  %v1531 = vmul.f32 %v1490, %v1527
  %v1532 = vadd.f32 %v1472, %v1528
  %v1533 = vadd.f32 %v1473, %v1529
  %v1534 = vadd.f32 %v1474, %v1530
  %v1535 = vadd.f32 %v1475, %v1531
  %1536 = vset.pattern.permute.xlu0 18
  %1537 = vperm.xlu0 %1536, %v32
  %v1538 = vpop.permute.xlu0 %1537
  %v1540 = vmul.f32 %v1538, %v1515
  %v1541 = vmul.f32 %v1538, %v1519
  %v1542 = vmul.f32 %v1538, %v1523
  %v1543 = vmul.f32 %v1538, %v1527
  %v1544 = vadd.f32 %v1484, %v1540
  %v1545 = vadd.f32 %v1485, %v1541
  %v1546 = vadd.f32 %v1486, %v1542
  %v1547 = vadd.f32 %v1487, %v1543
  %1548 = vset.pattern.permute.xlu0 19
  %1549 = vperm.xlu0 %1548, %v31
  %v1550 = vpop.permute.xlu0 %1549
  %v1552 = vlaneseq
  %v1553 = vshrl.u32 %v1552, 7
  %v1554 = vsub.s32 3, %v1553
  %v1555 = vrot.slane %v29, %v1554
  %v1556 = vlaneseq
  %v1557 = vshrl.u32 %v1556, 7
  %v1558 = vsub.s32 7, %v1557
  %v1559 = vrot.slane %v29, %v1558
  %v1560 = vlaneseq
  %v1561 = vshrl.u32 %v1560, 7
  %v1562 = vsub.s32 3, %v1561
  %v1563 = vrot.slane %v30, %v1562
  %v1564 = vlaneseq
  %v1565 = vshrl.u32 %v1564, 7
  %v1566 = vsub.s32 7, %v1565
  %v1567 = vrot.slane %v30, %v1566
  %v1572 = vlaneseq
  %v1573 = vshrl.u32 %v1572, 7
  %v1574 = vsub.s32 3, %v1573
  %v1575 = vrot.slane %v1555, %v1574
  %v1576 = vlaneseq
  %v1577 = vshrl.u32 %v1576, 7
  %v1578 = vsub.s32 3, %v1577
  %v1579 = vrot.slane %v1559, %v1578
  %v1580 = vlaneseq
  %v1581 = vshrl.u32 %v1580, 7
  %v1582 = vsub.s32 3, %v1581
  %v1583 = vrot.slane %v1563, %v1582
  %v1584 = vlaneseq
  %v1585 = vshrl.u32 %v1584, 7
  %v1586 = vsub.s32 3, %v1585
  %v1587 = vrot.slane %v1567, %v1586
  %v1588 = vmul.f32 %v1550, %v1575
  %v1589 = vmul.f32 %v1550, %v1579
  %v1590 = vmul.f32 %v1550, %v1583
  %v1591 = vmul.f32 %v1550, %v1587
  %v1592 = vadd.f32 %v1532, %v1588
  %v1593 = vadd.f32 %v1533, %v1589
  %v1594 = vadd.f32 %v1534, %v1590
  %v1595 = vadd.f32 %v1535, %v1591
  %1596 = vset.pattern.permute.xlu0 19
  %1597 = vperm.xlu0 %1596, %v32
  %v1598 = vpop.permute.xlu0 %1597
  %v1600 = vmul.f32 %v1598, %v1575
  %v1601 = vmul.f32 %v1598, %v1579
  %v1602 = vmul.f32 %v1598, %v1583
  %v1603 = vmul.f32 %v1598, %v1587
  %v1604 = vadd.f32 %v1544, %v1600
  %v1605 = vadd.f32 %v1545, %v1601
  %v1606 = vadd.f32 %v1546, %v1602
  %v1607 = vadd.f32 %v1547, %v1603
  %1608 = vrot.lane.b32.xlu0 %v29, 127
  %v1609 = vpop.permute.xlu0 %1608
  %1610 = vrot.lane.b32.xlu0 %v138, 127
  %v1611 = vpop.permute.xlu0 %1610
  %1612 = vrot.lane.b32.xlu0 %v30, 127
  %v1613 = vpop.permute.xlu0 %1612
  %1614 = vrot.lane.b32.xlu0 %v139, 127
  %v1615 = vpop.permute.xlu0 %1614
  %vm1616 = vcmp.lt.s32.totalorder %v36, 127
  %v1617 = vsel %vm1616, %v1613, %v1615
  %v1618 = vsel %vm1616, %v1611, %v1613
  %v1619 = vsel %vm1616, %v1609, %v1611
  %v1620 = vsel %vm1616, %v1615, %v1609
  %v1621 = vadd.s32 %v84, 1
  %v1622 = vadd.s32 %v85, 1
  %v1623 = vadd.s32 %v86, 1
  %v1624 = vadd.s32 %v87, 1
  %vm1625 = vcmp.ge.s32.totalorder %v1621, 0
  %vm1626 = vcmp.ge.s32.totalorder %v1622, 0
  %vm1627 = vcmp.ge.s32.totalorder %v1623, 0
  %vm1628 = vcmp.ge.s32.totalorder %v1624, 0
  %vm1629 = vcmp.lt.s32.totalorder %v1621, 16
  %vm1630 = vcmp.lt.s32.totalorder %v1622, 16
  %vm1631 = vcmp.lt.s32.totalorder %v1623, 16
  %vm1632 = vcmp.lt.s32.totalorder %v1624, 16
  %vm1633 = vmand %vm1625, %vm1629
  %vm1634 = vmand %vm1626, %vm1630
  %vm1635 = vmand %vm1627, %vm1631
  %vm1636 = vmand %vm1628, %vm1632
  %v1637 = vsel %vm1633, 1, 0
  %v1638 = vsel %vm1634, 1, 0
  %v1639 = vsel %vm1635, 1, 0
  %v1640 = vsel %vm1636, 1, 0
  %vm1641 = vcmp.eq.s32.totalorder %v1637, 1
  %vm1642 = vcmp.eq.s32.totalorder %v1638, 1
  %vm1643 = vcmp.eq.s32.totalorder %v1639, 1
  %vm1644 = vcmp.eq.s32.totalorder %v1640, 1
  %v1645 = vsel %vm1641, %v1619, 0.0
  %v1646 = vsel %vm1642, %v1618, 0.0
  %v1647 = vsel %vm1643, %v1617, 0.0
  %v1648 = vsel %vm1644, %v1620, 0.0
  %1649 = vrot.lane.b32.xlu0 %v29, 112
  %v1650 = vpop.permute.xlu0 %1649
  %1651 = vrot.lane.b32.xlu0 %v138, 112
  %v1652 = vpop.permute.xlu0 %1651
  %1653 = vrot.lane.b32.xlu0 %v30, 112
  %v1654 = vpop.permute.xlu0 %1653
  %1655 = vrot.lane.b32.xlu0 %v139, 112
  %v1656 = vpop.permute.xlu0 %1655
  %vm1657 = vcmp.lt.s32.totalorder %v36, 112
  %v1658 = vsel %vm1657, %v1654, %v1656
  %v1659 = vsel %vm1657, %v1652, %v1654
  %v1660 = vsel %vm1657, %v1650, %v1652
  %v1661 = vsel %vm1657, %v1656, %v1650
  %v1662 = vadd.s32 %v132, 16
  %v1663 = vadd.s32 %v133, 16
  %v1664 = vadd.s32 %v134, 16
  %v1665 = vadd.s32 %v135, 16
  %vm1666 = vcmp.ge.s32.totalorder %v1662, 0
  %vm1667 = vcmp.ge.s32.totalorder %v1663, 0
  %vm1668 = vcmp.ge.s32.totalorder %v1664, 0
  %vm1669 = vcmp.ge.s32.totalorder %v1665, 0
  %vm1670 = vcmp.lt.s32.totalorder %v1662, 256
  %vm1671 = vcmp.lt.s32.totalorder %v1663, 256
  %vm1672 = vcmp.lt.s32.totalorder %v1664, 256
  %vm1673 = vcmp.lt.s32.totalorder %v1665, 256
  %vm1674 = vmand %vm1666, %vm1670
  %vm1675 = vmand %vm1667, %vm1671
  %vm1676 = vmand %vm1668, %vm1672
  %vm1677 = vmand %vm1669, %vm1673
  %v1678 = vsel %vm1674, 1, 0
  %v1679 = vsel %vm1675, 1, 0
  %v1680 = vsel %vm1676, 1, 0
  %v1681 = vsel %vm1677, 1, 0
  %vm1682 = vcmp.eq.s32.totalorder %v1678, 1
  %vm1683 = vcmp.eq.s32.totalorder %v1679, 1
  %vm1684 = vcmp.eq.s32.totalorder %v1680, 1
  %vm1685 = vcmp.eq.s32.totalorder %v1681, 1
  %v1686 = vsel %vm1682, %v1660, 0.0
  %v1687 = vsel %vm1683, %v1659, 0.0
  %v1688 = vsel %vm1684, %v1658, 0.0
  %v1689 = vsel %vm1685, %v1661, 0.0
  %1690 = vset.pattern.permute.xlu0 20
  %1691 = vperm.xlu0 %1690, %v31
  %v1692 = vpop.permute.xlu0 %1691
  %v1694 = vlaneseq
  %v1695 = vshrl.u32 %v1694, 7
  %v1696 = vsub.s32 0, %v1695
  %v1697 = vrot.slane %v1645, %v1696
  %v1698 = vlaneseq
  %v1699 = vshrl.u32 %v1698, 7
  %v1700 = vsub.s32 0, %v1699
  %v1701 = vrot.slane %v1646, %v1700
  %v1702 = vlaneseq
  %v1703 = vshrl.u32 %v1702, 7
  %v1704 = vsub.s32 0, %v1703
  %v1705 = vrot.slane %v1647, %v1704
  %v1706 = vlaneseq
  %v1707 = vshrl.u32 %v1706, 7
  %v1708 = vsub.s32 0, %v1707
  %v1709 = vrot.slane %v1648, %v1708
  %v1710 = vmul.f32 %v1692, %v1697
  %v1711 = vmul.f32 %v1692, %v1701
  %v1712 = vmul.f32 %v1692, %v1705
  %v1713 = vmul.f32 %v1692, %v1709
  %v1714 = vadd.f32 %v1592, %v1710
  %v1715 = vadd.f32 %v1593, %v1711
  %v1716 = vadd.f32 %v1594, %v1712
  %v1717 = vadd.f32 %v1595, %v1713
  %1718 = vset.pattern.permute.xlu0 20
  %1719 = vperm.xlu0 %1718, %v32
  %v1720 = vpop.permute.xlu0 %1719
  %v1722 = vlaneseq
  %v1723 = vshrl.u32 %v1722, 7
  %v1724 = vsub.s32 0, %v1723
  %v1725 = vrot.slane %v1686, %v1724
  %v1726 = vlaneseq
  %v1727 = vshrl.u32 %v1726, 7
  %v1728 = vsub.s32 0, %v1727
  %v1729 = vrot.slane %v1687, %v1728
  %v1730 = vlaneseq
  %v1731 = vshrl.u32 %v1730, 7
  %v1732 = vsub.s32 0, %v1731
  %v1733 = vrot.slane %v1688, %v1732
  %v1734 = vlaneseq
  %v1735 = vshrl.u32 %v1734, 7
  %v1736 = vsub.s32 0, %v1735
  %v1737 = vrot.slane %v1689, %v1736
  %v1738 = vmul.f32 %v1720, %v1725
  %v1739 = vmul.f32 %v1720, %v1729
  %v1740 = vmul.f32 %v1720, %v1733
  %v1741 = vmul.f32 %v1720, %v1737
  %v1742 = vadd.f32 %v1604, %v1738
  %v1743 = vadd.f32 %v1605, %v1739
  %v1744 = vadd.f32 %v1606, %v1740
  %v1745 = vadd.f32 %v1607, %v1741
  %1746 = vset.pattern.permute.xlu0 21
  %1747 = vperm.xlu0 %1746, %v31
  %v1748 = vpop.permute.xlu0 %1747
  %v1750 = vlaneseq
  %v1751 = vshrl.u32 %v1750, 7
  %v1752 = vsub.s32 1, %v1751
  %v1753 = vrot.slane %v1645, %v1752
  %v1754 = vlaneseq
  %v1755 = vshrl.u32 %v1754, 7
  %v1756 = vsub.s32 1, %v1755
  %v1757 = vrot.slane %v1646, %v1756
  %v1758 = vlaneseq
  %v1759 = vshrl.u32 %v1758, 7
  %v1760 = vsub.s32 1, %v1759
  %v1761 = vrot.slane %v1647, %v1760
  %v1762 = vlaneseq
  %v1763 = vshrl.u32 %v1762, 7
  %v1764 = vsub.s32 1, %v1763
  %v1765 = vrot.slane %v1648, %v1764
  %v1766 = vmul.f32 %v1748, %v1753
  %v1767 = vmul.f32 %v1748, %v1757
  %v1768 = vmul.f32 %v1748, %v1761
  %v1769 = vmul.f32 %v1748, %v1765
  %v1770 = vadd.f32 %v1714, %v1766
  %v1771 = vadd.f32 %v1715, %v1767
  %v1772 = vadd.f32 %v1716, %v1768
  %v1773 = vadd.f32 %v1717, %v1769
  %1774 = vset.pattern.permute.xlu0 21
  %1775 = vperm.xlu0 %1774, %v32
  %v1776 = vpop.permute.xlu0 %1775
  %v1778 = vlaneseq
  %v1779 = vshrl.u32 %v1778, 7
  %v1780 = vsub.s32 1, %v1779
  %v1781 = vrot.slane %v1686, %v1780
  %v1782 = vlaneseq
  %v1783 = vshrl.u32 %v1782, 7
  %v1784 = vsub.s32 1, %v1783
  %v1785 = vrot.slane %v1687, %v1784
  %v1786 = vlaneseq
  %v1787 = vshrl.u32 %v1786, 7
  %v1788 = vsub.s32 1, %v1787
  %v1789 = vrot.slane %v1688, %v1788
  %v1790 = vlaneseq
  %v1791 = vshrl.u32 %v1790, 7
  %v1792 = vsub.s32 1, %v1791
  %v1793 = vrot.slane %v1689, %v1792
  %v1794 = vmul.f32 %v1776, %v1781
  %v1795 = vmul.f32 %v1776, %v1785
  %v1796 = vmul.f32 %v1776, %v1789
  %v1797 = vmul.f32 %v1776, %v1793
  %v1798 = vadd.f32 %v1742, %v1794
  %v1799 = vadd.f32 %v1743, %v1795
  %v1800 = vadd.f32 %v1744, %v1796
  %v1801 = vadd.f32 %v1745, %v1797
  %1802 = vset.pattern.permute.xlu0 22
  %1803 = vperm.xlu0 %1802, %v31
  %v1804 = vpop.permute.xlu0 %1803
  %v1806 = vlaneseq
  %v1807 = vshrl.u32 %v1806, 7
  %v1808 = vsub.s32 2, %v1807
  %v1809 = vrot.slane %v1645, %v1808
  %v1810 = vlaneseq
  %v1811 = vshrl.u32 %v1810, 7
  %v1812 = vsub.s32 2, %v1811
  %v1813 = vrot.slane %v1646, %v1812
  %v1814 = vlaneseq
  %v1815 = vshrl.u32 %v1814, 7
  %v1816 = vsub.s32 2, %v1815
  %v1817 = vrot.slane %v1647, %v1816
  %v1818 = vlaneseq
  %v1819 = vshrl.u32 %v1818, 7
  %v1820 = vsub.s32 2, %v1819
  %v1821 = vrot.slane %v1648, %v1820
  %v1822 = vmul.f32 %v1804, %v1809
  %v1823 = vmul.f32 %v1804, %v1813
  %v1824 = vmul.f32 %v1804, %v1817
  %v1825 = vmul.f32 %v1804, %v1821
  %v1826 = vadd.f32 %v1770, %v1822
  %v1827 = vadd.f32 %v1771, %v1823
  %v1828 = vadd.f32 %v1772, %v1824
  %v1829 = vadd.f32 %v1773, %v1825
  %1830 = vset.pattern.permute.xlu0 22
  %1831 = vperm.xlu0 %1830, %v32
  %v1832 = vpop.permute.xlu0 %1831
  %v1834 = vlaneseq
  %v1835 = vshrl.u32 %v1834, 7
  %v1836 = vsub.s32 2, %v1835
  %v1837 = vrot.slane %v1686, %v1836
  %v1838 = vlaneseq
  %v1839 = vshrl.u32 %v1838, 7
  %v1840 = vsub.s32 2, %v1839
  %v1841 = vrot.slane %v1687, %v1840
  %v1842 = vlaneseq
  %v1843 = vshrl.u32 %v1842, 7
  %v1844 = vsub.s32 2, %v1843
  %v1845 = vrot.slane %v1688, %v1844
  %v1846 = vlaneseq
  %v1847 = vshrl.u32 %v1846, 7
  %v1848 = vsub.s32 2, %v1847
  %v1849 = vrot.slane %v1689, %v1848
  %v1850 = vmul.f32 %v1832, %v1837
  %v1851 = vmul.f32 %v1832, %v1841
  %v1852 = vmul.f32 %v1832, %v1845
  %v1853 = vmul.f32 %v1832, %v1849
  %v1854 = vadd.f32 %v1798, %v1850
  %v1855 = vadd.f32 %v1799, %v1851
  %v1856 = vadd.f32 %v1800, %v1852
  %v1857 = vadd.f32 %v1801, %v1853
  %1858 = vset.pattern.permute.xlu0 23
  %1859 = vperm.xlu0 %1858, %v31
  %v1860 = vpop.permute.xlu0 %1859
  %v1862 = vlaneseq
  %v1863 = vshrl.u32 %v1862, 7
  %v1864 = vsub.s32 3, %v1863
  %v1865 = vrot.slane %v1645, %v1864
  %v1866 = vlaneseq
  %v1867 = vshrl.u32 %v1866, 7
  %v1868 = vsub.s32 3, %v1867
  %v1869 = vrot.slane %v1646, %v1868
  %v1870 = vlaneseq
  %v1871 = vshrl.u32 %v1870, 7
  %v1872 = vsub.s32 3, %v1871
  %v1873 = vrot.slane %v1647, %v1872
  %v1874 = vlaneseq
  %v1875 = vshrl.u32 %v1874, 7
  %v1876 = vsub.s32 3, %v1875
  %v1877 = vrot.slane %v1648, %v1876
  %v1878 = vmul.f32 %v1860, %v1865
  %v1879 = vmul.f32 %v1860, %v1869
  %v1880 = vmul.f32 %v1860, %v1873
  %v1881 = vmul.f32 %v1860, %v1877
  %v1882 = vadd.f32 %v1826, %v1878
  %v1883 = vadd.f32 %v1827, %v1879
  %v1884 = vadd.f32 %v1828, %v1880
  %v1885 = vadd.f32 %v1829, %v1881
  %1886 = vset.pattern.permute.xlu0 23
  %1887 = vperm.xlu0 %1886, %v32
  %v1888 = vpop.permute.xlu0 %1887
  %v1890 = vlaneseq
  %v1891 = vshrl.u32 %v1890, 7
  %v1892 = vsub.s32 3, %v1891
  %v1893 = vrot.slane %v1686, %v1892
  %v1894 = vlaneseq
  %v1895 = vshrl.u32 %v1894, 7
  %v1896 = vsub.s32 3, %v1895
  %v1897 = vrot.slane %v1687, %v1896
  %v1898 = vlaneseq
  %v1899 = vshrl.u32 %v1898, 7
  %v1900 = vsub.s32 3, %v1899
  %v1901 = vrot.slane %v1688, %v1900
  %v1902 = vlaneseq
  %v1903 = vshrl.u32 %v1902, 7
  %v1904 = vsub.s32 3, %v1903
  %v1905 = vrot.slane %v1689, %v1904
  %v1906 = vmul.f32 %v1888, %v1893
  %v1907 = vmul.f32 %v1888, %v1897
  %v1908 = vmul.f32 %v1888, %v1901
  %v1909 = vmul.f32 %v1888, %v1905
  %v1910 = vadd.f32 %v1854, %v1906
  %v1911 = vadd.f32 %v1855, %v1907
  %v1912 = vadd.f32 %v1856, %v1908
  %v1913 = vadd.f32 %v1857, %v1909
  %1914 = vrot.lane.b32.xlu0 %v29, 126
  %v1915 = vpop.permute.xlu0 %1914
  %1916 = vrot.lane.b32.xlu0 %v138, 126
  %v1917 = vpop.permute.xlu0 %1916
  %1918 = vrot.lane.b32.xlu0 %v30, 126
  %v1919 = vpop.permute.xlu0 %1918
  %1920 = vrot.lane.b32.xlu0 %v139, 126
  %v1921 = vpop.permute.xlu0 %1920
  %vm1922 = vcmp.lt.s32.totalorder %v36, 126
  %v1923 = vsel %vm1922, %v1919, %v1921
  %v1924 = vsel %vm1922, %v1917, %v1919
  %v1925 = vsel %vm1922, %v1915, %v1917
  %v1926 = vsel %vm1922, %v1921, %v1915
  %v1927 = vadd.s32 %v84, 2
  %v1928 = vadd.s32 %v85, 2
  %v1929 = vadd.s32 %v86, 2
  %v1930 = vadd.s32 %v87, 2
  %vm1931 = vcmp.ge.s32.totalorder %v1927, 0
  %vm1932 = vcmp.ge.s32.totalorder %v1928, 0
  %vm1933 = vcmp.ge.s32.totalorder %v1929, 0
  %vm1934 = vcmp.ge.s32.totalorder %v1930, 0
  %vm1935 = vcmp.lt.s32.totalorder %v1927, 16
  %vm1936 = vcmp.lt.s32.totalorder %v1928, 16
  %vm1937 = vcmp.lt.s32.totalorder %v1929, 16
  %vm1938 = vcmp.lt.s32.totalorder %v1930, 16
  %vm1939 = vmand %vm1931, %vm1935
  %vm1940 = vmand %vm1932, %vm1936
  %vm1941 = vmand %vm1933, %vm1937
  %vm1942 = vmand %vm1934, %vm1938
  %v1943 = vsel %vm1939, 1, 0
  %v1944 = vsel %vm1940, 1, 0
  %v1945 = vsel %vm1941, 1, 0
  %v1946 = vsel %vm1942, 1, 0
  %vm1947 = vcmp.eq.s32.totalorder %v1943, 1
  %vm1948 = vcmp.eq.s32.totalorder %v1944, 1
  %vm1949 = vcmp.eq.s32.totalorder %v1945, 1
  %vm1950 = vcmp.eq.s32.totalorder %v1946, 1
  %v1951 = vsel %vm1947, %v1925, 0.0
  %v1952 = vsel %vm1948, %v1924, 0.0
  %v1953 = vsel %vm1949, %v1923, 0.0
  %v1954 = vsel %vm1950, %v1926, 0.0
  %1955 = vrot.lane.b32.xlu0 %v29, 96
  %v1956 = vpop.permute.xlu0 %1955
  %1957 = vrot.lane.b32.xlu0 %v138, 96
  %v1958 = vpop.permute.xlu0 %1957
  %1959 = vrot.lane.b32.xlu0 %v30, 96
  %v1960 = vpop.permute.xlu0 %1959
  %1961 = vrot.lane.b32.xlu0 %v139, 96
  %v1962 = vpop.permute.xlu0 %1961
  %vm1963 = vcmp.lt.s32.totalorder %v36, 96
  %v1964 = vsel %vm1963, %v1960, %v1962
  %v1965 = vsel %vm1963, %v1958, %v1960
  %v1966 = vsel %vm1963, %v1956, %v1958
  %v1967 = vsel %vm1963, %v1962, %v1956
  %v1968 = vadd.s32 %v132, 32
  %v1969 = vadd.s32 %v133, 32
  %v1970 = vadd.s32 %v134, 32
  %v1971 = vadd.s32 %v135, 32
  %vm1972 = vcmp.ge.s32.totalorder %v1968, 0
  %vm1973 = vcmp.ge.s32.totalorder %v1969, 0
  %vm1974 = vcmp.ge.s32.totalorder %v1970, 0
  %vm1975 = vcmp.ge.s32.totalorder %v1971, 0
  %vm1976 = vcmp.lt.s32.totalorder %v1968, 256
  %vm1977 = vcmp.lt.s32.totalorder %v1969, 256
  %vm1978 = vcmp.lt.s32.totalorder %v1970, 256
  %vm1979 = vcmp.lt.s32.totalorder %v1971, 256
  %vm1980 = vmand %vm1972, %vm1976
  %vm1981 = vmand %vm1973, %vm1977
  %vm1982 = vmand %vm1974, %vm1978
  %vm1983 = vmand %vm1975, %vm1979
  %v1984 = vsel %vm1980, 1, 0
  %v1985 = vsel %vm1981, 1, 0
  %v1986 = vsel %vm1982, 1, 0
  %v1987 = vsel %vm1983, 1, 0
  %vm1988 = vcmp.eq.s32.totalorder %v1984, 1
  %vm1989 = vcmp.eq.s32.totalorder %v1985, 1
  %vm1990 = vcmp.eq.s32.totalorder %v1986, 1
  %vm1991 = vcmp.eq.s32.totalorder %v1987, 1
  %v1992 = vsel %vm1988, %v1966, 0.0
  %v1993 = vsel %vm1989, %v1965, 0.0
  %v1994 = vsel %vm1990, %v1964, 0.0
  %v1995 = vsel %vm1991, %v1967, 0.0
  %1996 = vset.pattern.permute.xlu0 24
  %1997 = vperm.xlu0 %1996, %v31
  %v1998 = vpop.permute.xlu0 %1997
  %v2000 = vlaneseq
  %v2001 = vshrl.u32 %v2000, 7
  %v2002 = vsub.s32 0, %v2001
  %v2003 = vrot.slane %v1951, %v2002
  %v2004 = vlaneseq
  %v2005 = vshrl.u32 %v2004, 7
  %v2006 = vsub.s32 0, %v2005
  %v2007 = vrot.slane %v1952, %v2006
  %v2008 = vlaneseq
  %v2009 = vshrl.u32 %v2008, 7
  %v2010 = vsub.s32 0, %v2009
  %v2011 = vrot.slane %v1953, %v2010
  %v2012 = vlaneseq
  %v2013 = vshrl.u32 %v2012, 7
  %v2014 = vsub.s32 0, %v2013
  %v2015 = vrot.slane %v1954, %v2014
  %v2016 = vmul.f32 %v1998, %v2003
  %v2017 = vmul.f32 %v1998, %v2007
  %v2018 = vmul.f32 %v1998, %v2011
  %v2019 = vmul.f32 %v1998, %v2015
  %v2020 = vadd.f32 %v1882, %v2016
  %v2021 = vadd.f32 %v1883, %v2017
  %v2022 = vadd.f32 %v1884, %v2018
  %v2023 = vadd.f32 %v1885, %v2019
  %2024 = vset.pattern.permute.xlu0 24
  %2025 = vperm.xlu0 %2024, %v32
  %v2026 = vpop.permute.xlu0 %2025
  %v2028 = vlaneseq
  %v2029 = vshrl.u32 %v2028, 7
  %v2030 = vsub.s32 0, %v2029
  %v2031 = vrot.slane %v1992, %v2030
  %v2032 = vlaneseq
  %v2033 = vshrl.u32 %v2032, 7
  %v2034 = vsub.s32 0, %v2033
  %v2035 = vrot.slane %v1993, %v2034
  %v2036 = vlaneseq
  %v2037 = vshrl.u32 %v2036, 7
  %v2038 = vsub.s32 0, %v2037
  %v2039 = vrot.slane %v1994, %v2038
  %v2040 = vlaneseq
  %v2041 = vshrl.u32 %v2040, 7
  %v2042 = vsub.s32 0, %v2041
  %v2043 = vrot.slane %v1995, %v2042
  %v2044 = vmul.f32 %v2026, %v2031
  %v2045 = vmul.f32 %v2026, %v2035
  %v2046 = vmul.f32 %v2026, %v2039
  %v2047 = vmul.f32 %v2026, %v2043
  %v2048 = vadd.f32 %v1910, %v2044
  %v2049 = vadd.f32 %v1911, %v2045
  %v2050 = vadd.f32 %v1912, %v2046
  %v2051 = vadd.f32 %v1913, %v2047
  %2052 = vset.pattern.permute.xlu0 25
  %2053 = vperm.xlu0 %2052, %v31
  %v2054 = vpop.permute.xlu0 %2053
  %v2056 = vlaneseq
  %v2057 = vshrl.u32 %v2056, 7
  %v2058 = vsub.s32 1, %v2057
  %v2059 = vrot.slane %v1951, %v2058
  %v2060 = vlaneseq
  %v2061 = vshrl.u32 %v2060, 7
  %v2062 = vsub.s32 1, %v2061
  %v2063 = vrot.slane %v1952, %v2062
  %v2064 = vlaneseq
  %v2065 = vshrl.u32 %v2064, 7
  %v2066 = vsub.s32 1, %v2065
  %v2067 = vrot.slane %v1953, %v2066
  %v2068 = vlaneseq
  %v2069 = vshrl.u32 %v2068, 7
  %v2070 = vsub.s32 1, %v2069
  %v2071 = vrot.slane %v1954, %v2070
  %v2072 = vmul.f32 %v2054, %v2059
  %v2073 = vmul.f32 %v2054, %v2063
  %v2074 = vmul.f32 %v2054, %v2067
  %v2075 = vmul.f32 %v2054, %v2071
  %v2076 = vadd.f32 %v2020, %v2072
  %v2077 = vadd.f32 %v2021, %v2073
  %v2078 = vadd.f32 %v2022, %v2074
  %v2079 = vadd.f32 %v2023, %v2075
  %2080 = vset.pattern.permute.xlu0 25
  %2081 = vperm.xlu0 %2080, %v32
  %v2082 = vpop.permute.xlu0 %2081
  %v2084 = vlaneseq
  %v2085 = vshrl.u32 %v2084, 7
  %v2086 = vsub.s32 1, %v2085
  %v2087 = vrot.slane %v1992, %v2086
  %v2088 = vlaneseq
  %v2089 = vshrl.u32 %v2088, 7
  %v2090 = vsub.s32 1, %v2089
  %v2091 = vrot.slane %v1993, %v2090
  %v2092 = vlaneseq
  %v2093 = vshrl.u32 %v2092, 7
  %v2094 = vsub.s32 1, %v2093
  %v2095 = vrot.slane %v1994, %v2094
  %v2096 = vlaneseq
  %v2097 = vshrl.u32 %v2096, 7
  %v2098 = vsub.s32 1, %v2097
  %v2099 = vrot.slane %v1995, %v2098
  %v2100 = vmul.f32 %v2082, %v2087
  %v2101 = vmul.f32 %v2082, %v2091
  %v2102 = vmul.f32 %v2082, %v2095
  %v2103 = vmul.f32 %v2082, %v2099
  %v2104 = vadd.f32 %v2048, %v2100
  %v2105 = vadd.f32 %v2049, %v2101
  %v2106 = vadd.f32 %v2050, %v2102
  %v2107 = vadd.f32 %v2051, %v2103
  %2108 = vset.pattern.permute.xlu0 26
  %2109 = vperm.xlu0 %2108, %v31
  %v2110 = vpop.permute.xlu0 %2109
  %v2112 = vlaneseq
  %v2113 = vshrl.u32 %v2112, 7
  %v2114 = vsub.s32 2, %v2113
  %v2115 = vrot.slane %v1951, %v2114
  %v2116 = vlaneseq
  %v2117 = vshrl.u32 %v2116, 7
  %v2118 = vsub.s32 2, %v2117
  %v2119 = vrot.slane %v1952, %v2118
  %v2120 = vlaneseq
  %v2121 = vshrl.u32 %v2120, 7
  %v2122 = vsub.s32 2, %v2121
  %v2123 = vrot.slane %v1953, %v2122
  %v2124 = vlaneseq
  %v2125 = vshrl.u32 %v2124, 7
  %v2126 = vsub.s32 2, %v2125
  %v2127 = vrot.slane %v1954, %v2126
  %v2128 = vmul.f32 %v2110, %v2115
  %v2129 = vmul.f32 %v2110, %v2119
  %v2130 = vmul.f32 %v2110, %v2123
  %v2131 = vmul.f32 %v2110, %v2127
  %v2132 = vadd.f32 %v2076, %v2128
  %v2133 = vadd.f32 %v2077, %v2129
  %v2134 = vadd.f32 %v2078, %v2130
  %v2135 = vadd.f32 %v2079, %v2131
  %2136 = vset.pattern.permute.xlu0 26
  %2137 = vperm.xlu0 %2136, %v32
  %v2138 = vpop.permute.xlu0 %2137
  %v2140 = vlaneseq
  %v2141 = vshrl.u32 %v2140, 7
  %v2142 = vsub.s32 2, %v2141
  %v2143 = vrot.slane %v1992, %v2142
  %v2144 = vlaneseq
  %v2145 = vshrl.u32 %v2144, 7
  %v2146 = vsub.s32 2, %v2145
  %v2147 = vrot.slane %v1993, %v2146
  %v2148 = vlaneseq
  %v2149 = vshrl.u32 %v2148, 7
  %v2150 = vsub.s32 2, %v2149
  %v2151 = vrot.slane %v1994, %v2150
  %v2152 = vlaneseq
  %v2153 = vshrl.u32 %v2152, 7
  %v2154 = vsub.s32 2, %v2153
  %v2155 = vrot.slane %v1995, %v2154
  %v2156 = vmul.f32 %v2138, %v2143
  %v2157 = vmul.f32 %v2138, %v2147
  %v2158 = vmul.f32 %v2138, %v2151
  %v2159 = vmul.f32 %v2138, %v2155
  %v2160 = vadd.f32 %v2104, %v2156
  %v2161 = vadd.f32 %v2105, %v2157
  %v2162 = vadd.f32 %v2106, %v2158
  %v2163 = vadd.f32 %v2107, %v2159
  %2164 = vset.pattern.permute.xlu0 27
  %2165 = vperm.xlu0 %2164, %v31
  %v2166 = vpop.permute.xlu0 %2165
  %v2168 = vlaneseq
  %v2169 = vshrl.u32 %v2168, 7
  %v2170 = vsub.s32 3, %v2169
  %v2171 = vrot.slane %v1951, %v2170
  %v2172 = vlaneseq
  %v2173 = vshrl.u32 %v2172, 7
  %v2174 = vsub.s32 3, %v2173
  %v2175 = vrot.slane %v1952, %v2174
  %v2176 = vlaneseq
  %v2177 = vshrl.u32 %v2176, 7
  %v2178 = vsub.s32 3, %v2177
  %v2179 = vrot.slane %v1953, %v2178
  %v2180 = vlaneseq
  %v2181 = vshrl.u32 %v2180, 7
  %v2182 = vsub.s32 3, %v2181
  %v2183 = vrot.slane %v1954, %v2182
  %v2184 = vmul.f32 %v2166, %v2171
  %v2185 = vmul.f32 %v2166, %v2175
  %v2186 = vmul.f32 %v2166, %v2179
  %v2187 = vmul.f32 %v2166, %v2183
  %v2188 = vadd.f32 %v2132, %v2184
  %v2189 = vadd.f32 %v2133, %v2185
  %v2190 = vadd.f32 %v2134, %v2186
  %v2191 = vadd.f32 %v2135, %v2187
  %2192 = vset.pattern.permute.xlu0 27
  %2193 = vperm.xlu0 %2192, %v32
  %v2194 = vpop.permute.xlu0 %2193
  %v2196 = vlaneseq
  %v2197 = vshrl.u32 %v2196, 7
  %v2198 = vsub.s32 3, %v2197
  %v2199 = vrot.slane %v1992, %v2198
  %v2200 = vlaneseq
  %v2201 = vshrl.u32 %v2200, 7
  %v2202 = vsub.s32 3, %v2201
  %v2203 = vrot.slane %v1993, %v2202
  %v2204 = vlaneseq
  %v2205 = vshrl.u32 %v2204, 7
  %v2206 = vsub.s32 3, %v2205
  %v2207 = vrot.slane %v1994, %v2206
  %v2208 = vlaneseq
  %v2209 = vshrl.u32 %v2208, 7
  %v2210 = vsub.s32 3, %v2209
  %v2211 = vrot.slane %v1995, %v2210
  %v2212 = vmul.f32 %v2194, %v2199
  %v2213 = vmul.f32 %v2194, %v2203
  %v2214 = vmul.f32 %v2194, %v2207
  %v2215 = vmul.f32 %v2194, %v2211
  %v2216 = vadd.f32 %v2160, %v2212
  %v2217 = vadd.f32 %v2161, %v2213
  %v2218 = vadd.f32 %v2162, %v2214
  %v2219 = vadd.f32 %v2163, %v2215
  %2220 = vrot.lane.b32.xlu0 %v29, 125
  %v2221 = vpop.permute.xlu0 %2220
  %2222 = vrot.lane.b32.xlu0 %v138, 125
  %v2223 = vpop.permute.xlu0 %2222
  %2224 = vrot.lane.b32.xlu0 %v30, 125
  %v2225 = vpop.permute.xlu0 %2224
  %2226 = vrot.lane.b32.xlu0 %v139, 125
  %v2227 = vpop.permute.xlu0 %2226
  %vm2228 = vcmp.lt.s32.totalorder %v36, 125
  %v2229 = vsel %vm2228, %v2225, %v2227
  %v2230 = vsel %vm2228, %v2223, %v2225
  %v2231 = vsel %vm2228, %v2221, %v2223
  %v2232 = vsel %vm2228, %v2227, %v2221
  %v2233 = vadd.s32 %v84, 3
  %v2234 = vadd.s32 %v85, 3
  %v2235 = vadd.s32 %v86, 3
  %v2236 = vadd.s32 %v87, 3
  %vm2237 = vcmp.ge.s32.totalorder %v2233, 0
  %vm2238 = vcmp.ge.s32.totalorder %v2234, 0
  %vm2239 = vcmp.ge.s32.totalorder %v2235, 0
  %vm2240 = vcmp.ge.s32.totalorder %v2236, 0
  %vm2241 = vcmp.lt.s32.totalorder %v2233, 16
  %vm2242 = vcmp.lt.s32.totalorder %v2234, 16
  %vm2243 = vcmp.lt.s32.totalorder %v2235, 16
  %vm2244 = vcmp.lt.s32.totalorder %v2236, 16
  %vm2245 = vmand %vm2237, %vm2241
  %vm2246 = vmand %vm2238, %vm2242
  %vm2247 = vmand %vm2239, %vm2243
  %vm2248 = vmand %vm2240, %vm2244
  %v2249 = vsel %vm2245, 1, 0
  %v2250 = vsel %vm2246, 1, 0
  %v2251 = vsel %vm2247, 1, 0
  %v2252 = vsel %vm2248, 1, 0
  %vm2253 = vcmp.eq.s32.totalorder %v2249, 1
  %vm2254 = vcmp.eq.s32.totalorder %v2250, 1
  %vm2255 = vcmp.eq.s32.totalorder %v2251, 1
  %vm2256 = vcmp.eq.s32.totalorder %v2252, 1
  %v2257 = vsel %vm2253, %v2231, 0.0
  %v2258 = vsel %vm2254, %v2230, 0.0
  %v2259 = vsel %vm2255, %v2229, 0.0
  %v2260 = vsel %vm2256, %v2232, 0.0
  %2261 = vrot.lane.b32.xlu0 %v29, 80
  %v2262 = vpop.permute.xlu0 %2261
  %2263 = vrot.lane.b32.xlu0 %v138, 80
  %v2264 = vpop.permute.xlu0 %2263
  %2265 = vrot.lane.b32.xlu0 %v30, 80
  %v2266 = vpop.permute.xlu0 %2265
  %2267 = vrot.lane.b32.xlu0 %v139, 80
  %v2268 = vpop.permute.xlu0 %2267
  %vm2269 = vcmp.lt.s32.totalorder %v36, 80
  %v2270 = vsel %vm2269, %v2266, %v2268
  %v2271 = vsel %vm2269, %v2264, %v2266
  %v2272 = vsel %vm2269, %v2262, %v2264
  %v2273 = vsel %vm2269, %v2268, %v2262
  %v2274 = vadd.s32 %v132, 48
  %v2275 = vadd.s32 %v133, 48
  %v2276 = vadd.s32 %v134, 48
  %v2277 = vadd.s32 %v135, 48
  %vm2278 = vcmp.ge.s32.totalorder %v2274, 0
  %vm2279 = vcmp.ge.s32.totalorder %v2275, 0
  %vm2280 = vcmp.ge.s32.totalorder %v2276, 0
  %vm2281 = vcmp.ge.s32.totalorder %v2277, 0
  %vm2282 = vcmp.lt.s32.totalorder %v2274, 256
  %vm2283 = vcmp.lt.s32.totalorder %v2275, 256
  %vm2284 = vcmp.lt.s32.totalorder %v2276, 256
  %vm2285 = vcmp.lt.s32.totalorder %v2277, 256
  %vm2286 = vmand %vm2278, %vm2282
  %vm2287 = vmand %vm2279, %vm2283
  %vm2288 = vmand %vm2280, %vm2284
  %vm2289 = vmand %vm2281, %vm2285
  %v2290 = vsel %vm2286, 1, 0
  %v2291 = vsel %vm2287, 1, 0
  %v2292 = vsel %vm2288, 1, 0
  %v2293 = vsel %vm2289, 1, 0
  %vm2294 = vcmp.eq.s32.totalorder %v2290, 1
  %vm2295 = vcmp.eq.s32.totalorder %v2291, 1
  %vm2296 = vcmp.eq.s32.totalorder %v2292, 1
  %vm2297 = vcmp.eq.s32.totalorder %v2293, 1
  %v2298 = vsel %vm2294, %v2272, 0.0
  %v2299 = vsel %vm2295, %v2271, 0.0
  %v2300 = vsel %vm2296, %v2270, 0.0
  %v2301 = vsel %vm2297, %v2273, 0.0
  %2302 = vset.pattern.permute.xlu0 28
  %2303 = vperm.xlu0 %2302, %v31
  %v2304 = vpop.permute.xlu0 %2303
  %v2306 = vlaneseq
  %v2307 = vshrl.u32 %v2306, 7
  %v2308 = vsub.s32 0, %v2307
  %v2309 = vrot.slane %v2257, %v2308
  %v2310 = vlaneseq
  %v2311 = vshrl.u32 %v2310, 7
  %v2312 = vsub.s32 0, %v2311
  %v2313 = vrot.slane %v2258, %v2312
  %v2314 = vlaneseq
  %v2315 = vshrl.u32 %v2314, 7
  %v2316 = vsub.s32 0, %v2315
  %v2317 = vrot.slane %v2259, %v2316
  %v2318 = vlaneseq
  %v2319 = vshrl.u32 %v2318, 7
  %v2320 = vsub.s32 0, %v2319
  %v2321 = vrot.slane %v2260, %v2320
  %v2322 = vmul.f32 %v2304, %v2309
  %v2323 = vmul.f32 %v2304, %v2313
  %v2324 = vmul.f32 %v2304, %v2317
  %v2325 = vmul.f32 %v2304, %v2321
  %v2326 = vadd.f32 %v2188, %v2322
  %v2327 = vadd.f32 %v2189, %v2323
  %v2328 = vadd.f32 %v2190, %v2324
  %v2329 = vadd.f32 %v2191, %v2325
  %2330 = vset.pattern.permute.xlu0 28
  %2331 = vperm.xlu0 %2330, %v32
  %v2332 = vpop.permute.xlu0 %2331
  %v2334 = vlaneseq
  %v2335 = vshrl.u32 %v2334, 7
  %v2336 = vsub.s32 0, %v2335
  %v2337 = vrot.slane %v2298, %v2336
  %v2338 = vlaneseq
  %v2339 = vshrl.u32 %v2338, 7
  %v2340 = vsub.s32 0, %v2339
  %v2341 = vrot.slane %v2299, %v2340
  %v2342 = vlaneseq
  %v2343 = vshrl.u32 %v2342, 7
  %v2344 = vsub.s32 0, %v2343
  %v2345 = vrot.slane %v2300, %v2344
  %v2346 = vlaneseq
  %v2347 = vshrl.u32 %v2346, 7
  %v2348 = vsub.s32 0, %v2347
  %v2349 = vrot.slane %v2301, %v2348
  %v2350 = vmul.f32 %v2332, %v2337
  %v2351 = vmul.f32 %v2332, %v2341
  %v2352 = vmul.f32 %v2332, %v2345
  %v2353 = vmul.f32 %v2332, %v2349
  %v2354 = vadd.f32 %v2216, %v2350
  %v2355 = vadd.f32 %v2217, %v2351
  %v2356 = vadd.f32 %v2218, %v2352
  %v2357 = vadd.f32 %v2219, %v2353
  %2358 = vset.pattern.permute.xlu0 29
  %2359 = vperm.xlu0 %2358, %v31
  %v2360 = vpop.permute.xlu0 %2359
  %v2362 = vlaneseq
  %v2363 = vshrl.u32 %v2362, 7
  %v2364 = vsub.s32 1, %v2363
  %v2365 = vrot.slane %v2257, %v2364
  %v2366 = vlaneseq
  %v2367 = vshrl.u32 %v2366, 7
  %v2368 = vsub.s32 1, %v2367
  %v2369 = vrot.slane %v2258, %v2368
  %v2370 = vlaneseq
  %v2371 = vshrl.u32 %v2370, 7
  %v2372 = vsub.s32 1, %v2371
  %v2373 = vrot.slane %v2259, %v2372
  %v2374 = vlaneseq
  %v2375 = vshrl.u32 %v2374, 7
  %v2376 = vsub.s32 1, %v2375
  %v2377 = vrot.slane %v2260, %v2376
  %v2378 = vmul.f32 %v2360, %v2365
  %v2379 = vmul.f32 %v2360, %v2369
  %v2380 = vmul.f32 %v2360, %v2373
  %v2381 = vmul.f32 %v2360, %v2377
  %v2382 = vadd.f32 %v2326, %v2378
  %v2383 = vadd.f32 %v2327, %v2379
  %v2384 = vadd.f32 %v2328, %v2380
  %v2385 = vadd.f32 %v2329, %v2381
  %2386 = vset.pattern.permute.xlu0 29
  %2387 = vperm.xlu0 %2386, %v32
  %v2388 = vpop.permute.xlu0 %2387
  %v2390 = vlaneseq
  %v2391 = vshrl.u32 %v2390, 7
  %v2392 = vsub.s32 1, %v2391
  %v2393 = vrot.slane %v2298, %v2392
  %v2394 = vlaneseq
  %v2395 = vshrl.u32 %v2394, 7
  %v2396 = vsub.s32 1, %v2395
  %v2397 = vrot.slane %v2299, %v2396
  %v2398 = vlaneseq
  %v2399 = vshrl.u32 %v2398, 7
  %v2400 = vsub.s32 1, %v2399
  %v2401 = vrot.slane %v2300, %v2400
  %v2402 = vlaneseq
  %v2403 = vshrl.u32 %v2402, 7
  %v2404 = vsub.s32 1, %v2403
  %v2405 = vrot.slane %v2301, %v2404
  %v2406 = vmul.f32 %v2388, %v2393
  %v2407 = vmul.f32 %v2388, %v2397
  %v2408 = vmul.f32 %v2388, %v2401
  %v2409 = vmul.f32 %v2388, %v2405
  %v2410 = vadd.f32 %v2354, %v2406
  %v2411 = vadd.f32 %v2355, %v2407
  %v2412 = vadd.f32 %v2356, %v2408
  %v2413 = vadd.f32 %v2357, %v2409
  %2414 = vset.pattern.permute.xlu0 30
  %2415 = vperm.xlu0 %2414, %v31
  %v2416 = vpop.permute.xlu0 %2415
  %v2418 = vlaneseq
  %v2419 = vshrl.u32 %v2418, 7
  %v2420 = vsub.s32 2, %v2419
  %v2421 = vrot.slane %v2257, %v2420
  %v2422 = vlaneseq
  %v2423 = vshrl.u32 %v2422, 7
  %v2424 = vsub.s32 2, %v2423
  %v2425 = vrot.slane %v2258, %v2424
  %v2426 = vlaneseq
  %v2427 = vshrl.u32 %v2426, 7
  %v2428 = vsub.s32 2, %v2427
  %v2429 = vrot.slane %v2259, %v2428
  %v2430 = vlaneseq
  %v2431 = vshrl.u32 %v2430, 7
  %v2432 = vsub.s32 2, %v2431
  %v2433 = vrot.slane %v2260, %v2432
  %v2434 = vmul.f32 %v2416, %v2421
  %v2435 = vmul.f32 %v2416, %v2425
  %v2436 = vmul.f32 %v2416, %v2429
  %v2437 = vmul.f32 %v2416, %v2433
  %v2438 = vadd.f32 %v2382, %v2434
  %v2439 = vadd.f32 %v2383, %v2435
  %v2440 = vadd.f32 %v2384, %v2436
  %v2441 = vadd.f32 %v2385, %v2437
  %2442 = vset.pattern.permute.xlu0 30
  %2443 = vperm.xlu0 %2442, %v32
  %v2444 = vpop.permute.xlu0 %2443
  %v2446 = vlaneseq
  %v2447 = vshrl.u32 %v2446, 7
  %v2448 = vsub.s32 2, %v2447
  %v2449 = vrot.slane %v2298, %v2448
  %v2450 = vlaneseq
  %v2451 = vshrl.u32 %v2450, 7
  %v2452 = vsub.s32 2, %v2451
  %v2453 = vrot.slane %v2299, %v2452
  %v2454 = vlaneseq
  %v2455 = vshrl.u32 %v2454, 7
  %v2456 = vsub.s32 2, %v2455
  %v2457 = vrot.slane %v2300, %v2456
  %v2458 = vlaneseq
  %v2459 = vshrl.u32 %v2458, 7
  %v2460 = vsub.s32 2, %v2459
  %v2461 = vrot.slane %v2301, %v2460
  %v2462 = vmul.f32 %v2444, %v2449
  %v2463 = vmul.f32 %v2444, %v2453
  %v2464 = vmul.f32 %v2444, %v2457
  %v2465 = vmul.f32 %v2444, %v2461
  %v2466 = vadd.f32 %v2410, %v2462
  %v2467 = vadd.f32 %v2411, %v2463
  %v2468 = vadd.f32 %v2412, %v2464
  %v2469 = vadd.f32 %v2413, %v2465
  %2470 = vset.pattern.permute.xlu0 31
  %2471 = vperm.xlu0 %2470, %v31
  %v2472 = vpop.permute.xlu0 %2471
  %v2474 = vlaneseq
  %v2475 = vshrl.u32 %v2474, 7
  %v2476 = vsub.s32 3, %v2475
  %v2477 = vrot.slane %v2257, %v2476
  %v2478 = vlaneseq
  %v2479 = vshrl.u32 %v2478, 7
  %v2480 = vsub.s32 3, %v2479
  %v2481 = vrot.slane %v2258, %v2480
  %v2482 = vlaneseq
  %v2483 = vshrl.u32 %v2482, 7
  %v2484 = vsub.s32 3, %v2483
  %v2485 = vrot.slane %v2259, %v2484
  %v2486 = vlaneseq
  %v2487 = vshrl.u32 %v2486, 7
  %v2488 = vsub.s32 3, %v2487
  %v2489 = vrot.slane %v2260, %v2488
  %v2490 = vmul.f32 %v2472, %v2477
  %v2491 = vmul.f32 %v2472, %v2481
  %v2492 = vmul.f32 %v2472, %v2485
  %v2493 = vmul.f32 %v2472, %v2489
  %v2494 = vadd.f32 %v2438, %v2490
  %v2495 = vadd.f32 %v2439, %v2491
  %v2496 = vadd.f32 %v2440, %v2492
  %v2497 = vadd.f32 %v2441, %v2493
  %2498 = vset.pattern.permute.xlu0 31
  %2499 = vperm.xlu0 %2498, %v32
  %v2500 = vpop.permute.xlu0 %2499
  %v2502 = vlaneseq
  %v2503 = vshrl.u32 %v2502, 7
  %v2504 = vsub.s32 3, %v2503
  %v2505 = vrot.slane %v2298, %v2504
  %v2506 = vlaneseq
  %v2507 = vshrl.u32 %v2506, 7
  %v2508 = vsub.s32 3, %v2507
  %v2509 = vrot.slane %v2299, %v2508
  %v2510 = vlaneseq
  %v2511 = vshrl.u32 %v2510, 7
  %v2512 = vsub.s32 3, %v2511
  %v2513 = vrot.slane %v2300, %v2512
  %v2514 = vlaneseq
  %v2515 = vshrl.u32 %v2514, 7
  %v2516 = vsub.s32 3, %v2515
  %v2517 = vrot.slane %v2301, %v2516
  %v2518 = vmul.f32 %v2500, %v2505
  %v2519 = vmul.f32 %v2500, %v2509
  %v2520 = vmul.f32 %v2500, %v2513
  %v2521 = vmul.f32 %v2500, %v2517
  %v2522 = vadd.f32 %v2466, %v2518
  %v2523 = vadd.f32 %v2467, %v2519
  %v2524 = vadd.f32 %v2468, %v2520
  %v2525 = vadd.f32 %v2469, %v2521
  %2526 = vrot.lane.b32.xlu0 %v29, 124
  %v2527 = vpop.permute.xlu0 %2526
  %2528 = vrot.lane.b32.xlu0 %v138, 124
  %v2529 = vpop.permute.xlu0 %2528
  %2530 = vrot.lane.b32.xlu0 %v30, 124
  %v2531 = vpop.permute.xlu0 %2530
  %2532 = vrot.lane.b32.xlu0 %v139, 124
  %v2533 = vpop.permute.xlu0 %2532
  %vm2534 = vcmp.lt.s32.totalorder %v36, 124
  %v2535 = vsel %vm2534, %v2531, %v2533
  %v2536 = vsel %vm2534, %v2529, %v2531
  %v2537 = vsel %vm2534, %v2527, %v2529
  %v2538 = vsel %vm2534, %v2533, %v2527
  %v2539 = vadd.s32 %v84, 4
  %v2540 = vadd.s32 %v85, 4
  %v2541 = vadd.s32 %v86, 4
  %v2542 = vadd.s32 %v87, 4
  %vm2543 = vcmp.ge.s32.totalorder %v2539, 0
  %vm2544 = vcmp.ge.s32.totalorder %v2540, 0
  %vm2545 = vcmp.ge.s32.totalorder %v2541, 0
  %vm2546 = vcmp.ge.s32.totalorder %v2542, 0
  %vm2547 = vcmp.lt.s32.totalorder %v2539, 16
  %vm2548 = vcmp.lt.s32.totalorder %v2540, 16
  %vm2549 = vcmp.lt.s32.totalorder %v2541, 16
  %vm2550 = vcmp.lt.s32.totalorder %v2542, 16
  %vm2551 = vmand %vm2543, %vm2547
  %vm2552 = vmand %vm2544, %vm2548
  %vm2553 = vmand %vm2545, %vm2549
  %vm2554 = vmand %vm2546, %vm2550
  %v2555 = vsel %vm2551, 1, 0
  %v2556 = vsel %vm2552, 1, 0
  %v2557 = vsel %vm2553, 1, 0
  %v2558 = vsel %vm2554, 1, 0
  %vm2559 = vcmp.eq.s32.totalorder %v2555, 1
  %vm2560 = vcmp.eq.s32.totalorder %v2556, 1
  %vm2561 = vcmp.eq.s32.totalorder %v2557, 1
  %vm2562 = vcmp.eq.s32.totalorder %v2558, 1
  %v2563 = vsel %vm2559, %v2537, 0.0
  %v2564 = vsel %vm2560, %v2536, 0.0
  %v2565 = vsel %vm2561, %v2535, 0.0
  %v2566 = vsel %vm2562, %v2538, 0.0
  %v2567 = vadd.s32 %v132, 64
  %v2568 = vadd.s32 %v133, 64
  %v2569 = vadd.s32 %v134, 64
  %v2570 = vadd.s32 %v135, 64
  %vm2571 = vcmp.ge.s32.totalorder %v2567, 0
  %vm2572 = vcmp.ge.s32.totalorder %v2568, 0
  %vm2573 = vcmp.ge.s32.totalorder %v2569, 0
  %vm2574 = vcmp.ge.s32.totalorder %v2570, 0
  %vm2575 = vcmp.lt.s32.totalorder %v2567, 256
  %vm2576 = vcmp.lt.s32.totalorder %v2568, 256
  %vm2577 = vcmp.lt.s32.totalorder %v2569, 256
  %vm2578 = vcmp.lt.s32.totalorder %v2570, 256
  %vm2579 = vmand %vm2571, %vm2575
  %vm2580 = vmand %vm2572, %vm2576
  %vm2581 = vmand %vm2573, %vm2577
  %vm2582 = vmand %vm2574, %vm2578
  %v2583 = vsel %vm2579, 1, 0
  %v2584 = vsel %vm2580, 1, 0
  %v2585 = vsel %vm2581, 1, 0
  %v2586 = vsel %vm2582, 1, 0
  %vm2587 = vcmp.eq.s32.totalorder %v2583, 1
  %vm2588 = vcmp.eq.s32.totalorder %v2584, 1
  %vm2589 = vcmp.eq.s32.totalorder %v2585, 1
  %vm2590 = vcmp.eq.s32.totalorder %v2586, 1
  %v2591 = vsel %vm2587, %v194, 0.0
  %v2592 = vsel %vm2588, %v193, 0.0
  %v2593 = vsel %vm2589, %v192, 0.0
  %v2594 = vsel %vm2590, %v195, 0.0
  %2595 = vset.pattern.permute.xlu0 32
  %2596 = vperm.xlu0 %2595, %v31
  %v2597 = vpop.permute.xlu0 %2596
  %v2599 = vlaneseq
  %v2600 = vshrl.u32 %v2599, 7
  %v2601 = vsub.s32 0, %v2600
  %v2602 = vrot.slane %v2563, %v2601
  %v2603 = vlaneseq
  %v2604 = vshrl.u32 %v2603, 7
  %v2605 = vsub.s32 0, %v2604
  %v2606 = vrot.slane %v2564, %v2605
  %v2607 = vlaneseq
  %v2608 = vshrl.u32 %v2607, 7
  %v2609 = vsub.s32 0, %v2608
  %v2610 = vrot.slane %v2565, %v2609
  %v2611 = vlaneseq
  %v2612 = vshrl.u32 %v2611, 7
  %v2613 = vsub.s32 0, %v2612
  %v2614 = vrot.slane %v2566, %v2613
  %v2615 = vmul.f32 %v2597, %v2602
  %v2616 = vmul.f32 %v2597, %v2606
  %v2617 = vmul.f32 %v2597, %v2610
  %v2618 = vmul.f32 %v2597, %v2614
  %v2619 = vadd.f32 %v2494, %v2615
  %v2620 = vadd.f32 %v2495, %v2616
  %v2621 = vadd.f32 %v2496, %v2617
  %v2622 = vadd.f32 %v2497, %v2618
  %2623 = vset.pattern.permute.xlu0 32
  %2624 = vperm.xlu0 %2623, %v32
  %v2625 = vpop.permute.xlu0 %2624
  %v2627 = vlaneseq
  %v2628 = vshrl.u32 %v2627, 7
  %v2629 = vsub.s32 0, %v2628
  %v2630 = vrot.slane %v2591, %v2629
  %v2631 = vlaneseq
  %v2632 = vshrl.u32 %v2631, 7
  %v2633 = vsub.s32 0, %v2632
  %v2634 = vrot.slane %v2592, %v2633
  %v2635 = vlaneseq
  %v2636 = vshrl.u32 %v2635, 7
  %v2637 = vsub.s32 0, %v2636
  %v2638 = vrot.slane %v2593, %v2637
  %v2639 = vlaneseq
  %v2640 = vshrl.u32 %v2639, 7
  %v2641 = vsub.s32 0, %v2640
  %v2642 = vrot.slane %v2594, %v2641
  %v2643 = vmul.f32 %v2625, %v2630
  %v2644 = vmul.f32 %v2625, %v2634
  %v2645 = vmul.f32 %v2625, %v2638
  %v2646 = vmul.f32 %v2625, %v2642
  %v2647 = vadd.f32 %v2522, %v2643
  %v2648 = vadd.f32 %v2523, %v2644
  %v2649 = vadd.f32 %v2524, %v2645
  %v2650 = vadd.f32 %v2525, %v2646
  %2651 = vset.pattern.permute.xlu0 33
  %2652 = vperm.xlu0 %2651, %v31
  %v2653 = vpop.permute.xlu0 %2652
  %v2655 = vlaneseq
  %v2656 = vshrl.u32 %v2655, 7
  %v2657 = vsub.s32 1, %v2656
  %v2658 = vrot.slane %v2563, %v2657
  %v2659 = vlaneseq
  %v2660 = vshrl.u32 %v2659, 7
  %v2661 = vsub.s32 1, %v2660
  %v2662 = vrot.slane %v2564, %v2661
  %v2663 = vlaneseq
  %v2664 = vshrl.u32 %v2663, 7
  %v2665 = vsub.s32 1, %v2664
  %v2666 = vrot.slane %v2565, %v2665
  %v2667 = vlaneseq
  %v2668 = vshrl.u32 %v2667, 7
  %v2669 = vsub.s32 1, %v2668
  %v2670 = vrot.slane %v2566, %v2669
  %v2671 = vmul.f32 %v2653, %v2658
  %v2672 = vmul.f32 %v2653, %v2662
  %v2673 = vmul.f32 %v2653, %v2666
  %v2674 = vmul.f32 %v2653, %v2670
  %v2675 = vadd.f32 %v2619, %v2671
  %v2676 = vadd.f32 %v2620, %v2672
  %v2677 = vadd.f32 %v2621, %v2673
  %v2678 = vadd.f32 %v2622, %v2674
  %2679 = vset.pattern.permute.xlu0 33
  %2680 = vperm.xlu0 %2679, %v32
  %v2681 = vpop.permute.xlu0 %2680
  %v2683 = vlaneseq
  %v2684 = vshrl.u32 %v2683, 7
  %v2685 = vsub.s32 1, %v2684
  %v2686 = vrot.slane %v2591, %v2685
  %v2687 = vlaneseq
  %v2688 = vshrl.u32 %v2687, 7
  %v2689 = vsub.s32 1, %v2688
  %v2690 = vrot.slane %v2592, %v2689
  %v2691 = vlaneseq
  %v2692 = vshrl.u32 %v2691, 7
  %v2693 = vsub.s32 1, %v2692
  %v2694 = vrot.slane %v2593, %v2693
  %v2695 = vlaneseq
  %v2696 = vshrl.u32 %v2695, 7
  %v2697 = vsub.s32 1, %v2696
  %v2698 = vrot.slane %v2594, %v2697
  %v2699 = vmul.f32 %v2681, %v2686
  %v2700 = vmul.f32 %v2681, %v2690
  %v2701 = vmul.f32 %v2681, %v2694
  %v2702 = vmul.f32 %v2681, %v2698
  %v2703 = vadd.f32 %v2647, %v2699
  %v2704 = vadd.f32 %v2648, %v2700
  %v2705 = vadd.f32 %v2649, %v2701
  %v2706 = vadd.f32 %v2650, %v2702
  %2707 = vset.pattern.permute.xlu0 34
  %2708 = vperm.xlu0 %2707, %v31
  %v2709 = vpop.permute.xlu0 %2708
  %v2711 = vlaneseq
  %v2712 = vshrl.u32 %v2711, 7
  %v2713 = vsub.s32 2, %v2712
  %v2714 = vrot.slane %v2563, %v2713
  %v2715 = vlaneseq
  %v2716 = vshrl.u32 %v2715, 7
  %v2717 = vsub.s32 2, %v2716
  %v2718 = vrot.slane %v2564, %v2717
  %v2719 = vlaneseq
  %v2720 = vshrl.u32 %v2719, 7
  %v2721 = vsub.s32 2, %v2720
  %v2722 = vrot.slane %v2565, %v2721
  %v2723 = vlaneseq
  %v2724 = vshrl.u32 %v2723, 7
  %v2725 = vsub.s32 2, %v2724
  %v2726 = vrot.slane %v2566, %v2725
  %v2727 = vmul.f32 %v2709, %v2714
  %v2728 = vmul.f32 %v2709, %v2718
  %v2729 = vmul.f32 %v2709, %v2722
  %v2730 = vmul.f32 %v2709, %v2726
  %v2731 = vadd.f32 %v2675, %v2727
  %v2732 = vadd.f32 %v2676, %v2728
  %v2733 = vadd.f32 %v2677, %v2729
  %v2734 = vadd.f32 %v2678, %v2730
  %2735 = vset.pattern.permute.xlu0 34
  %2736 = vperm.xlu0 %2735, %v32
  %v2737 = vpop.permute.xlu0 %2736
  %v2739 = vlaneseq
  %v2740 = vshrl.u32 %v2739, 7
  %v2741 = vsub.s32 2, %v2740
  %v2742 = vrot.slane %v2591, %v2741
  %v2743 = vlaneseq
  %v2744 = vshrl.u32 %v2743, 7
  %v2745 = vsub.s32 2, %v2744
  %v2746 = vrot.slane %v2592, %v2745
  %v2747 = vlaneseq
  %v2748 = vshrl.u32 %v2747, 7
  %v2749 = vsub.s32 2, %v2748
  %v2750 = vrot.slane %v2593, %v2749
  %v2751 = vlaneseq
  %v2752 = vshrl.u32 %v2751, 7
  %v2753 = vsub.s32 2, %v2752
  %v2754 = vrot.slane %v2594, %v2753
  %v2755 = vmul.f32 %v2737, %v2742
  %v2756 = vmul.f32 %v2737, %v2746
  %v2757 = vmul.f32 %v2737, %v2750
  %v2758 = vmul.f32 %v2737, %v2754
  %v2759 = vadd.f32 %v2703, %v2755
  %v2760 = vadd.f32 %v2704, %v2756
  %v2761 = vadd.f32 %v2705, %v2757
  %v2762 = vadd.f32 %v2706, %v2758
  %2763 = vset.pattern.permute.xlu0 35
  %2764 = vperm.xlu0 %2763, %v31
  %v2765 = vpop.permute.xlu0 %2764
  %v2767 = vlaneseq
  %v2768 = vshrl.u32 %v2767, 7
  %v2769 = vsub.s32 3, %v2768
  %v2770 = vrot.slane %v2563, %v2769
  %v2771 = vlaneseq
  %v2772 = vshrl.u32 %v2771, 7
  %v2773 = vsub.s32 3, %v2772
  %v2774 = vrot.slane %v2564, %v2773
  %v2775 = vlaneseq
  %v2776 = vshrl.u32 %v2775, 7
  %v2777 = vsub.s32 3, %v2776
  %v2778 = vrot.slane %v2565, %v2777
  %v2779 = vlaneseq
  %v2780 = vshrl.u32 %v2779, 7
  %v2781 = vsub.s32 3, %v2780
  %v2782 = vrot.slane %v2566, %v2781
  %v2783 = vmul.f32 %v2765, %v2770
  %v2784 = vmul.f32 %v2765, %v2774
  %v2785 = vmul.f32 %v2765, %v2778
  %v2786 = vmul.f32 %v2765, %v2782
  %v2787 = vadd.f32 %v2731, %v2783
  %v2788 = vadd.f32 %v2732, %v2784
  %v2789 = vadd.f32 %v2733, %v2785
  %v2790 = vadd.f32 %v2734, %v2786
  %2791 = vset.pattern.permute.xlu0 35
  %2792 = vperm.xlu0 %2791, %v32
  %v2793 = vpop.permute.xlu0 %2792
  %v2795 = vlaneseq
  %v2796 = vshrl.u32 %v2795, 7
  %v2797 = vsub.s32 3, %v2796
  %v2798 = vrot.slane %v2591, %v2797
  %v2799 = vlaneseq
  %v2800 = vshrl.u32 %v2799, 7
  %v2801 = vsub.s32 3, %v2800
  %v2802 = vrot.slane %v2592, %v2801
  %v2803 = vlaneseq
  %v2804 = vshrl.u32 %v2803, 7
  %v2805 = vsub.s32 3, %v2804
  %v2806 = vrot.slane %v2593, %v2805
  %v2807 = vlaneseq
  %v2808 = vshrl.u32 %v2807, 7
  %v2809 = vsub.s32 3, %v2808
  %v2810 = vrot.slane %v2594, %v2809
  %v2811 = vmul.f32 %v2793, %v2798
  %v2812 = vmul.f32 %v2793, %v2802
  %v2813 = vmul.f32 %v2793, %v2806
  %v2814 = vmul.f32 %v2793, %v2810
  %v2815 = vadd.f32 %v2759, %v2811
  %v2816 = vadd.f32 %v2760, %v2812
  %v2817 = vadd.f32 %v2761, %v2813
  %v2818 = vadd.f32 %v2762, %v2814
  %v2819 = vld [vmem:[%s5] sm:$0x3]
  %2821 = vset.pattern.permute.xlu0 0
  %2822 = vperm.xlu0 %2821, %v2819
  %v2823 = vpop.permute.xlu0 %2822
  %v2825 = vadd.f32 %v2787, %v2823
  %v2826 = vadd.f32 %v2788, %v2823
  %v2827 = vadd.f32 %v2789, %v2823
  %v2828 = vadd.f32 %v2790, %v2823
  %v2829 = vmax.f32 %v2825, 0.0
  %v2830 = vmax.f32 %v2826, 0.0
  %v2831 = vmax.f32 %v2827, 0.0
  %v2832 = vmax.f32 %v2828, 0.0
  %v2833 = vld [vmem:[%s6] sm:$0x3]
  %2835 = vset.pattern.permute.xlu0 0
  %2836 = vperm.xlu0 %2835, %v2833
  %v2837 = vpop.permute.xlu0 %2836
  %v2839 = vadd.f32 %v2815, %v2837
  %v2840 = vadd.f32 %v2816, %v2837
  %v2841 = vadd.f32 %v2817, %v2837
  %v2842 = vadd.f32 %v2818, %v2837
  %v2843 = vmax.f32 %v2839, 0.0
  %v2844 = vmax.f32 %v2840, 0.0
  %v2845 = vmax.f32 %v2841, 0.0
  %v2846 = vmax.f32 %v2842, 0.0
  %2847 = vrot.lane.b32.xlu0 %v2829, 64
  %v2848 = vpop.permute.xlu0 %2847
  %2849 = vrot.lane.b32.xlu0 %v2830, 64
  %v2850 = vpop.permute.xlu0 %2849
  %2851 = vrot.lane.b32.xlu0 %v2831, 64
  %v2852 = vpop.permute.xlu0 %2851
  %2853 = vrot.lane.b32.xlu0 %v2832, 64
  %v2854 = vpop.permute.xlu0 %2853
  %v2855 = vsel %vm191, %v2852, %v2854
  %v2856 = vsel %vm191, %v2850, %v2852
  %v2857 = vsel %vm191, %v2848, %v2850
  %v2858 = vsel %vm191, %v2854, %v2848
  %v2859 = vsel %vm216, %v2858, 0.0
  %v2860 = vsel %vm217, %v2857, 0.0
  %v2861 = vsel %vm218, %v2856, 0.0
  %v2862 = vsel %vm219, %v2855, 0.0
  %2864 = vset.pattern.permute.xlu0 0
  %2865 = vperm.xlu0 %2864, %v33
  %v2866 = vpop.permute.xlu0 %2865
  %v2868 = vmul.f32 %v2866, %v2859
  %v2869 = vmul.f32 %v2866, %v2860
  %v2870 = vmul.f32 %v2866, %v2861
  %v2871 = vmul.f32 %v2866, %v2862
  %v2872 = vadd.f32 %v2868, 0.0
  %v2873 = vadd.f32 %v2869, 0.0
  %v2874 = vadd.f32 %v2870, 0.0
  %v2875 = vadd.f32 %v2871, 0.0
  %2876 = vrot.lane.b32.xlu0 %v2843, 4
  %v2877 = vpop.permute.xlu0 %2876
  %2878 = vrot.lane.b32.xlu0 %v2844, 4
  %v2879 = vpop.permute.xlu0 %2878
  %2880 = vrot.lane.b32.xlu0 %v2845, 4
  %v2881 = vpop.permute.xlu0 %2880
  %2882 = vrot.lane.b32.xlu0 %v2846, 4
  %v2883 = vpop.permute.xlu0 %2882
  %v2884 = vsel %vm150, %v2881, %v2883
  %v2885 = vsel %vm150, %v2879, %v2881
  %v2886 = vsel %vm150, %v2877, %v2879
  %v2887 = vsel %vm150, %v2883, %v2877
  %v2888 = vsel %vm175, %v2887, 0.0
  %v2889 = vsel %vm176, %v2886, 0.0
  %v2890 = vsel %vm177, %v2885, 0.0
  %v2891 = vsel %vm178, %v2884, 0.0
  %2893 = vset.pattern.permute.xlu0 0
  %2894 = vperm.xlu0 %2893, %v34
  %v2895 = vpop.permute.xlu0 %2894
  %v2897 = vmul.f32 %v2895, %v2888
  %v2898 = vmul.f32 %v2895, %v2889
  %v2899 = vmul.f32 %v2895, %v2890
  %v2900 = vmul.f32 %v2895, %v2891
  %v2901 = vadd.f32 %v2897, 0.0
  %v2902 = vadd.f32 %v2898, 0.0
  %v2903 = vadd.f32 %v2899, 0.0
  %v2904 = vadd.f32 %v2900, 0.0
  %2905 = vrot.lane.b32.xlu0 %v2829, 48
  %v2906 = vpop.permute.xlu0 %2905
  %2907 = vrot.lane.b32.xlu0 %v2830, 48
  %v2908 = vpop.permute.xlu0 %2907
  %2909 = vrot.lane.b32.xlu0 %v2831, 48
  %v2910 = vpop.permute.xlu0 %2909
  %2911 = vrot.lane.b32.xlu0 %v2832, 48
  %v2912 = vpop.permute.xlu0 %2911
  %v2913 = vsel %vm499, %v2910, %v2912
  %v2914 = vsel %vm499, %v2908, %v2910
  %v2915 = vsel %vm499, %v2906, %v2908
  %v2916 = vsel %vm499, %v2912, %v2906
  %v2917 = vsel %vm524, %v2916, 0.0
  %v2918 = vsel %vm525, %v2915, 0.0
  %v2919 = vsel %vm526, %v2914, 0.0
  %v2920 = vsel %vm527, %v2913, 0.0
  %2921 = vset.pattern.permute.xlu0 1
  %2922 = vperm.xlu0 %2921, %v33
  %v2923 = vpop.permute.xlu0 %2922
  %v2925 = vmul.f32 %v2923, %v2917
  %v2926 = vmul.f32 %v2923, %v2918
  %v2927 = vmul.f32 %v2923, %v2919
  %v2928 = vmul.f32 %v2923, %v2920
  %v2929 = vadd.f32 %v2872, %v2925
  %v2930 = vadd.f32 %v2873, %v2926
  %v2931 = vadd.f32 %v2874, %v2927
  %v2932 = vadd.f32 %v2875, %v2928
  %2933 = vrot.lane.b32.xlu0 %v2843, 3
  %v2934 = vpop.permute.xlu0 %2933
  %2935 = vrot.lane.b32.xlu0 %v2844, 3
  %v2936 = vpop.permute.xlu0 %2935
  %2937 = vrot.lane.b32.xlu0 %v2845, 3
  %v2938 = vpop.permute.xlu0 %2937
  %2939 = vrot.lane.b32.xlu0 %v2846, 3
  %v2940 = vpop.permute.xlu0 %2939
  %v2941 = vsel %vm458, %v2938, %v2940
  %v2942 = vsel %vm458, %v2936, %v2938
  %v2943 = vsel %vm458, %v2934, %v2936
  %v2944 = vsel %vm458, %v2940, %v2934
  %v2945 = vsel %vm483, %v2944, 0.0
  %v2946 = vsel %vm484, %v2943, 0.0
  %v2947 = vsel %vm485, %v2942, 0.0
  %v2948 = vsel %vm486, %v2941, 0.0
  %2949 = vset.pattern.permute.xlu0 1
  %2950 = vperm.xlu0 %2949, %v34
  %v2951 = vpop.permute.xlu0 %2950
  %v2953 = vmul.f32 %v2951, %v2945
  %v2954 = vmul.f32 %v2951, %v2946
  %v2955 = vmul.f32 %v2951, %v2947
  %v2956 = vmul.f32 %v2951, %v2948
  %v2957 = vadd.f32 %v2901, %v2953
  %v2958 = vadd.f32 %v2902, %v2954
  %v2959 = vadd.f32 %v2903, %v2955
  %v2960 = vadd.f32 %v2904, %v2956
  %2961 = vrot.lane.b32.xlu0 %v2829, 32
  %v2962 = vpop.permute.xlu0 %2961
  %2963 = vrot.lane.b32.xlu0 %v2830, 32
  %v2964 = vpop.permute.xlu0 %2963
  %2965 = vrot.lane.b32.xlu0 %v2831, 32
  %v2966 = vpop.permute.xlu0 %2965
  %2967 = vrot.lane.b32.xlu0 %v2832, 32
  %v2968 = vpop.permute.xlu0 %2967
  %v2969 = vsel %vm805, %v2966, %v2968
  %v2970 = vsel %vm805, %v2964, %v2966
  %v2971 = vsel %vm805, %v2962, %v2964
  %v2972 = vsel %vm805, %v2968, %v2962
  %v2973 = vsel %vm830, %v2972, 0.0
  %v2974 = vsel %vm831, %v2971, 0.0
  %v2975 = vsel %vm832, %v2970, 0.0
  %v2976 = vsel %vm833, %v2969, 0.0
  %2977 = vset.pattern.permute.xlu0 2
  %2978 = vperm.xlu0 %2977, %v33
  %v2979 = vpop.permute.xlu0 %2978
  %v2981 = vmul.f32 %v2979, %v2973
  %v2982 = vmul.f32 %v2979, %v2974
  %v2983 = vmul.f32 %v2979, %v2975
  %v2984 = vmul.f32 %v2979, %v2976
  %v2985 = vadd.f32 %v2929, %v2981
  %v2986 = vadd.f32 %v2930, %v2982
  %v2987 = vadd.f32 %v2931, %v2983
  %v2988 = vadd.f32 %v2932, %v2984
  %2989 = vrot.lane.b32.xlu0 %v2843, 2
  %v2990 = vpop.permute.xlu0 %2989
  %2991 = vrot.lane.b32.xlu0 %v2844, 2
  %v2992 = vpop.permute.xlu0 %2991
  %2993 = vrot.lane.b32.xlu0 %v2845, 2
  %v2994 = vpop.permute.xlu0 %2993
  %2995 = vrot.lane.b32.xlu0 %v2846, 2
  %v2996 = vpop.permute.xlu0 %2995
  %v2997 = vsel %vm764, %v2994, %v2996
  %v2998 = vsel %vm764, %v2992, %v2994
  %v2999 = vsel %vm764, %v2990, %v2992
  %v3000 = vsel %vm764, %v2996, %v2990
  %v3001 = vsel %vm789, %v3000, 0.0
  %v3002 = vsel %vm790, %v2999, 0.0
  %v3003 = vsel %vm791, %v2998, 0.0
  %v3004 = vsel %vm792, %v2997, 0.0
  %3005 = vset.pattern.permute.xlu0 2
  %3006 = vperm.xlu0 %3005, %v34
  %v3007 = vpop.permute.xlu0 %3006
  %v3009 = vmul.f32 %v3007, %v3001
  %v3010 = vmul.f32 %v3007, %v3002
  %v3011 = vmul.f32 %v3007, %v3003
  %v3012 = vmul.f32 %v3007, %v3004
  %v3013 = vadd.f32 %v2957, %v3009
  %v3014 = vadd.f32 %v2958, %v3010
  %v3015 = vadd.f32 %v2959, %v3011
  %v3016 = vadd.f32 %v2960, %v3012
  %3017 = vrot.lane.b32.xlu0 %v2829, 16
  %v3018 = vpop.permute.xlu0 %3017
  %3019 = vrot.lane.b32.xlu0 %v2830, 16
  %v3020 = vpop.permute.xlu0 %3019
  %3021 = vrot.lane.b32.xlu0 %v2831, 16
  %v3022 = vpop.permute.xlu0 %3021
  %3023 = vrot.lane.b32.xlu0 %v2832, 16
  %v3024 = vpop.permute.xlu0 %3023
  %v3025 = vsel %vm1111, %v3022, %v3024
  %v3026 = vsel %vm1111, %v3020, %v3022
  %v3027 = vsel %vm1111, %v3018, %v3020
  %v3028 = vsel %vm1111, %v3024, %v3018
  %v3029 = vsel %vm1136, %v3028, 0.0
  %v3030 = vsel %vm1137, %v3027, 0.0
  %v3031 = vsel %vm1138, %v3026, 0.0
  %v3032 = vsel %vm1139, %v3025, 0.0
  %3033 = vset.pattern.permute.xlu0 3
  %3034 = vperm.xlu0 %3033, %v33
  %v3035 = vpop.permute.xlu0 %3034
  %v3037 = vmul.f32 %v3035, %v3029
  %v3038 = vmul.f32 %v3035, %v3030
  %v3039 = vmul.f32 %v3035, %v3031
  %v3040 = vmul.f32 %v3035, %v3032
  %v3041 = vadd.f32 %v2985, %v3037
  %v3042 = vadd.f32 %v2986, %v3038
  %v3043 = vadd.f32 %v2987, %v3039
  %v3044 = vadd.f32 %v2988, %v3040
  %3045 = vrot.lane.b32.xlu0 %v2843, 1
  %v3046 = vpop.permute.xlu0 %3045
  %3047 = vrot.lane.b32.xlu0 %v2844, 1
  %v3048 = vpop.permute.xlu0 %3047
  %3049 = vrot.lane.b32.xlu0 %v2845, 1
  %v3050 = vpop.permute.xlu0 %3049
  %3051 = vrot.lane.b32.xlu0 %v2846, 1
  %v3052 = vpop.permute.xlu0 %3051
  %v3053 = vsel %vm1070, %v3050, %v3052
  %v3054 = vsel %vm1070, %v3048, %v3050
  %v3055 = vsel %vm1070, %v3046, %v3048
  %v3056 = vsel %vm1070, %v3052, %v3046
  %v3057 = vsel %vm1095, %v3056, 0.0
  %v3058 = vsel %vm1096, %v3055, 0.0
  %v3059 = vsel %vm1097, %v3054, 0.0
  %v3060 = vsel %vm1098, %v3053, 0.0
  %3061 = vset.pattern.permute.xlu0 3
  %3062 = vperm.xlu0 %3061, %v34
  %v3063 = vpop.permute.xlu0 %3062
  %v3065 = vmul.f32 %v3063, %v3057
  %v3066 = vmul.f32 %v3063, %v3058
  %v3067 = vmul.f32 %v3063, %v3059
  %v3068 = vmul.f32 %v3063, %v3060
  %v3069 = vadd.f32 %v3013, %v3065
  %v3070 = vadd.f32 %v3014, %v3066
  %v3071 = vadd.f32 %v3015, %v3067
  %v3072 = vadd.f32 %v3016, %v3068
  %3073 = vset.pattern.permute.xlu0 4
  %3074 = vperm.xlu0 %3073, %v33
  %v3075 = vpop.permute.xlu0 %3074
  %v3077 = vmul.f32 %v3075, %v2829
  %v3078 = vmul.f32 %v3075, %v2830
  %v3079 = vmul.f32 %v3075, %v2831
  %v3080 = vmul.f32 %v3075, %v2832
  %v3081 = vadd.f32 %v3041, %v3077
  %v3082 = vadd.f32 %v3042, %v3078
  %v3083 = vadd.f32 %v3043, %v3079
  %v3084 = vadd.f32 %v3044, %v3080
  %3085 = vset.pattern.permute.xlu0 4
  %3086 = vperm.xlu0 %3085, %v34
  %v3087 = vpop.permute.xlu0 %3086
  %v3089 = vmul.f32 %v3087, %v2843
  %v3090 = vmul.f32 %v3087, %v2844
  %v3091 = vmul.f32 %v3087, %v2845
  %v3092 = vmul.f32 %v3087, %v2846
  %v3093 = vadd.f32 %v3069, %v3089
  %v3094 = vadd.f32 %v3070, %v3090
  %v3095 = vadd.f32 %v3071, %v3091
  %v3096 = vadd.f32 %v3072, %v3092
  %3097 = vrot.lane.b32.xlu0 %v2829, 112
  %v3098 = vpop.permute.xlu0 %3097
  %3099 = vrot.lane.b32.xlu0 %v2830, 112
  %v3100 = vpop.permute.xlu0 %3099
  %3101 = vrot.lane.b32.xlu0 %v2831, 112
  %v3102 = vpop.permute.xlu0 %3101
  %3103 = vrot.lane.b32.xlu0 %v2832, 112
  %v3104 = vpop.permute.xlu0 %3103
  %v3105 = vsel %vm1657, %v3102, %v3104
  %v3106 = vsel %vm1657, %v3100, %v3102
  %v3107 = vsel %vm1657, %v3098, %v3100
  %v3108 = vsel %vm1657, %v3104, %v3098
  %v3109 = vsel %vm1682, %v3107, 0.0
  %v3110 = vsel %vm1683, %v3106, 0.0
  %v3111 = vsel %vm1684, %v3105, 0.0
  %v3112 = vsel %vm1685, %v3108, 0.0
  %3113 = vset.pattern.permute.xlu0 5
  %3114 = vperm.xlu0 %3113, %v33
  %v3115 = vpop.permute.xlu0 %3114
  %v3117 = vmul.f32 %v3115, %v3109
  %v3118 = vmul.f32 %v3115, %v3110
  %v3119 = vmul.f32 %v3115, %v3111
  %v3120 = vmul.f32 %v3115, %v3112
  %v3121 = vadd.f32 %v3081, %v3117
  %v3122 = vadd.f32 %v3082, %v3118
  %v3123 = vadd.f32 %v3083, %v3119
  %v3124 = vadd.f32 %v3084, %v3120
  %3125 = vrot.lane.b32.xlu0 %v2843, 127
  %v3126 = vpop.permute.xlu0 %3125
  %3127 = vrot.lane.b32.xlu0 %v2844, 127
  %v3128 = vpop.permute.xlu0 %3127
  %3129 = vrot.lane.b32.xlu0 %v2845, 127
  %v3130 = vpop.permute.xlu0 %3129
  %3131 = vrot.lane.b32.xlu0 %v2846, 127
  %v3132 = vpop.permute.xlu0 %3131
  %v3133 = vsel %vm1616, %v3130, %v3132
  %v3134 = vsel %vm1616, %v3128, %v3130
  %v3135 = vsel %vm1616, %v3126, %v3128
  %v3136 = vsel %vm1616, %v3132, %v3126
  %v3137 = vsel %vm1641, %v3135, 0.0
  %v3138 = vsel %vm1642, %v3134, 0.0
  %v3139 = vsel %vm1643, %v3133, 0.0
  %v3140 = vsel %vm1644, %v3136, 0.0
  %3141 = vset.pattern.permute.xlu0 5
  %3142 = vperm.xlu0 %3141, %v34
  %v3143 = vpop.permute.xlu0 %3142
  %v3145 = vmul.f32 %v3143, %v3137
  %v3146 = vmul.f32 %v3143, %v3138
  %v3147 = vmul.f32 %v3143, %v3139
  %v3148 = vmul.f32 %v3143, %v3140
  %v3149 = vadd.f32 %v3093, %v3145
  %v3150 = vadd.f32 %v3094, %v3146
  %v3151 = vadd.f32 %v3095, %v3147
  %v3152 = vadd.f32 %v3096, %v3148
  %3153 = vrot.lane.b32.xlu0 %v2829, 96
  %v3154 = vpop.permute.xlu0 %3153
  %3155 = vrot.lane.b32.xlu0 %v2830, 96
  %v3156 = vpop.permute.xlu0 %3155
  %3157 = vrot.lane.b32.xlu0 %v2831, 96
  %v3158 = vpop.permute.xlu0 %3157
  %3159 = vrot.lane.b32.xlu0 %v2832, 96
  %v3160 = vpop.permute.xlu0 %3159
  %v3161 = vsel %vm1963, %v3158, %v3160
  %v3162 = vsel %vm1963, %v3156, %v3158
  %v3163 = vsel %vm1963, %v3154, %v3156
  %v3164 = vsel %vm1963, %v3160, %v3154
  %v3165 = vsel %vm1988, %v3163, 0.0
  %v3166 = vsel %vm1989, %v3162, 0.0
  %v3167 = vsel %vm1990, %v3161, 0.0
  %v3168 = vsel %vm1991, %v3164, 0.0
  %3169 = vset.pattern.permute.xlu0 6
  %3170 = vperm.xlu0 %3169, %v33
  %v3171 = vpop.permute.xlu0 %3170
  %v3173 = vmul.f32 %v3171, %v3165
  %v3174 = vmul.f32 %v3171, %v3166
  %v3175 = vmul.f32 %v3171, %v3167
  %v3176 = vmul.f32 %v3171, %v3168
  %v3177 = vadd.f32 %v3121, %v3173
  %v3178 = vadd.f32 %v3122, %v3174
  %v3179 = vadd.f32 %v3123, %v3175
  %v3180 = vadd.f32 %v3124, %v3176
  %3181 = vrot.lane.b32.xlu0 %v2843, 126
  %v3182 = vpop.permute.xlu0 %3181
  %3183 = vrot.lane.b32.xlu0 %v2844, 126
  %v3184 = vpop.permute.xlu0 %3183
  %3185 = vrot.lane.b32.xlu0 %v2845, 126
  %v3186 = vpop.permute.xlu0 %3185
  %3187 = vrot.lane.b32.xlu0 %v2846, 126
  %v3188 = vpop.permute.xlu0 %3187
  %v3189 = vsel %vm1922, %v3186, %v3188
  %v3190 = vsel %vm1922, %v3184, %v3186
  %v3191 = vsel %vm1922, %v3182, %v3184
  %v3192 = vsel %vm1922, %v3188, %v3182
  %v3193 = vsel %vm1947, %v3191, 0.0
  %v3194 = vsel %vm1948, %v3190, 0.0
  %v3195 = vsel %vm1949, %v3189, 0.0
  %v3196 = vsel %vm1950, %v3192, 0.0
  %3197 = vset.pattern.permute.xlu0 6
  %3198 = vperm.xlu0 %3197, %v34
  %v3199 = vpop.permute.xlu0 %3198
  %v3201 = vmul.f32 %v3199, %v3193
  %v3202 = vmul.f32 %v3199, %v3194
  %v3203 = vmul.f32 %v3199, %v3195
  %v3204 = vmul.f32 %v3199, %v3196
  %v3205 = vadd.f32 %v3149, %v3201
  %v3206 = vadd.f32 %v3150, %v3202
  %v3207 = vadd.f32 %v3151, %v3203
  %v3208 = vadd.f32 %v3152, %v3204
  %3209 = vrot.lane.b32.xlu0 %v2829, 80
  %v3210 = vpop.permute.xlu0 %3209
  %3211 = vrot.lane.b32.xlu0 %v2830, 80
  %v3212 = vpop.permute.xlu0 %3211
  %3213 = vrot.lane.b32.xlu0 %v2831, 80
  %v3214 = vpop.permute.xlu0 %3213
  %3215 = vrot.lane.b32.xlu0 %v2832, 80
  %v3216 = vpop.permute.xlu0 %3215
  %v3217 = vsel %vm2269, %v3214, %v3216
  %v3218 = vsel %vm2269, %v3212, %v3214
  %v3219 = vsel %vm2269, %v3210, %v3212
  %v3220 = vsel %vm2269, %v3216, %v3210
  %v3221 = vsel %vm2294, %v3219, 0.0
  %v3222 = vsel %vm2295, %v3218, 0.0
  %v3223 = vsel %vm2296, %v3217, 0.0
  %v3224 = vsel %vm2297, %v3220, 0.0
  %3225 = vset.pattern.permute.xlu0 7
  %3226 = vperm.xlu0 %3225, %v33
  %v3227 = vpop.permute.xlu0 %3226
  %v3229 = vmul.f32 %v3227, %v3221
  %v3230 = vmul.f32 %v3227, %v3222
  %v3231 = vmul.f32 %v3227, %v3223
  %v3232 = vmul.f32 %v3227, %v3224
  %v3233 = vadd.f32 %v3177, %v3229
  %v3234 = vadd.f32 %v3178, %v3230
  %v3235 = vadd.f32 %v3179, %v3231
  %v3236 = vadd.f32 %v3180, %v3232
  %3237 = vrot.lane.b32.xlu0 %v2843, 125
  %v3238 = vpop.permute.xlu0 %3237
  %3239 = vrot.lane.b32.xlu0 %v2844, 125
  %v3240 = vpop.permute.xlu0 %3239
  %3241 = vrot.lane.b32.xlu0 %v2845, 125
  %v3242 = vpop.permute.xlu0 %3241
  %3243 = vrot.lane.b32.xlu0 %v2846, 125
  %v3244 = vpop.permute.xlu0 %3243
  %v3245 = vsel %vm2228, %v3242, %v3244
  %v3246 = vsel %vm2228, %v3240, %v3242
  %v3247 = vsel %vm2228, %v3238, %v3240
  %v3248 = vsel %vm2228, %v3244, %v3238
  %v3249 = vsel %vm2253, %v3247, 0.0
  %v3250 = vsel %vm2254, %v3246, 0.0
  %v3251 = vsel %vm2255, %v3245, 0.0
  %v3252 = vsel %vm2256, %v3248, 0.0
  %3253 = vset.pattern.permute.xlu0 7
  %3254 = vperm.xlu0 %3253, %v34
  %v3255 = vpop.permute.xlu0 %3254
  %v3257 = vmul.f32 %v3255, %v3249
  %v3258 = vmul.f32 %v3255, %v3250
  %v3259 = vmul.f32 %v3255, %v3251
  %v3260 = vmul.f32 %v3255, %v3252
  %v3261 = vadd.f32 %v3205, %v3257
  %v3262 = vadd.f32 %v3206, %v3258
  %v3263 = vadd.f32 %v3207, %v3259
  %v3264 = vadd.f32 %v3208, %v3260
  %v3265 = vsel %vm2587, %v2857, 0.0
  %v3266 = vsel %vm2588, %v2856, 0.0
  %v3267 = vsel %vm2589, %v2855, 0.0
  %v3268 = vsel %vm2590, %v2858, 0.0
  %3269 = vset.pattern.permute.xlu0 8
  %3270 = vperm.xlu0 %3269, %v33
  %v3271 = vpop.permute.xlu0 %3270
  %v3273 = vmul.f32 %v3271, %v3265
  %v3274 = vmul.f32 %v3271, %v3266
  %v3275 = vmul.f32 %v3271, %v3267
  %v3276 = vmul.f32 %v3271, %v3268
  %v3277 = vadd.f32 %v3233, %v3273
  %v3278 = vadd.f32 %v3234, %v3274
  %v3279 = vadd.f32 %v3235, %v3275
  %v3280 = vadd.f32 %v3236, %v3276
  %3281 = vrot.lane.b32.xlu0 %v2843, 124
  %v3282 = vpop.permute.xlu0 %3281
  %3283 = vrot.lane.b32.xlu0 %v2844, 124
  %v3284 = vpop.permute.xlu0 %3283
  %3285 = vrot.lane.b32.xlu0 %v2845, 124
  %v3286 = vpop.permute.xlu0 %3285
  %3287 = vrot.lane.b32.xlu0 %v2846, 124
  %v3288 = vpop.permute.xlu0 %3287
  %v3289 = vsel %vm2534, %v3286, %v3288
  %v3290 = vsel %vm2534, %v3284, %v3286
  %v3291 = vsel %vm2534, %v3282, %v3284
  %v3292 = vsel %vm2534, %v3288, %v3282
  %v3293 = vsel %vm2559, %v3291, 0.0
  %v3294 = vsel %vm2560, %v3290, 0.0
  %v3295 = vsel %vm2561, %v3289, 0.0
  %v3296 = vsel %vm2562, %v3292, 0.0
  %3297 = vset.pattern.permute.xlu0 8
  %3298 = vperm.xlu0 %3297, %v34
  %v3299 = vpop.permute.xlu0 %3298
  %v3301 = vmul.f32 %v3299, %v3293
  %v3302 = vmul.f32 %v3299, %v3294
  %v3303 = vmul.f32 %v3299, %v3295
  %v3304 = vmul.f32 %v3299, %v3296
  %v3305 = vadd.f32 %v3261, %v3301
  %v3306 = vadd.f32 %v3262, %v3302
  %v3307 = vadd.f32 %v3263, %v3303
  %v3308 = vadd.f32 %v3264, %v3304
  %vm3309 = vcmask 1041408
  %v3310 = vsel %vm3309, %v3277, 0.0
  %v3311 = vrot.slane %v3310, 4
  %v3312 = vadd.f32 %v3310, %v3311
  %v3313 = vrot.slane %v3312, 2
  %v3314 = vadd.f32 %v3312, %v3313
  %v3315 = vrot.slane %v3314, 1
  %v3316 = vadd.f32 %v3314, %v3315
  %v3317 = vsel %vm3309, %v3278, 0.0
  %v3318 = vrot.slane %v3317, 4
  %v3319 = vadd.f32 %v3317, %v3318
  %v3320 = vrot.slane %v3319, 2
  %v3321 = vadd.f32 %v3319, %v3320
  %v3322 = vrot.slane %v3321, 1
  %v3323 = vadd.f32 %v3321, %v3322
  %v3324 = vsel %vm3309, %v3279, 0.0
  %v3325 = vrot.slane %v3324, 4
  %v3326 = vadd.f32 %v3324, %v3325
  %v3327 = vrot.slane %v3326, 2
  %v3328 = vadd.f32 %v3326, %v3327
  %v3329 = vrot.slane %v3328, 1
  %v3330 = vadd.f32 %v3328, %v3329
  %v3331 = vsel %vm3309, %v3280, 0.0
  %v3332 = vrot.slane %v3331, 4
  %v3333 = vadd.f32 %v3331, %v3332
  %v3334 = vrot.slane %v3333, 2
  %v3335 = vadd.f32 %v3333, %v3334
  %v3336 = vrot.slane %v3335, 1
  %v3337 = vadd.f32 %v3335, %v3336
  %v3338 = vsel %vm3309, %v3305, 0.0
  %v3339 = vrot.slane %v3338, 4
  %v3340 = vadd.f32 %v3338, %v3339
  %v3341 = vrot.slane %v3340, 2
  %v3342 = vadd.f32 %v3340, %v3341
  %v3343 = vrot.slane %v3342, 1
  %v3344 = vadd.f32 %v3342, %v3343
  %v3345 = vsel %vm3309, %v3306, 0.0
  %v3346 = vrot.slane %v3345, 4
  %v3347 = vadd.f32 %v3345, %v3346
  %v3348 = vrot.slane %v3347, 2
  %v3349 = vadd.f32 %v3347, %v3348
  %v3350 = vrot.slane %v3349, 1
  %v3351 = vadd.f32 %v3349, %v3350
  %v3352 = vsel %vm3309, %v3307, 0.0
  %v3353 = vrot.slane %v3352, 4
  %v3354 = vadd.f32 %v3352, %v3353
  %v3355 = vrot.slane %v3354, 2
  %v3356 = vadd.f32 %v3354, %v3355
  %v3357 = vrot.slane %v3356, 1
  %v3358 = vadd.f32 %v3356, %v3357
  %v3359 = vsel %vm3309, %v3308, 0.0
  %v3360 = vrot.slane %v3359, 4
  %v3361 = vadd.f32 %v3359, %v3360
  %v3362 = vrot.slane %v3361, 2
  %v3363 = vadd.f32 %v3361, %v3362
  %v3364 = vrot.slane %v3363, 1
  %v3365 = vadd.f32 %v3363, %v3364
  %v3366 = vld [vmem:[%s7] sm:$0x1]
  %3368 = vset.pattern.permute.xlu0 0
  %3369 = vperm.xlu0 %3368, %v3366
  %v3370 = vpop.permute.xlu0 %3369
  %v3372 = vlaneseq
  %v3373 = vshrl.u32 %v3372, 7
  %v3374 = vsub.s32 0, %v3373
  %v3375 = vrot.slane %v3370, %v3374
  %v3376 = vadd.f32 %v3316, %v3375
  %v3377 = vadd.f32 %v3323, %v3375
  %v3378 = vadd.f32 %v3330, %v3375
  %v3379 = vadd.f32 %v3337, %v3375
  %v3380 = vmax.f32 %v3376, 0.0
  %v3381 = vmax.f32 %v3377, 0.0
  %v3382 = vmax.f32 %v3378, 0.0
  %v3383 = vmax.f32 %v3379, 0.0
  %3384 = vset.pattern.permute.xlu0 1
  %3385 = vperm.xlu0 %3384, %v3366
  %v3386 = vpop.permute.xlu0 %3385
  %v3388 = vlaneseq
  %v3389 = vshrl.u32 %v3388, 7
  %v3390 = vsub.s32 0, %v3389
  %v3391 = vrot.slane %v3386, %v3390
  %v3392 = vadd.f32 %v3344, %v3391
  %v3393 = vadd.f32 %v3351, %v3391
  %v3394 = vadd.f32 %v3358, %v3391
  %v3395 = vadd.f32 %v3365, %v3391
  %v3396 = vmax.f32 %v3392, 0.0
  %v3397 = vmax.f32 %v3393, 0.0
  %v3398 = vmax.f32 %v3394, 0.0
  %v3399 = vmax.f32 %v3395, 0.0
  %v3400 = vadd.f32 %v3380, %v3396
  %v3401 = vadd.f32 %v3381, %v3397
  %v3402 = vadd.f32 %v3382, %v3398
  %v3403 = vadd.f32 %v3383, %v3399
  %v3404 = vxor.u32 %v3400, 2147483648
  %v3405 = vxor.u32 %v3401, 2147483648
  %v3406 = vxor.u32 %v3402, 2147483648
  %v3407 = vxor.u32 %v3403, 2147483648
  %v3408 = vmul.f32 %v3404, 1.442695
  %v3409 = vpow.pop %v3408
  %v3410 = vmul.f32 %v3405, 1.442695
  %v3411 = vpow.pop %v3410
  %v3412 = vmul.f32 %v3406, 1.442695
  %v3413 = vpow.pop %v3412
  %v3414 = vmul.f32 %v3407, 1.442695
  %v3415 = vpow.pop %v3414
  %v3416 = vadd.f32 %v3409, 1.0
  %v3417 = vadd.f32 %v3411, 1.0
  %v3418 = vadd.f32 %v3413, 1.0
  %v3419 = vadd.f32 %v3415, 1.0
  %v3420 = vrcp.pop %v3416
  %v3421 = vmul.f32 1.0, %v3420
  %v3422 = vrcp.pop %v3417
  %v3423 = vmul.f32 1.0, %v3422
  %v3424 = vrcp.pop %v3418
  %v3425 = vmul.f32 1.0, %v3424
  %v3426 = vrcp.pop %v3419
  %v3427 = vmul.f32 1.0, %v3426
  %v3432 = vcombine.low %v3421, %v3423
  %v3433 = vcombine.low %v3425, %v3427
  %v3435 = vunpack.c.l.s4 1966171168
  %v3436 = vunpack.c.0.s8 %v3435
  %v3437 = vlaneseq
  %v3438 = vshrl.u32 %v3437, 7
  %v3439 = vsub.s32 %v3436, %v3438
  %v3440 = vrot.slane %v3432, %v3439
  %v3442 = vunpack.c.l.s4 1966171168
  %v3443 = vunpack.c.0.s8 %v3442
  %v3444 = vlaneseq
  %v3445 = vshrl.u32 %v3444, 7
  %v3446 = vsub.s32 %v3443, %v3445
  %v3447 = vrot.slane %v3433, %v3446
  %v3448 = vcombine.low %v3440, %v3447
  %v3450 = vunpack.c.l.s4 1966171168
  %v3451 = vunpack.c.0.s8 %v3450
  %v3452 = vlaneseq
  %v3453 = vshrl.u32 %v3452, 7
  %v3454 = vsub.s32 %v3451, %v3453
  %v3455 = vrot.slane %v3448, %v3454
  %v3457 = vlaneseq
  %vm3458 = vcmp.ge.s32.totalorder %v3457, 0
  %vm3459 = vcmp.lt.s32.totalorder %v3457, 512
  %vm3460 = vmand %vm3458, %vm3459
  %3461 = vst.msk [vmem:[%s8] sm:$0xf] %vm3460, %v3455
  // Predicated region
  $region34: #{spatial_attention_pallas.1} parent=0 // pred_check
    _
  $region35: #{spatial_attention_pallas.1} parent=0 // pred_check_branch
    %3463 = sbr.rel (0) target = $region37
  $region36: #{spatial_attention_pallas.1} parent=0 // pred_region
    _
  $region37: #{spatial_attention_pallas.1} parent=0 // pred_fallthru
    _
  // Predicated region
  $region38: #{spatial_attention_pallas.1} parent=0 // pred_check
    _
  $region39: #{spatial_attention_pallas.1} parent=0 // pred_check_branch
    %3465 = sbr.rel (0) target = $region41
  $region40: #{spatial_attention_pallas.1} parent=0 // pred_region
    _
  $region41: #{spatial_attention_pallas.1} parent=0 // pred_fallthru
    _

</llo_original>
